<compile_context>
chip_gen: v5e
topology: v5e:2x2
jax: 0.10.0
libtpu: 0.0.40
codegen_flags: <defaults>
</compile_context>

<pallas_src>
import jax
import jax.numpy as jnp
import numpy as np
from jax.experimental import pallas as pl
from jax.experimental.pallas import tpu as pltpu


# ---------------------------------------------------------------------------
# Kernel: full 2-layer LSTM recurrence in one invocation (two-pass structure).
#   x_ref    : (T*Bp, D)  bf16   (time-major, batch padded to multiple of 8)
#   lens_ref : (Bp, 1)    int32  (padded rows have length 0)
#   wih0/whh0/wih1/whh1 : transposed LSTM weights, bf16
#   b0/b1    : (1, 4H)    f32    (b_ih + b_hh)
# Outputs:
#   out_ref  : (Bp, T*H)  f32    batch-first layer-2 hiddens (row b = concat_t h1[b,t])
#   hn_ref   : (2, Bp, H) f32    final hidden state per layer
#   cn_ref   : (2, Bp, H) f32    final cell state per layer
# Scratch:
#   h0_all_ref : (T*Bp, H) f32   per-step layer-0 hiddens (layer-1 inputs)
# ---------------------------------------------------------------------------
def _lstm_kernel(x_ref, lens_ref,
                 wih0_ref, whh0_ref, b0_ref,
                 wih1_ref, whh1_ref, b1_ref,
                 out_ref, hn_ref, cn_ref, h0_all_ref):
    _, Bp, H = hn_ref.shape
    T = x_ref.shape[0] // Bp

    lens = lens_ref[...]                                       # (Bp, 1) int32
    whh0 = whh0_ref[...]
    whh1 = whh1_ref[...]
    b1 = b1_ref[...]

    # Hoisted layer-0 input projection: one (T*Bp, D) @ (D, 4H) bf16 matmul,
    # f32 accumulate — off the serial critical path.
    xg_all = (jnp.dot(x_ref[...], wih0_ref[...],
                      preferred_element_type=jnp.float32)
              + b0_ref[...])                                   # (T*Bp, 4H) f32

    def gates_to_hc(gates, c_prev):
        # PyTorch gate order: i, f, g, o ; slices are at 128-lane boundaries.
        i = jax.nn.sigmoid(gates[:, 0 * H:1 * H])
        f = jax.nn.sigmoid(gates[:, 1 * H:2 * H])
        g = jnp.tanh(gates[:, 2 * H:3 * H])
        o = jax.nn.sigmoid(gates[:, 3 * H:4 * H])
        c_new = f * c_prev + i * g
        h_new = o * jnp.tanh(c_new)
        return h_new, c_new

    # TODO(synk): support a non-None initial hidden state (self.hidden) by
    # passing (h0, c0) in as extra inputs instead of zero-initializing here.

    # ---- pass 1: layer-0 recurrence; only the whh0 dot is serial. ----------
    h0 = jnp.zeros((Bp, H), jnp.float32)
    c0 = jnp.zeros((Bp, H), jnp.float32)
    for t in range(T):                       # static unroll (T small & fixed)
        valid = lens > t                                       # (Bp, 1) bool
        g0 = xg_all[t * Bp:(t + 1) * Bp, :] + jnp.dot(
            h0.astype(jnp.bfloat16), whh0, preferred_element_type=jnp.float32)
        h0n, c0n = gates_to_hc(g0, c0)
        h0 = jnp.where(valid, h0n, h0)
        c0 = jnp.where(valid, c0n, c0)
        h0_all_ref[t * Bp:(t + 1) * Bp, :] = h0     # tile-aligned static store

    # ---- layer-1 input projection: ONE batched matmul, off the serial path -
    # (dropout between layers has p=0 -> identity)
    h0_all = h0_all_ref[...].astype(jnp.bfloat16)              # (T*Bp, H)
    g1_all = (jnp.dot(h0_all, wih1_ref[...],
                      preferred_element_type=jnp.float32)
              + b1)                                            # (T*Bp, 4H) f32

    # ---- pass 2: layer-1 recurrence; only the whh1 dot is serial. ----------
    h1 = jnp.zeros((Bp, H), jnp.float32)
    c1 = jnp.zeros((Bp, H), jnp.float32)
    for t in range(T):
        valid = lens > t
        g1 = g1_all[t * Bp:(t + 1) * Bp, :] + jnp.dot(
            h1.astype(jnp.bfloat16), whh1, preferred_element_type=jnp.float32)
        h1n, c1n = gates_to_hc(g1, c1)
        h1 = jnp.where(valid, h1n, h1)
        c1 = jnp.where(valid, c1n, c1)
        # pad_packed_sequence zero-pads past each sequence length.  Batch-first
        # layout: lane-aligned store at column offset t*H (H == 128).
        out_ref[:, t * H:(t + 1) * H] = jnp.where(valid, h1, 0.0)

    hn_ref[0] = h0
    hn_ref[1] = h1
    cn_ref[0] = c0
    cn_ref[1] = c1


# ---------------------------------------------------------------------------
# Wrapper: batch-first I/O (matches nn.LSTM(batch_first=True)).
# ---------------------------------------------------------------------------
def lstm_forward(x_btd, lens, p):
    B, T, D = x_btd.shape
    H = p["w_hh0"].shape[1]
    G = 4 * H
    Bp = max(8, ((B + 7) // 8) * 8)          # pad batch to f32 sublane multiple

    # time-major, batch-padded, flattened to (T*Bp, D) for the hoisted matmul
    x_tm = jnp.transpose(x_btd, (1, 0, 2)).astype(jnp.float32)       # (T, B, D)
    x_tm = jnp.pad(x_tm, ((0, 0), (0, Bp - B), (0, 0)))
    x2d = x_tm.reshape(T * Bp, D).astype(jnp.bfloat16)

    # Clamp lens to T (pack_padded_sequence invariant); padded rows get len 0.
    lens_c = jnp.minimum(lens.astype(jnp.int32), T)
    lens_p = jnp.pad(lens_c, (0, Bp - B)).reshape(Bp, 1)

    wih0 = p["w_ih0"].T.astype(jnp.bfloat16)                          # (D, G)
    whh0 = p["w_hh0"].T.astype(jnp.bfloat16)                          # (H, G)
    b0 = (p["b_ih0"] + p["b_hh0"]).reshape(1, G).astype(jnp.float32)
    wih1 = p["w_ih1"].T.astype(jnp.bfloat16)                          # (H, G)
    whh1 = p["w_hh1"].T.astype(jnp.bfloat16)                          # (H, G)
    b1 = (p["b_ih1"] + p["b_hh1"]).reshape(1, G).astype(jnp.float32)

    def full(shape):
        return pl.BlockSpec(shape, lambda i, _s=shape: (0,) * len(_s))

    out2d, hn, cn = pl.pallas_call(
        _lstm_kernel,
        out_shape=(
            jax.ShapeDtypeStruct((Bp, T * H), jnp.float32),
            jax.ShapeDtypeStruct((2, Bp, H), jnp.float32),
            jax.ShapeDtypeStruct((2, Bp, H), jnp.float32),
        ),
        grid=(1,),
        in_specs=[
            full((T * Bp, D)),   # x, flattened time-major
            full((Bp, 1)),       # sequence lengths
            full((D, G)), full((H, G)), full((1, G)),   # layer 0
            full((H, G)), full((H, G)), full((1, G)),   # layer 1
        ],
        out_specs=(full((Bp, T * H)), full((2, Bp, H)), full((2, Bp, H))),
        scratch_shapes=[pltpu.VMEM((T * Bp, H), jnp.float32)],  # h0 staging
        compiler_params=pltpu.CompilerParams(
            dimension_semantics=("arbitrary",),
            vmem_limit_bytes=64 * 1024 * 1024),
    )(x2d, lens_p, wih0, whh0, b0, wih1, whh1, b1)

    # Batch-first output: free row-major reshape (no HBM transpose pass).
    last_hiddens = out2d[:B].reshape(B, T, H)
    return last_hiddens, hn[:, :B], cn[:, :B]


@jax.jit
def temporal_net_forward(input_tensor, sequence_lens, params):
    """Mirrors TemporalNet.forward: returns (last_hiddens, (h_n, c_n))."""
    last_hiddens, hn, cn = lstm_forward(input_tensor, sequence_lens, params)
    # self.dropout has p=0 -> identity.
    return last_hiddens, (hn, cn)
    # TODO(synk): the basic_net='RNN' (single-layer nn.RNN) branch is not
    # implemented; only the default LSTM path is.


# ---------------------------------------------------------------------------
# Deterministic parameter init (same shapes as nn.LSTM(input, H, num_layers=2))
# ---------------------------------------------------------------------------
def init_params(key, input_size, hidden_size=128):
    ks = jax.random.split(key, 8)
    s = 1.0 / float(np.sqrt(hidden_size))

    def u(k, shape):
        return jax.random.uniform(k, shape, jnp.float32, -s, s)

    return dict(
        w_ih0=u(ks[0], (4 * hidden_size, input_size)),
        w_hh0=u(ks[1], (4 * hidden_size, hidden_size)),
        b_ih0=u(ks[2], (4 * hidden_size,)),
        b_hh0=u(ks[3], (4 * hidden_size,)),
        w_ih1=u(ks[4], (4 * hidden_size, hidden_size)),
        w_hh1=u(ks[5], (4 * hidden_size, hidden_size)),
        b_ih1=u(ks[6], (4 * hidden_size,)),
        b_hh1=u(ks[7], (4 * hidden_size,)),
    )


# ---------------------------------------------------------------------------
# Pure-JAX f32 reference (packed-sequence semantics via masking)
# ---------------------------------------------------------------------------
def reference_forward(x, lens, p):
    B, T, D = x.shape
    H = p["w_hh0"].shape[1]
    b0 = p["b_ih0"] + p["b_hh0"]
    b1 = p["b_ih1"] + p["b_hh1"]

    def cell(x_t, h, c, wih, whh, b):
        gates = x_t @ wih.T + h @ whh.T + b
        i = jax.nn.sigmoid(gates[:, :H])
        f = jax.nn.sigmoid(gates[:, H:2 * H])
        g = jnp.tanh(gates[:, 2 * H:3 * H])
        o = jax.nn.sigmoid(gates[:, 3 * H:])
        c_new = f * c + i * g
        return o * jnp.tanh(c_new), c_new

    h0 = jnp.zeros((B, H)); c0 = jnp.zeros((B, H))
    h1 = jnp.zeros((B, H)); c1 = jnp.zeros((B, H))
    outs = []
    for t in range(T):
        m = (t < lens).astype(jnp.float32)[:, None]
        h0n, c0n = cell(x[:, t], h0, c0, p["w_ih0"], p["w_hh0"], b0)
        h0 = m * h0n + (1 - m) * h0
        c0 = m * c0n + (1 - m) * c0
        h1n, c1n = cell(h0, h1, c1, p["w_ih1"], p["w_hh1"], b1)
        h1 = m * h1n + (1 - m) * h1
        c1 = m * c1n + (1 - m) * c1
        outs.append(m * h1)
    hidden = jnp.stack(outs, axis=1)            # (B, T, H)
    hn = jnp.stack([h0, h1], axis=0)            # (2, B, H)
    cn = jnp.stack([c0, c1], axis=0)            # (2, B, H)
    return hidden, hn, cn


if __name__ == "__main__":
    key = jax.random.PRNGKey(0)
    B, T, D, H = 4, 8, 16, 128
    k_x, k_p = jax.random.split(key, 2)

    x = jax.random.normal(k_x, (B, T, D), jnp.float32)
    # lengths sorted descending, max == T (pack_padded_sequence convention)
    lens = jnp.array([8, 6, 5, 3], dtype=jnp.int32)
    params = init_params(k_p, D, H)

    last_hiddens, (h_n, c_n) = temporal_net_forward(x, lens, params)
    jax.block_until_ready((last_hiddens, h_n, c_n))

    ref_hidden, ref_hn, ref_cn = reference_forward(x, lens, params)
    # Kernel uses bf16-in / f32-accumulate MXU matmuls; reference is pure f32,
    # so allow bf16-level drift accumulated over the 8-step recurrence.
    np.testing.assert_allclose(np.asarray(last_hiddens), np.asarray(ref_hidden),
                               rtol=2e-2, atol=2e-2)
    np.testing.assert_allclose(np.asarray(h_n), np.asarray(ref_hn),
                               rtol=2e-2, atol=2e-2)
    np.testing.assert_allclose(np.asarray(c_n), np.asarray(ref_cn),
                               rtol=2e-2, atol=2e-2)
    print("KERNEL_OK")
</pallas_src>

<mosaic_0001>
module attributes {stable_mosaic.version = 11 : i64} {
  func.func @_lstm_kernel(%arg0: i32, %arg1: memref<64x16xbf16, #tpu.memory_space<vmem>>, %arg2: memref<8x1xi32, #tpu.memory_space<vmem>>, %arg3: memref<16x512xbf16, #tpu.memory_space<vmem>>, %arg4: memref<128x512xbf16, #tpu.memory_space<vmem>>, %arg5: memref<1x512xf32, #tpu.memory_space<vmem>>, %arg6: memref<128x512xbf16, #tpu.memory_space<vmem>>, %arg7: memref<128x512xbf16, #tpu.memory_space<vmem>>, %arg8: memref<1x512xf32, #tpu.memory_space<vmem>>, %arg9: memref<8x1024xf32, #tpu.memory_space<vmem>>, %arg10: memref<2x8x128xf32, #tpu.memory_space<vmem>>, %arg11: memref<2x8x128xf32, #tpu.memory_space<vmem>>, %arg12: memref<64x128xf32, #tpu.memory_space<vmem>>) attributes {dimension_semantics = [#tpu.dimension_semantics<arbitrary>], iteration_bounds = array<i64: 1>, scalar_prefetch = 0 : i64, scratch_operands = 1 : i64, tpu.core_type = #tpu.core_type<tc>, window_params = [{pipeline_mode = #tpu.pipeline_mode<synchronous>, transform_indices = @transform_0, window_bounds = array<i64: 64, 16>}, {pipeline_mode = #tpu.pipeline_mode<synchronous>, transform_indices = @transform_1, window_bounds = array<i64: 8, 1>}, {pipeline_mode = #tpu.pipeline_mode<synchronous>, transform_indices = @transform_2, window_bounds = array<i64: 16, 512>}, {pipeline_mode = #tpu.pipeline_mode<synchronous>, transform_indices = @transform_3, window_bounds = array<i64: 128, 512>}, {pipeline_mode = #tpu.pipeline_mode<synchronous>, transform_indices = @transform_4, window_bounds = array<i64: 1, 512>}, {pipeline_mode = #tpu.pipeline_mode<synchronous>, transform_indices = @transform_5, window_bounds = array<i64: 128, 512>}, {pipeline_mode = #tpu.pipeline_mode<synchronous>, transform_indices = @transform_6, window_bounds = array<i64: 128, 512>}, {pipeline_mode = #tpu.pipeline_mode<synchronous>, transform_indices = @transform_7, window_bounds = array<i64: 1, 512>}, {pipeline_mode = #tpu.pipeline_mode<synchronous>, transform_indices = @transform_8, window_bounds = array<i64: 8, 1024>}, {pipeline_mode = #tpu.pipeline_mode<synchronous>, transform_indices = @transform_9, window_bounds = array<i64: 2, 8, 128>}, {pipeline_mode = #tpu.pipeline_mode<synchronous>, transform_indices = @transform_10, window_bounds = array<i64: 2, 8, 128>}]} {
    %c0 = arith.constant 0 : index
    %c0_0 = arith.constant 0 : index
    %0 = vector.load %arg2[%c0, %c0_0] : memref<8x1xi32, #tpu.memory_space<vmem>>, vector<8x1xi32>
    %c0_1 = arith.constant 0 : index
    %c0_2 = arith.constant 0 : index
    %1 = vector.load %arg4[%c0_1, %c0_2] : memref<128x512xbf16, #tpu.memory_space<vmem>>, vector<128x512xbf16>
    %c0_3 = arith.constant 0 : index
    %c0_4 = arith.constant 0 : index
    %2 = vector.load %arg7[%c0_3, %c0_4] : memref<128x512xbf16, #tpu.memory_space<vmem>>, vector<128x512xbf16>
    %c0_5 = arith.constant 0 : index
    %c0_6 = arith.constant 0 : index
    %3 = vector.load %arg8[%c0_5, %c0_6] : memref<1x512xf32, #tpu.memory_space<vmem>>, vector<1x512xf32>
    %c0_7 = arith.constant 0 : index
    %c0_8 = arith.constant 0 : index
    %4 = vector.load %arg1[%c0_7, %c0_8] : memref<64x16xbf16, #tpu.memory_space<vmem>>, vector<64x16xbf16>
    %c0_9 = arith.constant 0 : index
    %c0_10 = arith.constant 0 : index
    %5 = vector.load %arg3[%c0_9, %c0_10] : memref<16x512xbf16, #tpu.memory_space<vmem>>, vector<16x512xbf16>
    %cst = arith.constant dense<0.000000e+00> : vector<64x512xf32>
    %6 = tpu.matmul %4, %5, %cst {dimension_numbers = #tpu.dot_dimension_numbers<[1], [0], [0], [1], [0, 0, 1, 1], [], []>} : vector<64x16xbf16>, vector<16x512xbf16>, vector<64x512xf32> -> vector<64x512xf32>
    %c0_11 = arith.constant 0 : index
    %c0_12 = arith.constant 0 : index
    %7 = vector.load %arg5[%c0_11, %c0_12] : memref<1x512xf32, #tpu.memory_space<vmem>>, vector<1x512xf32>
    %8 = vector.broadcast %7 : vector<1x512xf32> to vector<64x512xf32>
    %9 = arith.addf %6, %8 : vector<64x512xf32>
    %cst_13 = arith.constant 0.000000e+00 : f32
    %10 = vector.broadcast %cst_13 : f32 to vector<8x128xf32>
    %cst_14 = arith.constant 0.000000e+00 : f32
    %11 = vector.broadcast %cst_14 : f32 to vector<8x128xf32>
    %c0_i32 = arith.constant 0 : i32
    %12 = vector.broadcast %c0_i32 : i32 to vector<8x1xi32>
    %13 = arith.cmpi sgt, %0, %12 : vector<8x1xi32>
    %14 = vector.extract_strided_slice %9 {offsets = [0, 0], sizes = [8, 512], strides = [1, 1]} : vector<64x512xf32> to vector<8x512xf32>
    %15 = arith.truncf %10 : vector<8x128xf32> to vector<8x128xbf16>
    %cst_15 = arith.constant dense<0.000000e+00> : vector<8x512xf32>
    %16 = tpu.matmul %15, %1, %cst_15 {dimension_numbers = #tpu.dot_dimension_numbers<[1], [0], [0], [1], [0, 0, 1, 1], [], []>} : vector<8x128xbf16>, vector<128x512xbf16>, vector<8x512xf32> -> vector<8x512xf32>
    %17 = arith.addf %14, %16 : vector<8x512xf32>
    %18 = vector.extract_strided_slice %17 {offsets = [0, 0], sizes = [8, 128], strides = [1, 1]} : vector<8x512xf32> to vector<8x128xf32>
    %19 = arith.negf %18 : vector<8x128xf32>
    %20 = math.exp %19 : vector<8x128xf32>
    %cst_16 = arith.constant 1.000000e+00 : f32
    %21 = vector.broadcast %cst_16 : f32 to vector<8x128xf32>
    %22 = arith.addf %21, %20 : vector<8x128xf32>
    %23 = arith.divf %21, %22 : vector<8x128xf32>
    %24 = vector.extract_strided_slice %17 {offsets = [0, 128], sizes = [8, 128], strides = [1, 1]} : vector<8x512xf32> to vector<8x128xf32>
    %25 = arith.negf %24 : vector<8x128xf32>
    %26 = math.exp %25 : vector<8x128xf32>
    %cst_17 = arith.constant 1.000000e+00 : f32
    %27 = vector.broadcast %cst_17 : f32 to vector<8x128xf32>
    %28 = arith.addf %27, %26 : vector<8x128xf32>
    %29 = arith.divf %27, %28 : vector<8x128xf32>
    %30 = vector.extract_strided_slice %17 {offsets = [0, 256], sizes = [8, 128], strides = [1, 1]} : vector<8x512xf32> to vector<8x128xf32>
    %31 = math.tanh %30 : vector<8x128xf32>
    %32 = vector.extract_strided_slice %17 {offsets = [0, 384], sizes = [8, 128], strides = [1, 1]} : vector<8x512xf32> to vector<8x128xf32>
    %33 = arith.negf %32 : vector<8x128xf32>
    %34 = math.exp %33 : vector<8x128xf32>
    %cst_18 = arith.constant 1.000000e+00 : f32
    %35 = vector.broadcast %cst_18 : f32 to vector<8x128xf32>
    %36 = arith.addf %35, %34 : vector<8x128xf32>
    %37 = arith.divf %35, %36 : vector<8x128xf32>
    %38 = arith.mulf %29, %11 : vector<8x128xf32>
    %39 = arith.mulf %23, %31 : vector<8x128xf32>
    %40 = arith.addf %38, %39 : vector<8x128xf32>
    %41 = math.tanh %40 : vector<8x128xf32>
    %42 = arith.mulf %37, %41 : vector<8x128xf32>
    %43 = vector.shape_cast %13 : vector<8x1xi1> to vector<8x1xi1>
    %44 = vector.broadcast %43 : vector<8x1xi1> to vector<8x128xi1>
    %45 = arith.select %44, %42, %10 : vector<8x128xi1>, vector<8x128xf32>
    %46 = vector.shape_cast %13 : vector<8x1xi1> to vector<8x1xi1>
    %47 = vector.broadcast %46 : vector<8x1xi1> to vector<8x128xi1>
    %48 = arith.select %47, %40, %11 : vector<8x128xi1>, vector<8x128xf32>
    %c0_19 = arith.constant 0 : index
    %c0_20 = arith.constant 0 : index
    %49 = vector.load %arg12[%c0_19, %c0_20] : memref<64x128xf32, #tpu.memory_space<vmem>>, vector<8x128xf32>
    tpu.vector_store %arg12[%c0_19, %c0_20], %45 {strides = array<i32>} : memref<64x128xf32, #tpu.memory_space<vmem>>, vector<8x128xf32>,
    %c1_i32 = arith.constant 1 : i32
    %50 = vector.broadcast %c1_i32 : i32 to vector<8x1xi32>
    %51 = arith.cmpi sgt, %0, %50 : vector<8x1xi32>
    %52 = vector.extract_strided_slice %9 {offsets = [8, 0], sizes = [8, 512], strides = [1, 1]} : vector<64x512xf32> to vector<8x512xf32>
    %53 = arith.truncf %45 : vector<8x128xf32> to vector<8x128xbf16>
    %cst_21 = arith.constant dense<0.000000e+00> : vector<8x512xf32>
    %54 = tpu.matmul %53, %1, %cst_21 {dimension_numbers = #tpu.dot_dimension_numbers<[1], [0], [0], [1], [0, 0, 1, 1], [], []>} : vector<8x128xbf16>, vector<128x512xbf16>, vector<8x512xf32> -> vector<8x512xf32>
    %55 = arith.addf %52, %54 : vector<8x512xf32>
    %56 = vector.extract_strided_slice %55 {offsets = [0, 0], sizes = [8, 128], strides = [1, 1]} : vector<8x512xf32> to vector<8x128xf32>
    %57 = arith.negf %56 : vector<8x128xf32>
    %58 = math.exp %57 : vector<8x128xf32>
    %cst_22 = arith.constant 1.000000e+00 : f32
    %59 = vector.broadcast %cst_22 : f32 to vector<8x128xf32>
    %60 = arith.addf %59, %58 : vector<8x128xf32>
    %61 = arith.divf %59, %60 : vector<8x128xf32>
    %62 = vector.extract_strided_slice %55 {offsets = [0, 128], sizes = [8, 128], strides = [1, 1]} : vector<8x512xf32> to vector<8x128xf32>
    %63 = arith.negf %62 : vector<8x128xf32>
    %64 = math.exp %63 : vector<8x128xf32>
    %cst_23 = arith.constant 1.000000e+00 : f32
    %65 = vector.broadcast %cst_23 : f32 to vector<8x128xf32>
    %66 = arith.addf %65, %64 : vector<8x128xf32>
    %67 = arith.divf %65, %66 : vector<8x128xf32>
    %68 = vector.extract_strided_slice %55 {offsets = [0, 256], sizes = [8, 128], strides = [1, 1]} : vector<8x512xf32> to vector<8x128xf32>
    %69 = math.tanh %68 : vector<8x128xf32>
    %70 = vector.extract_strided_slice %55 {offsets = [0, 384], sizes = [8, 128], strides = [1, 1]} : vector<8x512xf32> to vector<8x128xf32>
    %71 = arith.negf %70 : vector<8x128xf32>
    %72 = math.exp %71 : vector<8x128xf32>
    %cst_24 = arith.constant 1.000000e+00 : f32
    %73 = vector.broadcast %cst_24 : f32 to vector<8x128xf32>
    %74 = arith.addf %73, %72 : vector<8x128xf32>
    %75 = arith.divf %73, %74 : vector<8x128xf32>
    %76 = arith.mulf %67, %48 : vector<8x128xf32>
    %77 = arith.mulf %61, %69 : vector<8x128xf32>
    %78 = arith.addf %76, %77 : vector<8x128xf32>
    %79 = math.tanh %78 : vector<8x128xf32>
    %80 = arith.mulf %75, %79 : vector<8x128xf32>
    %81 = vector.shape_cast %51 : vector<8x1xi1> to vector<8x1xi1>
    %82 = vector.broadcast %81 : vector<8x1xi1> to vector<8x128xi1>
    %83 = arith.select %82, %80, %45 : vector<8x128xi1>, vector<8x128xf32>
    %84 = vector.shape_cast %51 : vector<8x1xi1> to vector<8x1xi1>
    %85 = vector.broadcast %84 : vector<8x1xi1> to vector<8x128xi1>
    %86 = arith.select %85, %78, %48 : vector<8x128xi1>, vector<8x128xf32>
    %c8 = arith.constant 8 : index
    %c0_25 = arith.constant 0 : index
    %87 = vector.load %arg12[%c8, %c0_25] : memref<64x128xf32, #tpu.memory_space<vmem>>, vector<8x128xf32>
    tpu.vector_store %arg12[%c8, %c0_25], %83 {strides = array<i32>} : memref<64x128xf32, #tpu.memory_space<vmem>>, vector<8x128xf32>,
    %c2_i32 = arith.constant 2 : i32
    %88 = vector.broadcast %c2_i32 : i32 to vector<8x1xi32>
    %89 = arith.cmpi sgt, %0, %88 : vector<8x1xi32>
    %90 = vector.extract_strided_slice %9 {offsets = [16, 0], sizes = [8, 512], strides = [1, 1]} : vector<64x512xf32> to vector<8x512xf32>
    %91 = arith.truncf %83 : vector<8x128xf32> to vector<8x128xbf16>
    %cst_26 = arith.constant dense<0.000000e+00> : vector<8x512xf32>
    %92 = tpu.matmul %91, %1, %cst_26 {dimension_numbers = #tpu.dot_dimension_numbers<[1], [0], [0], [1], [0, 0, 1, 1], [], []>} : vector<8x128xbf16>, vector<128x512xbf16>, vector<8x512xf32> -> vector<8x512xf32>
    %93 = arith.addf %90, %92 : vector<8x512xf32>
    %94 = vector.extract_strided_slice %93 {offsets = [0, 0], sizes = [8, 128], strides = [1, 1]} : vector<8x512xf32> to vector<8x128xf32>
    %95 = arith.negf %94 : vector<8x128xf32>
    %96 = math.exp %95 : vector<8x128xf32>
    %cst_27 = arith.constant 1.000000e+00 : f32
    %97 = vector.broadcast %cst_27 : f32 to vector<8x128xf32>
    %98 = arith.addf %97, %96 : vector<8x128xf32>
    %99 = arith.divf %97, %98 : vector<8x128xf32>
    %100 = vector.extract_strided_slice %93 {offsets = [0, 128], sizes = [8, 128], strides = [1, 1]} : vector<8x512xf32> to vector<8x128xf32>
    %101 = arith.negf %100 : vector<8x128xf32>
    %102 = math.exp %101 : vector<8x128xf32>
    %cst_28 = arith.constant 1.000000e+00 : f32
    %103 = vector.broadcast %cst_28 : f32 to vector<8x128xf32>
    %104 = arith.addf %103, %102 : vector<8x128xf32>
    %105 = arith.divf %103, %104 : vector<8x128xf32>
    %106 = vector.extract_strided_slice %93 {offsets = [0, 256], sizes = [8, 128], strides = [1, 1]} : vector<8x512xf32> to vector<8x128xf32>
    %107 = math.tanh %106 : vector<8x128xf32>
    %108 = vector.extract_strided_slice %93 {offsets = [0, 384], sizes = [8, 128], strides = [1, 1]} : vector<8x512xf32> to vector<8x128xf32>
    %109 = arith.negf %108 : vector<8x128xf32>
    %110 = math.exp %109 : vector<8x128xf32>
    %cst_29 = arith.constant 1.000000e+00 : f32
    %111 = vector.broadcast %cst_29 : f32 to vector<8x128xf32>
    %112 = arith.addf %111, %110 : vector<8x128xf32>
    %113 = arith.divf %111, %112 : vector<8x128xf32>
    %114 = arith.mulf %105, %86 : vector<8x128xf32>
    %115 = arith.mulf %99, %107 : vector<8x128xf32>
    %116 = arith.addf %114, %115 : vector<8x128xf32>
    %117 = math.tanh %116 : vector<8x128xf32>
    %118 = arith.mulf %113, %117 : vector<8x128xf32>
    %119 = vector.shape_cast %89 : vector<8x1xi1> to vector<8x1xi1>
    %120 = vector.broadcast %119 : vector<8x1xi1> to vector<8x128xi1>
    %121 = arith.select %120, %118, %83 : vector<8x128xi1>, vector<8x128xf32>
    %122 = vector.shape_cast %89 : vector<8x1xi1> to vector<8x1xi1>
    %123 = vector.broadcast %122 : vector<8x1xi1> to vector<8x128xi1>
    %124 = arith.select %123, %116, %86 : vector<8x128xi1>, vector<8x128xf32>
    %c16 = arith.constant 16 : index
    %c0_30 = arith.constant 0 : index
    %125 = vector.load %arg12[%c16, %c0_30] : memref<64x128xf32, #tpu.memory_space<vmem>>, vector<8x128xf32>
    tpu.vector_store %arg12[%c16, %c0_30], %121 {strides = array<i32>} : memref<64x128xf32, #tpu.memory_space<vmem>>, vector<8x128xf32>,
    %c3_i32 = arith.constant 3 : i32
    %126 = vector.broadcast %c3_i32 : i32 to vector<8x1xi32>
    %127 = arith.cmpi sgt, %0, %126 : vector<8x1xi32>
    %128 = vector.extract_strided_slice %9 {offsets = [24, 0], sizes = [8, 512], strides = [1, 1]} : vector<64x512xf32> to vector<8x512xf32>
    %129 = arith.truncf %121 : vector<8x128xf32> to vector<8x128xbf16>
    %cst_31 = arith.constant dense<0.000000e+00> : vector<8x512xf32>
    %130 = tpu.matmul %129, %1, %cst_31 {dimension_numbers = #tpu.dot_dimension_numbers<[1], [0], [0], [1], [0, 0, 1, 1], [], []>} : vector<8x128xbf16>, vector<128x512xbf16>, vector<8x512xf32> -> vector<8x512xf32>
    %131 = arith.addf %128, %130 : vector<8x512xf32>
    %132 = vector.extract_strided_slice %131 {offsets = [0, 0], sizes = [8, 128], strides = [1, 1]} : vector<8x512xf32> to vector<8x128xf32>
    %133 = arith.negf %132 : vector<8x128xf32>
    %134 = math.exp %133 : vector<8x128xf32>
    %cst_32 = arith.constant 1.000000e+00 : f32
    %135 = vector.broadcast %cst_32 : f32 to vector<8x128xf32>
    %136 = arith.addf %135, %134 : vector<8x128xf32>
    %137 = arith.divf %135, %136 : vector<8x128xf32>
    %138 = vector.extract_strided_slice %131 {offsets = [0, 128], sizes = [8, 128], strides = [1, 1]} : vector<8x512xf32> to vector<8x128xf32>
    %139 = arith.negf %138 : vector<8x128xf32>
    %140 = math.exp %139 : vector<8x128xf32>
    %cst_33 = arith.constant 1.000000e+00 : f32
    %141 = vector.broadcast %cst_33 : f32 to vector<8x128xf32>
    %142 = arith.addf %141, %140 : vector<8x128xf32>
    %143 = arith.divf %141, %142 : vector<8x128xf32>
    %144 = vector.extract_strided_slice %131 {offsets = [0, 256], sizes = [8, 128], strides = [1, 1]} : vector<8x512xf32> to vector<8x128xf32>
    %145 = math.tanh %144 : vector<8x128xf32>
    %146 = vector.extract_strided_slice %131 {offsets = [0, 384], sizes = [8, 128], strides = [1, 1]} : vector<8x512xf32> to vector<8x128xf32>
    %147 = arith.negf %146 : vector<8x128xf32>
    %148 = math.exp %147 : vector<8x128xf32>
    %cst_34 = arith.constant 1.000000e+00 : f32
    %149 = vector.broadcast %cst_34 : f32 to vector<8x128xf32>
    %150 = arith.addf %149, %148 : vector<8x128xf32>
    %151 = arith.divf %149, %150 : vector<8x128xf32>
    %152 = arith.mulf %143, %124 : vector<8x128xf32>
    %153 = arith.mulf %137, %145 : vector<8x128xf32>
    %154 = arith.addf %152, %153 : vector<8x128xf32>
    %155 = math.tanh %154 : vector<8x128xf32>
    %156 = arith.mulf %151, %155 : vector<8x128xf32>
    %157 = vector.shape_cast %127 : vector<8x1xi1> to vector<8x1xi1>
    %158 = vector.broadcast %157 : vector<8x1xi1> to vector<8x128xi1>
    %159 = arith.select %158, %156, %121 : vector<8x128xi1>, vector<8x128xf32>
    %160 = vector.shape_cast %127 : vector<8x1xi1> to vector<8x1xi1>
    %161 = vector.broadcast %160 : vector<8x1xi1> to vector<8x128xi1>
    %162 = arith.select %161, %154, %124 : vector<8x128xi1>, vector<8x128xf32>
    %c24 = arith.constant 24 : index
    %c0_35 = arith.constant 0 : index
    %163 = vector.load %arg12[%c24, %c0_35] : memref<64x128xf32, #tpu.memory_space<vmem>>, vector<8x128xf32>
    tpu.vector_store %arg12[%c24, %c0_35], %159 {strides = array<i32>} : memref<64x128xf32, #tpu.memory_space<vmem>>, vector<8x128xf32>,
    %c4_i32 = arith.constant 4 : i32
    %164 = vector.broadcast %c4_i32 : i32 to vector<8x1xi32>
    %165 = arith.cmpi sgt, %0, %164 : vector<8x1xi32>
    %166 = vector.extract_strided_slice %9 {offsets = [32, 0], sizes = [8, 512], strides = [1, 1]} : vector<64x512xf32> to vector<8x512xf32>
    %167 = arith.truncf %159 : vector<8x128xf32> to vector<8x128xbf16>
    %cst_36 = arith.constant dense<0.000000e+00> : vector<8x512xf32>
    %168 = tpu.matmul %167, %1, %cst_36 {dimension_numbers = #tpu.dot_dimension_numbers<[1], [0], [0], [1], [0, 0, 1, 1], [], []>} : vector<8x128xbf16>, vector<128x512xbf16>, vector<8x512xf32> -> vector<8x512xf32>
    %169 = arith.addf %166, %168 : vector<8x512xf32>
    %170 = vector.extract_strided_slice %169 {offsets = [0, 0], sizes = [8, 128], strides = [1, 1]} : vector<8x512xf32> to vector<8x128xf32>
    %171 = arith.negf %170 : vector<8x128xf32>
    %172 = math.exp %171 : vector<8x128xf32>
    %cst_37 = arith.constant 1.000000e+00 : f32
    %173 = vector.broadcast %cst_37 : f32 to vector<8x128xf32>
    %174 = arith.addf %173, %172 : vector<8x128xf32>
    %175 = arith.divf %173, %174 : vector<8x128xf32>
    %176 = vector.extract_strided_slice %169 {offsets = [0, 128], sizes = [8, 128], strides = [1, 1]} : vector<8x512xf32> to vector<8x128xf32>
    %177 = arith.negf %176 : vector<8x128xf32>
    %178 = math.exp %177 : vector<8x128xf32>
    %cst_38 = arith.constant 1.000000e+00 : f32
    %179 = vector.broadcast %cst_38 : f32 to vector<8x128xf32>
    %180 = arith.addf %179, %178 : vector<8x128xf32>
    %181 = arith.divf %179, %180 : vector<8x128xf32>
    %182 = vector.extract_strided_slice %169 {offsets = [0, 256], sizes = [8, 128], strides = [1, 1]} : vector<8x512xf32> to vector<8x128xf32>
    %183 = math.tanh %182 : vector<8x128xf32>
    %184 = vector.extract_strided_slice %169 {offsets = [0, 384], sizes = [8, 128], strides = [1, 1]} : vector<8x512xf32> to vector<8x128xf32>
    %185 = arith.negf %184 : vector<8x128xf32>
    %186 = math.exp %185 : vector<8x128xf32>
    %cst_39 = arith.constant 1.000000e+00 : f32
    %187 = vector.broadcast %cst_39 : f32 to vector<8x128xf32>
    %188 = arith.addf %187, %186 : vector<8x128xf32>
    %189 = arith.divf %187, %188 : vector<8x128xf32>
    %190 = arith.mulf %181, %162 : vector<8x128xf32>
    %191 = arith.mulf %175, %183 : vector<8x128xf32>
    %192 = arith.addf %190, %191 : vector<8x128xf32>
    %193 = math.tanh %192 : vector<8x128xf32>
    %194 = arith.mulf %189, %193 : vector<8x128xf32>
    %195 = vector.shape_cast %165 : vector<8x1xi1> to vector<8x1xi1>
    %196 = vector.broadcast %195 : vector<8x1xi1> to vector<8x128xi1>
    %197 = arith.select %196, %194, %159 : vector<8x128xi1>, vector<8x128xf32>
    %198 = vector.shape_cast %165 : vector<8x1xi1> to vector<8x1xi1>
    %199 = vector.broadcast %198 : vector<8x1xi1> to vector<8x128xi1>
    %200 = arith.select %199, %192, %162 : vector<8x128xi1>, vector<8x128xf32>
    %c32 = arith.constant 32 : index
    %c0_40 = arith.constant 0 : index
    %201 = vector.load %arg12[%c32, %c0_40] : memref<64x128xf32, #tpu.memory_space<vmem>>, vector<8x128xf32>
    tpu.vector_store %arg12[%c32, %c0_40], %197 {strides = array<i32>} : memref<64x128xf32, #tpu.memory_space<vmem>>, vector<8x128xf32>,
    %c5_i32 = arith.constant 5 : i32
    %202 = vector.broadcast %c5_i32 : i32 to vector<8x1xi32>
    %203 = arith.cmpi sgt, %0, %202 : vector<8x1xi32>
    %204 = vector.extract_strided_slice %9 {offsets = [40, 0], sizes = [8, 512], strides = [1, 1]} : vector<64x512xf32> to vector<8x512xf32>
    %205 = arith.truncf %197 : vector<8x128xf32> to vector<8x128xbf16>
    %cst_41 = arith.constant dense<0.000000e+00> : vector<8x512xf32>
    %206 = tpu.matmul %205, %1, %cst_41 {dimension_numbers = #tpu.dot_dimension_numbers<[1], [0], [0], [1], [0, 0, 1, 1], [], []>} : vector<8x128xbf16>, vector<128x512xbf16>, vector<8x512xf32> -> vector<8x512xf32>
    %207 = arith.addf %204, %206 : vector<8x512xf32>
    %208 = vector.extract_strided_slice %207 {offsets = [0, 0], sizes = [8, 128], strides = [1, 1]} : vector<8x512xf32> to vector<8x128xf32>
    %209 = arith.negf %208 : vector<8x128xf32>
    %210 = math.exp %209 : vector<8x128xf32>
    %cst_42 = arith.constant 1.000000e+00 : f32
    %211 = vector.broadcast %cst_42 : f32 to vector<8x128xf32>
    %212 = arith.addf %211, %210 : vector<8x128xf32>
    %213 = arith.divf %211, %212 : vector<8x128xf32>
    %214 = vector.extract_strided_slice %207 {offsets = [0, 128], sizes = [8, 128], strides = [1, 1]} : vector<8x512xf32> to vector<8x128xf32>
    %215 = arith.negf %214 : vector<8x128xf32>
    %216 = math.exp %215 : vector<8x128xf32>
    %cst_43 = arith.constant 1.000000e+00 : f32
    %217 = vector.broadcast %cst_43 : f32 to vector<8x128xf32>
    %218 = arith.addf %217, %216 : vector<8x128xf32>
    %219 = arith.divf %217, %218 : vector<8x128xf32>
    %220 = vector.extract_strided_slice %207 {offsets = [0, 256], sizes = [8, 128], strides = [1, 1]} : vector<8x512xf32> to vector<8x128xf32>
    %221 = math.tanh %220 : vector<8x128xf32>
    %222 = vector.extract_strided_slice %207 {offsets = [0, 384], sizes = [8, 128], strides = [1, 1]} : vector<8x512xf32> to vector<8x128xf32>
    %223 = arith.negf %222 : vector<8x128xf32>
    %224 = math.exp %223 : vector<8x128xf32>
    %cst_44 = arith.constant 1.000000e+00 : f32
    %225 = vector.broadcast %cst_44 : f32 to vector<8x128xf32>
    %226 = arith.addf %225, %224 : vector<8x128xf32>
    %227 = arith.divf %225, %226 : vector<8x128xf32>
    %228 = arith.mulf %219, %200 : vector<8x128xf32>
    %229 = arith.mulf %213, %221 : vector<8x128xf32>
    %230 = arith.addf %228, %229 : vector<8x128xf32>
    %231 = math.tanh %230 : vector<8x128xf32>
    %232 = arith.mulf %227, %231 : vector<8x128xf32>
    %233 = vector.shape_cast %203 : vector<8x1xi1> to vector<8x1xi1>
    %234 = vector.broadcast %233 : vector<8x1xi1> to vector<8x128xi1>
    %235 = arith.select %234, %232, %197 : vector<8x128xi1>, vector<8x128xf32>
    %236 = vector.shape_cast %203 : vector<8x1xi1> to vector<8x1xi1>
    %237 = vector.broadcast %236 : vector<8x1xi1> to vector<8x128xi1>
    %238 = arith.select %237, %230, %200 : vector<8x128xi1>, vector<8x128xf32>
    %c40 = arith.constant 40 : index
    %c0_45 = arith.constant 0 : index
    %239 = vector.load %arg12[%c40, %c0_45] : memref<64x128xf32, #tpu.memory_space<vmem>>, vector<8x128xf32>
    tpu.vector_store %arg12[%c40, %c0_45], %235 {strides = array<i32>} : memref<64x128xf32, #tpu.memory_space<vmem>>, vector<8x128xf32>,
    %c6_i32 = arith.constant 6 : i32
    %240 = vector.broadcast %c6_i32 : i32 to vector<8x1xi32>
    %241 = arith.cmpi sgt, %0, %240 : vector<8x1xi32>
    %242 = vector.extract_strided_slice %9 {offsets = [48, 0], sizes = [8, 512], strides = [1, 1]} : vector<64x512xf32> to vector<8x512xf32>
    %243 = arith.truncf %235 : vector<8x128xf32> to vector<8x128xbf16>
    %cst_46 = arith.constant dense<0.000000e+00> : vector<8x512xf32>
    %244 = tpu.matmul %243, %1, %cst_46 {dimension_numbers = #tpu.dot_dimension_numbers<[1], [0], [0], [1], [0, 0, 1, 1], [], []>} : vector<8x128xbf16>, vector<128x512xbf16>, vector<8x512xf32> -> vector<8x512xf32>
    %245 = arith.addf %242, %244 : vector<8x512xf32>
    %246 = vector.extract_strided_slice %245 {offsets = [0, 0], sizes = [8, 128], strides = [1, 1]} : vector<8x512xf32> to vector<8x128xf32>
    %247 = arith.negf %246 : vector<8x128xf32>
    %248 = math.exp %247 : vector<8x128xf32>
    %cst_47 = arith.constant 1.000000e+00 : f32
    %249 = vector.broadcast %cst_47 : f32 to vector<8x128xf32>
    %250 = arith.addf %249, %248 : vector<8x128xf32>
    %251 = arith.divf %249, %250 : vector<8x128xf32>
    %252 = vector.extract_strided_slice %245 {offsets = [0, 128], sizes = [8, 128], strides = [1, 1]} : vector<8x512xf32> to vector<8x128xf32>
    %253 = arith.negf %252 : vector<8x128xf32>
    %254 = math.exp %253 : vector<8x128xf32>
    %cst_48 = arith.constant 1.000000e+00 : f32
    %255 = vector.broadcast %cst_48 : f32 to vector<8x128xf32>
    %256 = arith.addf %255, %254 : vector<8x128xf32>
    %257 = arith.divf %255, %256 : vector<8x128xf32>
    %258 = vector.extract_strided_slice %245 {offsets = [0, 256], sizes = [8, 128], strides = [1, 1]} : vector<8x512xf32> to vector<8x128xf32>
    %259 = math.tanh %258 : vector<8x128xf32>
    %260 = vector.extract_strided_slice %245 {offsets = [0, 384], sizes = [8, 128], strides = [1, 1]} : vector<8x512xf32> to vector<8x128xf32>
    %261 = arith.negf %260 : vector<8x128xf32>
    %262 = math.exp %261 : vector<8x128xf32>
    %cst_49 = arith.constant 1.000000e+00 : f32
    %263 = vector.broadcast %cst_49 : f32 to vector<8x128xf32>
    %264 = arith.addf %263, %262 : vector<8x128xf32>
    %265 = arith.divf %263, %264 : vector<8x128xf32>
    %266 = arith.mulf %257, %238 : vector<8x128xf32>
    %267 = arith.mulf %251, %259 : vector<8x128xf32>
    %268 = arith.addf %266, %267 : vector<8x128xf32>
    %269 = math.tanh %268 : vector<8x128xf32>
    %270 = arith.mulf %265, %269 : vector<8x128xf32>
    %271 = vector.shape_cast %241 : vector<8x1xi1> to vector<8x1xi1>
    %272 = vector.broadcast %271 : vector<8x1xi1> to vector<8x128xi1>
    %273 = arith.select %272, %270, %235 : vector<8x128xi1>, vector<8x128xf32>
    %274 = vector.shape_cast %241 : vector<8x1xi1> to vector<8x1xi1>
    %275 = vector.broadcast %274 : vector<8x1xi1> to vector<8x128xi1>
    %276 = arith.select %275, %268, %238 : vector<8x128xi1>, vector<8x128xf32>
    %c48 = arith.constant 48 : index
    %c0_50 = arith.constant 0 : index
    %277 = vector.load %arg12[%c48, %c0_50] : memref<64x128xf32, #tpu.memory_space<vmem>>, vector<8x128xf32>
    tpu.vector_store %arg12[%c48, %c0_50], %273 {strides = array<i32>} : memref<64x128xf32, #tpu.memory_space<vmem>>, vector<8x128xf32>,
    %c7_i32 = arith.constant 7 : i32
    %278 = vector.broadcast %c7_i32 : i32 to vector<8x1xi32>
    %279 = arith.cmpi sgt, %0, %278 : vector<8x1xi32>
    %280 = vector.extract_strided_slice %9 {offsets = [56, 0], sizes = [8, 512], strides = [1, 1]} : vector<64x512xf32> to vector<8x512xf32>
    %281 = arith.truncf %273 : vector<8x128xf32> to vector<8x128xbf16>
    %cst_51 = arith.constant dense<0.000000e+00> : vector<8x512xf32>
    %282 = tpu.matmul %281, %1, %cst_51 {dimension_numbers = #tpu.dot_dimension_numbers<[1], [0], [0], [1], [0, 0, 1, 1], [], []>} : vector<8x128xbf16>, vector<128x512xbf16>, vector<8x512xf32> -> vector<8x512xf32>
    %283 = arith.addf %280, %282 : vector<8x512xf32>
    %284 = vector.extract_strided_slice %283 {offsets = [0, 0], sizes = [8, 128], strides = [1, 1]} : vector<8x512xf32> to vector<8x128xf32>
    %285 = arith.negf %284 : vector<8x128xf32>
    %286 = math.exp %285 : vector<8x128xf32>
    %cst_52 = arith.constant 1.000000e+00 : f32
    %287 = vector.broadcast %cst_52 : f32 to vector<8x128xf32>
    %288 = arith.addf %287, %286 : vector<8x128xf32>
    %289 = arith.divf %287, %288 : vector<8x128xf32>
    %290 = vector.extract_strided_slice %283 {offsets = [0, 128], sizes = [8, 128], strides = [1, 1]} : vector<8x512xf32> to vector<8x128xf32>
    %291 = arith.negf %290 : vector<8x128xf32>
    %292 = math.exp %291 : vector<8x128xf32>
    %cst_53 = arith.constant 1.000000e+00 : f32
    %293 = vector.broadcast %cst_53 : f32 to vector<8x128xf32>
    %294 = arith.addf %293, %292 : vector<8x128xf32>
    %295 = arith.divf %293, %294 : vector<8x128xf32>
    %296 = vector.extract_strided_slice %283 {offsets = [0, 256], sizes = [8, 128], strides = [1, 1]} : vector<8x512xf32> to vector<8x128xf32>
    %297 = math.tanh %296 : vector<8x128xf32>
    %298 = vector.extract_strided_slice %283 {offsets = [0, 384], sizes = [8, 128], strides = [1, 1]} : vector<8x512xf32> to vector<8x128xf32>
    %299 = arith.negf %298 : vector<8x128xf32>
    %300 = math.exp %299 : vector<8x128xf32>
    %cst_54 = arith.constant 1.000000e+00 : f32
    %301 = vector.broadcast %cst_54 : f32 to vector<8x128xf32>
    %302 = arith.addf %301, %300 : vector<8x128xf32>
    %303 = arith.divf %301, %302 : vector<8x128xf32>
    %304 = arith.mulf %295, %276 : vector<8x128xf32>
    %305 = arith.mulf %289, %297 : vector<8x128xf32>
    %306 = arith.addf %304, %305 : vector<8x128xf32>
    %307 = math.tanh %306 : vector<8x128xf32>
    %308 = arith.mulf %303, %307 : vector<8x128xf32>
    %309 = vector.shape_cast %279 : vector<8x1xi1> to vector<8x1xi1>
    %310 = vector.broadcast %309 : vector<8x1xi1> to vector<8x128xi1>
    %311 = arith.select %310, %308, %273 : vector<8x128xi1>, vector<8x128xf32>
    %312 = vector.shape_cast %279 : vector<8x1xi1> to vector<8x1xi1>
    %313 = vector.broadcast %312 : vector<8x1xi1> to vector<8x128xi1>
    %314 = arith.select %313, %306, %276 : vector<8x128xi1>, vector<8x128xf32>
    %c56 = arith.constant 56 : index
    %c0_55 = arith.constant 0 : index
    %315 = vector.load %arg12[%c56, %c0_55] : memref<64x128xf32, #tpu.memory_space<vmem>>, vector<8x128xf32>
    tpu.vector_store %arg12[%c56, %c0_55], %311 {strides = array<i32>} : memref<64x128xf32, #tpu.memory_space<vmem>>, vector<8x128xf32>,
    %c0_56 = arith.constant 0 : index
    %c0_57 = arith.constant 0 : index
    %316 = vector.load %arg12[%c0_56, %c0_57] : memref<64x128xf32, #tpu.memory_space<vmem>>, vector<64x128xf32>
    %317 = arith.truncf %316 : vector<64x128xf32> to vector<64x128xbf16>
    %c0_58 = arith.constant 0 : index
    %c0_59 = arith.constant 0 : index
    %318 = vector.load %arg6[%c0_58, %c0_59] : memref<128x512xbf16, #tpu.memory_space<vmem>>, vector<128x512xbf16>
    %cst_60 = arith.constant dense<0.000000e+00> : vector<64x512xf32>
    %319 = tpu.matmul %317, %318, %cst_60 {dimension_numbers = #tpu.dot_dimension_numbers<[1], [0], [0], [1], [0, 0, 1, 1], [], []>} : vector<64x128xbf16>, vector<128x512xbf16>, vector<64x512xf32> -> vector<64x512xf32>
    %320 = vector.broadcast %3 : vector<1x512xf32> to vector<64x512xf32>
    %321 = arith.addf %319, %320 : vector<64x512xf32>
    %cst_61 = arith.constant 0.000000e+00 : f32
    %322 = vector.broadcast %cst_61 : f32 to vector<8x128xf32>
    %cst_62 = arith.constant 0.000000e+00 : f32
    %323 = vector.broadcast %cst_62 : f32 to vector<8x128xf32>
    %c0_i32_63 = arith.constant 0 : i32
    %324 = vector.broadcast %c0_i32_63 : i32 to vector<8x1xi32>
    %325 = arith.cmpi sgt, %0, %324 : vector<8x1xi32>
    %326 = vector.extract_strided_slice %321 {offsets = [0, 0], sizes = [8, 512], strides = [1, 1]} : vector<64x512xf32> to vector<8x512xf32>
    %327 = arith.truncf %322 : vector<8x128xf32> to vector<8x128xbf16>
    %cst_64 = arith.constant dense<0.000000e+00> : vector<8x512xf32>
    %328 = tpu.matmul %327, %2, %cst_64 {dimension_numbers = #tpu.dot_dimension_numbers<[1], [0], [0], [1], [0, 0, 1, 1], [], []>} : vector<8x128xbf16>, vector<128x512xbf16>, vector<8x512xf32> -> vector<8x512xf32>
    %329 = arith.addf %326, %328 : vector<8x512xf32>
    %330 = vector.extract_strided_slice %329 {offsets = [0, 0], sizes = [8, 128], strides = [1, 1]} : vector<8x512xf32> to vector<8x128xf32>
    %331 = arith.negf %330 : vector<8x128xf32>
    %332 = math.exp %331 : vector<8x128xf32>
    %cst_65 = arith.constant 1.000000e+00 : f32
    %333 = vector.broadcast %cst_65 : f32 to vector<8x128xf32>
    %334 = arith.addf %333, %332 : vector<8x128xf32>
    %335 = arith.divf %333, %334 : vector<8x128xf32>
    %336 = vector.extract_strided_slice %329 {offsets = [0, 128], sizes = [8, 128], strides = [1, 1]} : vector<8x512xf32> to vector<8x128xf32>
    %337 = arith.negf %336 : vector<8x128xf32>
    %338 = math.exp %337 : vector<8x128xf32>
    %cst_66 = arith.constant 1.000000e+00 : f32
    %339 = vector.broadcast %cst_66 : f32 to vector<8x128xf32>
    %340 = arith.addf %339, %338 : vector<8x128xf32>
    %341 = arith.divf %339, %340 : vector<8x128xf32>
    %342 = vector.extract_strided_slice %329 {offsets = [0, 256], sizes = [8, 128], strides = [1, 1]} : vector<8x512xf32> to vector<8x128xf32>
    %343 = math.tanh %342 : vector<8x128xf32>
    %344 = vector.extract_strided_slice %329 {offsets = [0, 384], sizes = [8, 128], strides = [1, 1]} : vector<8x512xf32> to vector<8x128xf32>
    %345 = arith.negf %344 : vector<8x128xf32>
    %346 = math.exp %345 : vector<8x128xf32>
    %cst_67 = arith.constant 1.000000e+00 : f32
    %347 = vector.broadcast %cst_67 : f32 to vector<8x128xf32>
    %348 = arith.addf %347, %346 : vector<8x128xf32>
    %349 = arith.divf %347, %348 : vector<8x128xf32>
    %350 = arith.mulf %341, %323 : vector<8x128xf32>
    %351 = arith.mulf %335, %343 : vector<8x128xf32>
    %352 = arith.addf %350, %351 : vector<8x128xf32>
    %353 = math.tanh %352 : vector<8x128xf32>
    %354 = arith.mulf %349, %353 : vector<8x128xf32>
    %355 = vector.shape_cast %325 : vector<8x1xi1> to vector<8x1xi1>
    %356 = vector.broadcast %355 : vector<8x1xi1> to vector<8x128xi1>
    %357 = arith.select %356, %354, %322 : vector<8x128xi1>, vector<8x128xf32>
    %358 = vector.shape_cast %325 : vector<8x1xi1> to vector<8x1xi1>
    %359 = vector.broadcast %358 : vector<8x1xi1> to vector<8x128xi1>
    %360 = arith.select %359, %352, %323 : vector<8x128xi1>, vector<8x128xf32>
    %cst_68 = arith.constant 0.000000e+00 : f32
    %361 = vector.shape_cast %325 : vector<8x1xi1> to vector<8x1xi1>
    %362 = vector.broadcast %361 : vector<8x1xi1> to vector<8x128xi1>
    %363 = vector.broadcast %cst_68 : f32 to vector<8x128xf32>
    %364 = arith.select %362, %357, %363 : vector<8x128xi1>, vector<8x128xf32>
    %c0_69 = arith.constant 0 : index
    %c0_70 = arith.constant 0 : index
    %365 = vector.load %arg9[%c0_69, %c0_70] : memref<8x1024xf32, #tpu.memory_space<vmem>>, vector<8x128xf32>
    tpu.vector_store %arg9[%c0_69, %c0_70], %364 {strides = array<i32>} : memref<8x1024xf32, #tpu.memory_space<vmem>>, vector<8x128xf32>,
    %c1_i32_71 = arith.constant 1 : i32
    %366 = vector.broadcast %c1_i32_71 : i32 to vector<8x1xi32>
    %367 = arith.cmpi sgt, %0, %366 : vector<8x1xi32>
    %368 = vector.extract_strided_slice %321 {offsets = [8, 0], sizes = [8, 512], strides = [1, 1]} : vector<64x512xf32> to vector<8x512xf32>
    %369 = arith.truncf %357 : vector<8x128xf32> to vector<8x128xbf16>
    %cst_72 = arith.constant dense<0.000000e+00> : vector<8x512xf32>
    %370 = tpu.matmul %369, %2, %cst_72 {dimension_numbers = #tpu.dot_dimension_numbers<[1], [0], [0], [1], [0, 0, 1, 1], [], []>} : vector<8x128xbf16>, vector<128x512xbf16>, vector<8x512xf32> -> vector<8x512xf32>
    %371 = arith.addf %368, %370 : vector<8x512xf32>
    %372 = vector.extract_strided_slice %371 {offsets = [0, 0], sizes = [8, 128], strides = [1, 1]} : vector<8x512xf32> to vector<8x128xf32>
    %373 = arith.negf %372 : vector<8x128xf32>
    %374 = math.exp %373 : vector<8x128xf32>
    %cst_73 = arith.constant 1.000000e+00 : f32
    %375 = vector.broadcast %cst_73 : f32 to vector<8x128xf32>
    %376 = arith.addf %375, %374 : vector<8x128xf32>
    %377 = arith.divf %375, %376 : vector<8x128xf32>
    %378 = vector.extract_strided_slice %371 {offsets = [0, 128], sizes = [8, 128], strides = [1, 1]} : vector<8x512xf32> to vector<8x128xf32>
    %379 = arith.negf %378 : vector<8x128xf32>
    %380 = math.exp %379 : vector<8x128xf32>
    %cst_74 = arith.constant 1.000000e+00 : f32
    %381 = vector.broadcast %cst_74 : f32 to vector<8x128xf32>
    %382 = arith.addf %381, %380 : vector<8x128xf32>
    %383 = arith.divf %381, %382 : vector<8x128xf32>
    %384 = vector.extract_strided_slice %371 {offsets = [0, 256], sizes = [8, 128], strides = [1, 1]} : vector<8x512xf32> to vector<8x128xf32>
    %385 = math.tanh %384 : vector<8x128xf32>
    %386 = vector.extract_strided_slice %371 {offsets = [0, 384], sizes = [8, 128], strides = [1, 1]} : vector<8x512xf32> to vector<8x128xf32>
    %387 = arith.negf %386 : vector<8x128xf32>
    %388 = math.exp %387 : vector<8x128xf32>
    %cst_75 = arith.constant 1.000000e+00 : f32
    %389 = vector.broadcast %cst_75 : f32 to vector<8x128xf32>
    %390 = arith.addf %389, %388 : vector<8x128xf32>
    %391 = arith.divf %389, %390 : vector<8x128xf32>
    %392 = arith.mulf %383, %360 : vector<8x128xf32>
    %393 = arith.mulf %377, %385 : vector<8x128xf32>
    %394 = arith.addf %392, %393 : vector<8x128xf32>
    %395 = math.tanh %394 : vector<8x128xf32>
    %396 = arith.mulf %391, %395 : vector<8x128xf32>
    %397 = vector.shape_cast %367 : vector<8x1xi1> to vector<8x1xi1>
    %398 = vector.broadcast %397 : vector<8x1xi1> to vector<8x128xi1>
    %399 = arith.select %398, %396, %357 : vector<8x128xi1>, vector<8x128xf32>
    %400 = vector.shape_cast %367 : vector<8x1xi1> to vector<8x1xi1>
    %401 = vector.broadcast %400 : vector<8x1xi1> to vector<8x128xi1>
    %402 = arith.select %401, %394, %360 : vector<8x128xi1>, vector<8x128xf32>
    %cst_76 = arith.constant 0.000000e+00 : f32
    %403 = vector.shape_cast %367 : vector<8x1xi1> to vector<8x1xi1>
    %404 = vector.broadcast %403 : vector<8x1xi1> to vector<8x128xi1>
    %405 = vector.broadcast %cst_76 : f32 to vector<8x128xf32>
    %406 = arith.select %404, %399, %405 : vector<8x128xi1>, vector<8x128xf32>
    %c0_77 = arith.constant 0 : index
    %c128 = arith.constant 128 : index
    %407 = vector.load %arg9[%c0_77, %c128] : memref<8x1024xf32, #tpu.memory_space<vmem>>, vector<8x128xf32>
    tpu.vector_store %arg9[%c0_77, %c128], %406 {strides = array<i32>} : memref<8x1024xf32, #tpu.memory_space<vmem>>, vector<8x128xf32>,
    %c2_i32_78 = arith.constant 2 : i32
    %408 = vector.broadcast %c2_i32_78 : i32 to vector<8x1xi32>
    %409 = arith.cmpi sgt, %0, %408 : vector<8x1xi32>
    %410 = vector.extract_strided_slice %321 {offsets = [16, 0], sizes = [8, 512], strides = [1, 1]} : vector<64x512xf32> to vector<8x512xf32>
    %411 = arith.truncf %399 : vector<8x128xf32> to vector<8x128xbf16>
    %cst_79 = arith.constant dense<0.000000e+00> : vector<8x512xf32>
    %412 = tpu.matmul %411, %2, %cst_79 {dimension_numbers = #tpu.dot_dimension_numbers<[1], [0], [0], [1], [0, 0, 1, 1], [], []>} : vector<8x128xbf16>, vector<128x512xbf16>, vector<8x512xf32> -> vector<8x512xf32>
    %413 = arith.addf %410, %412 : vector<8x512xf32>
    %414 = vector.extract_strided_slice %413 {offsets = [0, 0], sizes = [8, 128], strides = [1, 1]} : vector<8x512xf32> to vector<8x128xf32>
    %415 = arith.negf %414 : vector<8x128xf32>
    %416 = math.exp %415 : vector<8x128xf32>
    %cst_80 = arith.constant 1.000000e+00 : f32
    %417 = vector.broadcast %cst_80 : f32 to vector<8x128xf32>
    %418 = arith.addf %417, %416 : vector<8x128xf32>
    %419 = arith.divf %417, %418 : vector<8x128xf32>
    %420 = vector.extract_strided_slice %413 {offsets = [0, 128], sizes = [8, 128], strides = [1, 1]} : vector<8x512xf32> to vector<8x128xf32>
    %421 = arith.negf %420 : vector<8x128xf32>
    %422 = math.exp %421 : vector<8x128xf32>
    %cst_81 = arith.constant 1.000000e+00 : f32
    %423 = vector.broadcast %cst_81 : f32 to vector<8x128xf32>
    %424 = arith.addf %423, %422 : vector<8x128xf32>
    %425 = arith.divf %423, %424 : vector<8x128xf32>
    %426 = vector.extract_strided_slice %413 {offsets = [0, 256], sizes = [8, 128], strides = [1, 1]} : vector<8x512xf32> to vector<8x128xf32>
    %427 = math.tanh %426 : vector<8x128xf32>
    %428 = vector.extract_strided_slice %413 {offsets = [0, 384], sizes = [8, 128], strides = [1, 1]} : vector<8x512xf32> to vector<8x128xf32>
    %429 = arith.negf %428 : vector<8x128xf32>
    %430 = math.exp %429 : vector<8x128xf32>
    %cst_82 = arith.constant 1.000000e+00 : f32
    %431 = vector.broadcast %cst_82 : f32 to vector<8x128xf32>
    %432 = arith.addf %431, %430 : vector<8x128xf32>
    %433 = arith.divf %431, %432 : vector<8x128xf32>
    %434 = arith.mulf %425, %402 : vector<8x128xf32>
    %435 = arith.mulf %419, %427 : vector<8x128xf32>
    %436 = arith.addf %434, %435 : vector<8x128xf32>
    %437 = math.tanh %436 : vector<8x128xf32>
    %438 = arith.mulf %433, %437 : vector<8x128xf32>
    %439 = vector.shape_cast %409 : vector<8x1xi1> to vector<8x1xi1>
    %440 = vector.broadcast %439 : vector<8x1xi1> to vector<8x128xi1>
    %441 = arith.select %440, %438, %399 : vector<8x128xi1>, vector<8x128xf32>
    %442 = vector.shape_cast %409 : vector<8x1xi1> to vector<8x1xi1>
    %443 = vector.broadcast %442 : vector<8x1xi1> to vector<8x128xi1>
    %444 = arith.select %443, %436, %402 : vector<8x128xi1>, vector<8x128xf32>
    %cst_83 = arith.constant 0.000000e+00 : f32
    %445 = vector.shape_cast %409 : vector<8x1xi1> to vector<8x1xi1>
    %446 = vector.broadcast %445 : vector<8x1xi1> to vector<8x128xi1>
    %447 = vector.broadcast %cst_83 : f32 to vector<8x128xf32>
    %448 = arith.select %446, %441, %447 : vector<8x128xi1>, vector<8x128xf32>
    %c0_84 = arith.constant 0 : index
    %c256 = arith.constant 256 : index
    %449 = vector.load %arg9[%c0_84, %c256] : memref<8x1024xf32, #tpu.memory_space<vmem>>, vector<8x128xf32>
    tpu.vector_store %arg9[%c0_84, %c256], %448 {strides = array<i32>} : memref<8x1024xf32, #tpu.memory_space<vmem>>, vector<8x128xf32>,
    %c3_i32_85 = arith.constant 3 : i32
    %450 = vector.broadcast %c3_i32_85 : i32 to vector<8x1xi32>
    %451 = arith.cmpi sgt, %0, %450 : vector<8x1xi32>
    %452 = vector.extract_strided_slice %321 {offsets = [24, 0], sizes = [8, 512], strides = [1, 1]} : vector<64x512xf32> to vector<8x512xf32>
    %453 = arith.truncf %441 : vector<8x128xf32> to vector<8x128xbf16>
    %cst_86 = arith.constant dense<0.000000e+00> : vector<8x512xf32>
    %454 = tpu.matmul %453, %2, %cst_86 {dimension_numbers = #tpu.dot_dimension_numbers<[1], [0], [0], [1], [0, 0, 1, 1], [], []>} : vector<8x128xbf16>, vector<128x512xbf16>, vector<8x512xf32> -> vector<8x512xf32>
    %455 = arith.addf %452, %454 : vector<8x512xf32>
    %456 = vector.extract_strided_slice %455 {offsets = [0, 0], sizes = [8, 128], strides = [1, 1]} : vector<8x512xf32> to vector<8x128xf32>
    %457 = arith.negf %456 : vector<8x128xf32>
    %458 = math.exp %457 : vector<8x128xf32>
    %cst_87 = arith.constant 1.000000e+00 : f32
    %459 = vector.broadcast %cst_87 : f32 to vector<8x128xf32>
    %460 = arith.addf %459, %458 : vector<8x128xf32>
    %461 = arith.divf %459, %460 : vector<8x128xf32>
    %462 = vector.extract_strided_slice %455 {offsets = [0, 128], sizes = [8, 128], strides = [1, 1]} : vector<8x512xf32> to vector<8x128xf32>
    %463 = arith.negf %462 : vector<8x128xf32>
    %464 = math.exp %463 : vector<8x128xf32>
    %cst_88 = arith.constant 1.000000e+00 : f32
    %465 = vector.broadcast %cst_88 : f32 to vector<8x128xf32>
    %466 = arith.addf %465, %464 : vector<8x128xf32>
    %467 = arith.divf %465, %466 : vector<8x128xf32>
    %468 = vector.extract_strided_slice %455 {offsets = [0, 256], sizes = [8, 128], strides = [1, 1]} : vector<8x512xf32> to vector<8x128xf32>
    %469 = math.tanh %468 : vector<8x128xf32>
    %470 = vector.extract_strided_slice %455 {offsets = [0, 384], sizes = [8, 128], strides = [1, 1]} : vector<8x512xf32> to vector<8x128xf32>
    %471 = arith.negf %470 : vector<8x128xf32>
    %472 = math.exp %471 : vector<8x128xf32>
    %cst_89 = arith.constant 1.000000e+00 : f32
    %473 = vector.broadcast %cst_89 : f32 to vector<8x128xf32>
    %474 = arith.addf %473, %472 : vector<8x128xf32>
    %475 = arith.divf %473, %474 : vector<8x128xf32>
    %476 = arith.mulf %467, %444 : vector<8x128xf32>
    %477 = arith.mulf %461, %469 : vector<8x128xf32>
    %478 = arith.addf %476, %477 : vector<8x128xf32>
    %479 = math.tanh %478 : vector<8x128xf32>
    %480 = arith.mulf %475, %479 : vector<8x128xf32>
    %481 = vector.shape_cast %451 : vector<8x1xi1> to vector<8x1xi1>
    %482 = vector.broadcast %481 : vector<8x1xi1> to vector<8x128xi1>
    %483 = arith.select %482, %480, %441 : vector<8x128xi1>, vector<8x128xf32>
    %484 = vector.shape_cast %451 : vector<8x1xi1> to vector<8x1xi1>
    %485 = vector.broadcast %484 : vector<8x1xi1> to vector<8x128xi1>
    %486 = arith.select %485, %478, %444 : vector<8x128xi1>, vector<8x128xf32>
    %cst_90 = arith.constant 0.000000e+00 : f32
    %487 = vector.shape_cast %451 : vector<8x1xi1> to vector<8x1xi1>
    %488 = vector.broadcast %487 : vector<8x1xi1> to vector<8x128xi1>
    %489 = vector.broadcast %cst_90 : f32 to vector<8x128xf32>
    %490 = arith.select %488, %483, %489 : vector<8x128xi1>, vector<8x128xf32>
    %c0_91 = arith.constant 0 : index
    %c384 = arith.constant 384 : index
    %491 = vector.load %arg9[%c0_91, %c384] : memref<8x1024xf32, #tpu.memory_space<vmem>>, vector<8x128xf32>
    tpu.vector_store %arg9[%c0_91, %c384], %490 {strides = array<i32>} : memref<8x1024xf32, #tpu.memory_space<vmem>>, vector<8x128xf32>,
    %c4_i32_92 = arith.constant 4 : i32
    %492 = vector.broadcast %c4_i32_92 : i32 to vector<8x1xi32>
    %493 = arith.cmpi sgt, %0, %492 : vector<8x1xi32>
    %494 = vector.extract_strided_slice %321 {offsets = [32, 0], sizes = [8, 512], strides = [1, 1]} : vector<64x512xf32> to vector<8x512xf32>
    %495 = arith.truncf %483 : vector<8x128xf32> to vector<8x128xbf16>
    %cst_93 = arith.constant dense<0.000000e+00> : vector<8x512xf32>
    %496 = tpu.matmul %495, %2, %cst_93 {dimension_numbers = #tpu.dot_dimension_numbers<[1], [0], [0], [1], [0, 0, 1, 1], [], []>} : vector<8x128xbf16>, vector<128x512xbf16>, vector<8x512xf32> -> vector<8x512xf32>
    %497 = arith.addf %494, %496 : vector<8x512xf32>
    %498 = vector.extract_strided_slice %497 {offsets = [0, 0], sizes = [8, 128], strides = [1, 1]} : vector<8x512xf32> to vector<8x128xf32>
    %499 = arith.negf %498 : vector<8x128xf32>
    %500 = math.exp %499 : vector<8x128xf32>
    %cst_94 = arith.constant 1.000000e+00 : f32
    %501 = vector.broadcast %cst_94 : f32 to vector<8x128xf32>
    %502 = arith.addf %501, %500 : vector<8x128xf32>
    %503 = arith.divf %501, %502 : vector<8x128xf32>
    %504 = vector.extract_strided_slice %497 {offsets = [0, 128], sizes = [8, 128], strides = [1, 1]} : vector<8x512xf32> to vector<8x128xf32>
    %505 = arith.negf %504 : vector<8x128xf32>
    %506 = math.exp %505 : vector<8x128xf32>
    %cst_95 = arith.constant 1.000000e+00 : f32
    %507 = vector.broadcast %cst_95 : f32 to vector<8x128xf32>
    %508 = arith.addf %507, %506 : vector<8x128xf32>
    %509 = arith.divf %507, %508 : vector<8x128xf32>
    %510 = vector.extract_strided_slice %497 {offsets = [0, 256], sizes = [8, 128], strides = [1, 1]} : vector<8x512xf32> to vector<8x128xf32>
    %511 = math.tanh %510 : vector<8x128xf32>
    %512 = vector.extract_strided_slice %497 {offsets = [0, 384], sizes = [8, 128], strides = [1, 1]} : vector<8x512xf32> to vector<8x128xf32>
    %513 = arith.negf %512 : vector<8x128xf32>
    %514 = math.exp %513 : vector<8x128xf32>
    %cst_96 = arith.constant 1.000000e+00 : f32
    %515 = vector.broadcast %cst_96 : f32 to vector<8x128xf32>
    %516 = arith.addf %515, %514 : vector<8x128xf32>
    %517 = arith.divf %515, %516 : vector<8x128xf32>
    %518 = arith.mulf %509, %486 : vector<8x128xf32>
    %519 = arith.mulf %503, %511 : vector<8x128xf32>
    %520 = arith.addf %518, %519 : vector<8x128xf32>
    %521 = math.tanh %520 : vector<8x128xf32>
    %522 = arith.mulf %517, %521 : vector<8x128xf32>
    %523 = vector.shape_cast %493 : vector<8x1xi1> to vector<8x1xi1>
    %524 = vector.broadcast %523 : vector<8x1xi1> to vector<8x128xi1>
    %525 = arith.select %524, %522, %483 : vector<8x128xi1>, vector<8x128xf32>
    %526 = vector.shape_cast %493 : vector<8x1xi1> to vector<8x1xi1>
    %527 = vector.broadcast %526 : vector<8x1xi1> to vector<8x128xi1>
    %528 = arith.select %527, %520, %486 : vector<8x128xi1>, vector<8x128xf32>
    %cst_97 = arith.constant 0.000000e+00 : f32
    %529 = vector.shape_cast %493 : vector<8x1xi1> to vector<8x1xi1>
    %530 = vector.broadcast %529 : vector<8x1xi1> to vector<8x128xi1>
    %531 = vector.broadcast %cst_97 : f32 to vector<8x128xf32>
    %532 = arith.select %530, %525, %531 : vector<8x128xi1>, vector<8x128xf32>
    %c0_98 = arith.constant 0 : index
    %c512 = arith.constant 512 : index
    %533 = vector.load %arg9[%c0_98, %c512] : memref<8x1024xf32, #tpu.memory_space<vmem>>, vector<8x128xf32>
    tpu.vector_store %arg9[%c0_98, %c512], %532 {strides = array<i32>} : memref<8x1024xf32, #tpu.memory_space<vmem>>, vector<8x128xf32>,
    %c5_i32_99 = arith.constant 5 : i32
    %534 = vector.broadcast %c5_i32_99 : i32 to vector<8x1xi32>
    %535 = arith.cmpi sgt, %0, %534 : vector<8x1xi32>
    %536 = vector.extract_strided_slice %321 {offsets = [40, 0], sizes = [8, 512], strides = [1, 1]} : vector<64x512xf32> to vector<8x512xf32>
    %537 = arith.truncf %525 : vector<8x128xf32> to vector<8x128xbf16>
    %cst_100 = arith.constant dense<0.000000e+00> : vector<8x512xf32>
    %538 = tpu.matmul %537, %2, %cst_100 {dimension_numbers = #tpu.dot_dimension_numbers<[1], [0], [0], [1], [0, 0, 1, 1], [], []>} : vector<8x128xbf16>, vector<128x512xbf16>, vector<8x512xf32> -> vector<8x512xf32>
    %539 = arith.addf %536, %538 : vector<8x512xf32>
    %540 = vector.extract_strided_slice %539 {offsets = [0, 0], sizes = [8, 128], strides = [1, 1]} : vector<8x512xf32> to vector<8x128xf32>
    %541 = arith.negf %540 : vector<8x128xf32>
    %542 = math.exp %541 : vector<8x128xf32>
    %cst_101 = arith.constant 1.000000e+00 : f32
    %543 = vector.broadcast %cst_101 : f32 to vector<8x128xf32>
    %544 = arith.addf %543, %542 : vector<8x128xf32>
    %545 = arith.divf %543, %544 : vector<8x128xf32>
    %546 = vector.extract_strided_slice %539 {offsets = [0, 128], sizes = [8, 128], strides = [1, 1]} : vector<8x512xf32> to vector<8x128xf32>
    %547 = arith.negf %546 : vector<8x128xf32>
    %548 = math.exp %547 : vector<8x128xf32>
    %cst_102 = arith.constant 1.000000e+00 : f32
    %549 = vector.broadcast %cst_102 : f32 to vector<8x128xf32>
    %550 = arith.addf %549, %548 : vector<8x128xf32>
    %551 = arith.divf %549, %550 : vector<8x128xf32>
    %552 = vector.extract_strided_slice %539 {offsets = [0, 256], sizes = [8, 128], strides = [1, 1]} : vector<8x512xf32> to vector<8x128xf32>
    %553 = math.tanh %552 : vector<8x128xf32>
    %554 = vector.extract_strided_slice %539 {offsets = [0, 384], sizes = [8, 128], strides = [1, 1]} : vector<8x512xf32> to vector<8x128xf32>
    %555 = arith.negf %554 : vector<8x128xf32>
    %556 = math.exp %555 : vector<8x128xf32>
    %cst_103 = arith.constant 1.000000e+00 : f32
    %557 = vector.broadcast %cst_103 : f32 to vector<8x128xf32>
    %558 = arith.addf %557, %556 : vector<8x128xf32>
    %559 = arith.divf %557, %558 : vector<8x128xf32>
    %560 = arith.mulf %551, %528 : vector<8x128xf32>
    %561 = arith.mulf %545, %553 : vector<8x128xf32>
    %562 = arith.addf %560, %561 : vector<8x128xf32>
    %563 = math.tanh %562 : vector<8x128xf32>
    %564 = arith.mulf %559, %563 : vector<8x128xf32>
    %565 = vector.shape_cast %535 : vector<8x1xi1> to vector<8x1xi1>
    %566 = vector.broadcast %565 : vector<8x1xi1> to vector<8x128xi1>
    %567 = arith.select %566, %564, %525 : vector<8x128xi1>, vector<8x128xf32>
    %568 = vector.shape_cast %535 : vector<8x1xi1> to vector<8x1xi1>
    %569 = vector.broadcast %568 : vector<8x1xi1> to vector<8x128xi1>
    %570 = arith.select %569, %562, %528 : vector<8x128xi1>, vector<8x128xf32>
    %cst_104 = arith.constant 0.000000e+00 : f32
    %571 = vector.shape_cast %535 : vector<8x1xi1> to vector<8x1xi1>
    %572 = vector.broadcast %571 : vector<8x1xi1> to vector<8x128xi1>
    %573 = vector.broadcast %cst_104 : f32 to vector<8x128xf32>
    %574 = arith.select %572, %567, %573 : vector<8x128xi1>, vector<8x128xf32>
    %c0_105 = arith.constant 0 : index
    %c640 = arith.constant 640 : index
    %575 = vector.load %arg9[%c0_105, %c640] : memref<8x1024xf32, #tpu.memory_space<vmem>>, vector<8x128xf32>
    tpu.vector_store %arg9[%c0_105, %c640], %574 {strides = array<i32>} : memref<8x1024xf32, #tpu.memory_space<vmem>>, vector<8x128xf32>,
    %c6_i32_106 = arith.constant 6 : i32
    %576 = vector.broadcast %c6_i32_106 : i32 to vector<8x1xi32>
    %577 = arith.cmpi sgt, %0, %576 : vector<8x1xi32>
    %578 = vector.extract_strided_slice %321 {offsets = [48, 0], sizes = [8, 512], strides = [1, 1]} : vector<64x512xf32> to vector<8x512xf32>
    %579 = arith.truncf %567 : vector<8x128xf32> to vector<8x128xbf16>
    %cst_107 = arith.constant dense<0.000000e+00> : vector<8x512xf32>
    %580 = tpu.matmul %579, %2, %cst_107 {dimension_numbers = #tpu.dot_dimension_numbers<[1], [0], [0], [1], [0, 0, 1, 1], [], []>} : vector<8x128xbf16>, vector<128x512xbf16>, vector<8x512xf32> -> vector<8x512xf32>
    %581 = arith.addf %578, %580 : vector<8x512xf32>
    %582 = vector.extract_strided_slice %581 {offsets = [0, 0], sizes = [8, 128], strides = [1, 1]} : vector<8x512xf32> to vector<8x128xf32>
    %583 = arith.negf %582 : vector<8x128xf32>
    %584 = math.exp %583 : vector<8x128xf32>
    %cst_108 = arith.constant 1.000000e+00 : f32
    %585 = vector.broadcast %cst_108 : f32 to vector<8x128xf32>
    %586 = arith.addf %585, %584 : vector<8x128xf32>
    %587 = arith.divf %585, %586 : vector<8x128xf32>
    %588 = vector.extract_strided_slice %581 {offsets = [0, 128], sizes = [8, 128], strides = [1, 1]} : vector<8x512xf32> to vector<8x128xf32>
    %589 = arith.negf %588 : vector<8x128xf32>
    %590 = math.exp %589 : vector<8x128xf32>
    %cst_109 = arith.constant 1.000000e+00 : f32
    %591 = vector.broadcast %cst_109 : f32 to vector<8x128xf32>
    %592 = arith.addf %591, %590 : vector<8x128xf32>
    %593 = arith.divf %591, %592 : vector<8x128xf32>
    %594 = vector.extract_strided_slice %581 {offsets = [0, 256], sizes = [8, 128], strides = [1, 1]} : vector<8x512xf32> to vector<8x128xf32>
    %595 = math.tanh %594 : vector<8x128xf32>
    %596 = vector.extract_strided_slice %581 {offsets = [0, 384], sizes = [8, 128], strides = [1, 1]} : vector<8x512xf32> to vector<8x128xf32>
    %597 = arith.negf %596 : vector<8x128xf32>
    %598 = math.exp %597 : vector<8x128xf32>
    %cst_110 = arith.constant 1.000000e+00 : f32
    %599 = vector.broadcast %cst_110 : f32 to vector<8x128xf32>
    %600 = arith.addf %599, %598 : vector<8x128xf32>
    %601 = arith.divf %599, %600 : vector<8x128xf32>
    %602 = arith.mulf %593, %570 : vector<8x128xf32>
    %603 = arith.mulf %587, %595 : vector<8x128xf32>
    %604 = arith.addf %602, %603 : vector<8x128xf32>
    %605 = math.tanh %604 : vector<8x128xf32>
    %606 = arith.mulf %601, %605 : vector<8x128xf32>
    %607 = vector.shape_cast %577 : vector<8x1xi1> to vector<8x1xi1>
    %608 = vector.broadcast %607 : vector<8x1xi1> to vector<8x128xi1>
    %609 = arith.select %608, %606, %567 : vector<8x128xi1>, vector<8x128xf32>
    %610 = vector.shape_cast %577 : vector<8x1xi1> to vector<8x1xi1>
    %611 = vector.broadcast %610 : vector<8x1xi1> to vector<8x128xi1>
    %612 = arith.select %611, %604, %570 : vector<8x128xi1>, vector<8x128xf32>
    %cst_111 = arith.constant 0.000000e+00 : f32
    %613 = vector.shape_cast %577 : vector<8x1xi1> to vector<8x1xi1>
    %614 = vector.broadcast %613 : vector<8x1xi1> to vector<8x128xi1>
    %615 = vector.broadcast %cst_111 : f32 to vector<8x128xf32>
    %616 = arith.select %614, %609, %615 : vector<8x128xi1>, vector<8x128xf32>
    %c0_112 = arith.constant 0 : index
    %c768 = arith.constant 768 : index
    %617 = vector.load %arg9[%c0_112, %c768] : memref<8x1024xf32, #tpu.memory_space<vmem>>, vector<8x128xf32>
    tpu.vector_store %arg9[%c0_112, %c768], %616 {strides = array<i32>} : memref<8x1024xf32, #tpu.memory_space<vmem>>, vector<8x128xf32>,
    %c7_i32_113 = arith.constant 7 : i32
    %618 = vector.broadcast %c7_i32_113 : i32 to vector<8x1xi32>
    %619 = arith.cmpi sgt, %0, %618 : vector<8x1xi32>
    %620 = vector.extract_strided_slice %321 {offsets = [56, 0], sizes = [8, 512], strides = [1, 1]} : vector<64x512xf32> to vector<8x512xf32>
    %621 = arith.truncf %609 : vector<8x128xf32> to vector<8x128xbf16>
    %cst_114 = arith.constant dense<0.000000e+00> : vector<8x512xf32>
    %622 = tpu.matmul %621, %2, %cst_114 {dimension_numbers = #tpu.dot_dimension_numbers<[1], [0], [0], [1], [0, 0, 1, 1], [], []>} : vector<8x128xbf16>, vector<128x512xbf16>, vector<8x512xf32> -> vector<8x512xf32>
    %623 = arith.addf %620, %622 : vector<8x512xf32>
    %624 = vector.extract_strided_slice %623 {offsets = [0, 0], sizes = [8, 128], strides = [1, 1]} : vector<8x512xf32> to vector<8x128xf32>
    %625 = arith.negf %624 : vector<8x128xf32>
    %626 = math.exp %625 : vector<8x128xf32>
    %cst_115 = arith.constant 1.000000e+00 : f32
    %627 = vector.broadcast %cst_115 : f32 to vector<8x128xf32>
    %628 = arith.addf %627, %626 : vector<8x128xf32>
    %629 = arith.divf %627, %628 : vector<8x128xf32>
    %630 = vector.extract_strided_slice %623 {offsets = [0, 128], sizes = [8, 128], strides = [1, 1]} : vector<8x512xf32> to vector<8x128xf32>
    %631 = arith.negf %630 : vector<8x128xf32>
    %632 = math.exp %631 : vector<8x128xf32>
    %cst_116 = arith.constant 1.000000e+00 : f32
    %633 = vector.broadcast %cst_116 : f32 to vector<8x128xf32>
    %634 = arith.addf %633, %632 : vector<8x128xf32>
    %635 = arith.divf %633, %634 : vector<8x128xf32>
    %636 = vector.extract_strided_slice %623 {offsets = [0, 256], sizes = [8, 128], strides = [1, 1]} : vector<8x512xf32> to vector<8x128xf32>
    %637 = math.tanh %636 : vector<8x128xf32>
    %638 = vector.extract_strided_slice %623 {offsets = [0, 384], sizes = [8, 128], strides = [1, 1]} : vector<8x512xf32> to vector<8x128xf32>
    %639 = arith.negf %638 : vector<8x128xf32>
    %640 = math.exp %639 : vector<8x128xf32>
    %cst_117 = arith.constant 1.000000e+00 : f32
    %641 = vector.broadcast %cst_117 : f32 to vector<8x128xf32>
    %642 = arith.addf %641, %640 : vector<8x128xf32>
    %643 = arith.divf %641, %642 : vector<8x128xf32>
    %644 = arith.mulf %635, %612 : vector<8x128xf32>
    %645 = arith.mulf %629, %637 : vector<8x128xf32>
    %646 = arith.addf %644, %645 : vector<8x128xf32>
    %647 = math.tanh %646 : vector<8x128xf32>
    %648 = arith.mulf %643, %647 : vector<8x128xf32>
    %649 = vector.shape_cast %619 : vector<8x1xi1> to vector<8x1xi1>
    %650 = vector.broadcast %649 : vector<8x1xi1> to vector<8x128xi1>
    %651 = arith.select %650, %648, %609 : vector<8x128xi1>, vector<8x128xf32>
    %652 = vector.shape_cast %619 : vector<8x1xi1> to vector<8x1xi1>
    %653 = vector.broadcast %652 : vector<8x1xi1> to vector<8x128xi1>
    %654 = arith.select %653, %646, %612 : vector<8x128xi1>, vector<8x128xf32>
    %cst_118 = arith.constant 0.000000e+00 : f32
    %655 = vector.shape_cast %619 : vector<8x1xi1> to vector<8x1xi1>
    %656 = vector.broadcast %655 : vector<8x1xi1> to vector<8x128xi1>
    %657 = vector.broadcast %cst_118 : f32 to vector<8x128xf32>
    %658 = arith.select %656, %651, %657 : vector<8x128xi1>, vector<8x128xf32>
    %c0_119 = arith.constant 0 : index
    %c896 = arith.constant 896 : index
    %659 = vector.load %arg9[%c0_119, %c896] : memref<8x1024xf32, #tpu.memory_space<vmem>>, vector<8x128xf32>
    tpu.vector_store %arg9[%c0_119, %c896], %658 {strides = array<i32>} : memref<8x1024xf32, #tpu.memory_space<vmem>>, vector<8x128xf32>,
    %c0_120 = arith.constant 0 : index
    %c0_121 = arith.constant 0 : index
    %c0_122 = arith.constant 0 : index
    %660 = vector.load %arg10[%c0_120, %c0_121, %c0_122] : memref<2x8x128xf32, #tpu.memory_space<vmem>>, vector<1x8x128xf32>
    %661 = vector.shape_cast %660 : vector<1x8x128xf32> to vector<8x128xf32>
    %662 = vector.shape_cast %311 : vector<8x128xf32> to vector<1x8x128xf32>
    tpu.vector_store %arg10[%c0_120, %c0_121, %c0_122], %662 {strides = array<i32>} : memref<2x8x128xf32, #tpu.memory_space<vmem>>, vector<1x8x128xf32>,
    %c1 = arith.constant 1 : index
    %c0_123 = arith.constant 0 : index
    %c0_124 = arith.constant 0 : index
    %663 = vector.load %arg10[%c1, %c0_123, %c0_124] : memref<2x8x128xf32, #tpu.memory_space<vmem>>, vector<1x8x128xf32>
    %664 = vector.shape_cast %663 : vector<1x8x128xf32> to vector<8x128xf32>
    %665 = vector.shape_cast %651 : vector<8x128xf32> to vector<1x8x128xf32>
    tpu.vector_store %arg10[%c1, %c0_123, %c0_124], %665 {strides = array<i32>} : memref<2x8x128xf32, #tpu.memory_space<vmem>>, vector<1x8x128xf32>,
    %c0_125 = arith.constant 0 : index
    %c0_126 = arith.constant 0 : index
    %c0_127 = arith.constant 0 : index
    %666 = vector.load %arg11[%c0_125, %c0_126, %c0_127] : memref<2x8x128xf32, #tpu.memory_space<vmem>>, vector<1x8x128xf32>
    %667 = vector.shape_cast %666 : vector<1x8x128xf32> to vector<8x128xf32>
    %668 = vector.shape_cast %314 : vector<8x128xf32> to vector<1x8x128xf32>
    tpu.vector_store %arg11[%c0_125, %c0_126, %c0_127], %668 {strides = array<i32>} : memref<2x8x128xf32, #tpu.memory_space<vmem>>, vector<1x8x128xf32>,
    %c1_128 = arith.constant 1 : index
    %c0_129 = arith.constant 0 : index
    %c0_130 = arith.constant 0 : index
    %669 = vector.load %arg11[%c1_128, %c0_129, %c0_130] : memref<2x8x128xf32, #tpu.memory_space<vmem>>, vector<1x8x128xf32>
    %670 = vector.shape_cast %669 : vector<1x8x128xf32> to vector<8x128xf32>
    %671 = vector.shape_cast %654 : vector<8x128xf32> to vector<1x8x128xf32>
    tpu.vector_store %arg11[%c1_128, %c0_129, %c0_130], %671 {strides = array<i32>} : memref<2x8x128xf32, #tpu.memory_space<vmem>>, vector<1x8x128xf32>,
    return
  }
  func.func @transform_0(%arg0: i32) -> (i32, i32) {
    %c0_i32 = arith.constant 0 : i32
    %c0_i32_0 = arith.constant 0 : i32
    %c0_i32_1 = arith.constant 0 : i32
    return %c0_i32, %c0_i32_0 : i32, i32
  }
  func.func @transform_1(%arg0: i32) -> (i32, i32) {
    %c0_i32 = arith.constant 0 : i32
    %c0_i32_0 = arith.constant 0 : i32
    %c0_i32_1 = arith.constant 0 : i32
    return %c0_i32, %c0_i32_0 : i32, i32
  }
  func.func @transform_2(%arg0: i32) -> (i32, i32) {
    %c0_i32 = arith.constant 0 : i32
    %c0_i32_0 = arith.constant 0 : i32
    %c0_i32_1 = arith.constant 0 : i32
    return %c0_i32, %c0_i32_0 : i32, i32
  }
  func.func @transform_3(%arg0: i32) -> (i32, i32) {
    %c0_i32 = arith.constant 0 : i32
    %c0_i32_0 = arith.constant 0 : i32
    %c0_i32_1 = arith.constant 0 : i32
    return %c0_i32, %c0_i32_0 : i32, i32
  }
  func.func @transform_4(%arg0: i32) -> (i32, i32) {
    %c0_i32 = arith.constant 0 : i32
    %c0_i32_0 = arith.constant 0 : i32
    %c0_i32_1 = arith.constant 0 : i32
    return %c0_i32, %c0_i32_0 : i32, i32
  }
  func.func @transform_5(%arg0: i32) -> (i32, i32) {
    %c0_i32 = arith.constant 0 : i32
    %c0_i32_0 = arith.constant 0 : i32
    %c0_i32_1 = arith.constant 0 : i32
    return %c0_i32, %c0_i32_0 : i32, i32
  }
  func.func @transform_6(%arg0: i32) -> (i32, i32) {
    %c0_i32 = arith.constant 0 : i32
    %c0_i32_0 = arith.constant 0 : i32
    %c0_i32_1 = arith.constant 0 : i32
    return %c0_i32, %c0_i32_0 : i32, i32
  }
  func.func @transform_7(%arg0: i32) -> (i32, i32) {
    %c0_i32 = arith.constant 0 : i32
    %c0_i32_0 = arith.constant 0 : i32
    %c0_i32_1 = arith.constant 0 : i32
    return %c0_i32, %c0_i32_0 : i32, i32
  }
  func.func @transform_8(%arg0: i32) -> (i32, i32) {
    %c0_i32 = arith.constant 0 : i32
    %c0_i32_0 = arith.constant 0 : i32
    %c0_i32_1 = arith.constant 0 : i32
    return %c0_i32, %c0_i32_0 : i32, i32
  }
  func.func @transform_9(%arg0: i32) -> (i32, i32, i32) {
    %c0_i32 = arith.constant 0 : i32
    %c0_i32_0 = arith.constant 0 : i32
    %c0_i32_1 = arith.constant 0 : i32
    %c0_i32_2 = arith.constant 0 : i32
    return %c0_i32, %c0_i32_0, %c0_i32_1 : i32, i32, i32
  }
  func.func @transform_10(%arg0: i32) -> (i32, i32, i32) {
    %c0_i32 = arith.constant 0 : i32
    %c0_i32_0 = arith.constant 0 : i32
    %c0_i32_1 = arith.constant 0 : i32
    %c0_i32_2 = arith.constant 0 : i32
    return %c0_i32, %c0_i32_0, %c0_i32_1 : i32, i32, i32
  }
}

</mosaic_0001>

<llo_original>
// kernel: temporal_net_forward.1
$region0: #{temporal_net_forward.1}
  #allocation0 [shape = 'u32[]', space=smem, size = 0x4, offset = 0x4, fixed_abs, tag = 'smem constant byte address 0x4 - core index']
  #allocation1 [shape = 'u32[72,128]{1,0:T(1,128)}', space=vmem, size = 0x9000, scoped, tag = 'internal scratch']
  #allocation2 [shape = 'f32[64,128]{1,0:T(8,128)}', space=vmem, size = 0x8000, scoped, tag = 'scratch operand']
  %s0 = inlined_call_operand.vmem [shape: bf16[64,16], index: 0, kind: input, shape index: {}]
  %s1 = inlined_call_operand.vmem [shape: s32[8,1], index: 1, kind: input, shape index: {}]
  %s2 = inlined_call_operand.vmem [shape: bf16[16,512], index: 2, kind: input, shape index: {}]
  %s3 = inlined_call_operand.vmem [shape: bf16[128,512], index: 3, kind: input, shape index: {}]
  %s4 = inlined_call_operand.vmem [shape: f32[1,512], index: 4, kind: input, shape index: {}]
  %s5 = inlined_call_operand.vmem [shape: bf16[128,512], index: 5, kind: input, shape index: {}]
  %s6 = inlined_call_operand.vmem [shape: bf16[128,512], index: 6, kind: input, shape index: {}]
  %s7 = inlined_call_operand.vmem [shape: f32[1,512], index: 7, kind: input, shape index: {}]
  %s8 = inlined_call_operand.vmem [shape: f32[8,1024], index: 8, kind: output, shape index: {0}]
  %s9 = inlined_call_operand.vmem [shape: f32[2,8,128], index: 9, kind: output, shape index: {1}]
  %s10 = inlined_call_operand.vmem [shape: f32[2,8,128], index: 10, kind: output, shape index: {2}]
  %11 = xla_tuple %s8, %s9, %s10
  %s12 = sld [smem:[#allocation0]]
  $region58: #{temporal_net_forward.1} parent=0
    _
  %s14 = ssub.s32 1, %s12
  %s15 = scalar_select 0, %s14, %s12
  // Predicated region
  $region2: #{temporal_net_forward.1} parent=0 // pred_check
    _
  $region3: #{temporal_net_forward.1} parent=0 // pred_check_branch
    %17 = sbr.rel (0) target = $region5
  $region4: #{temporal_net_forward.1} parent=0 // pred_region
    _
  $region5: #{temporal_net_forward.1} parent=0 // pred_fallthru
    _
  // Predicated region
  $region6: #{temporal_net_forward.1} parent=0 // pred_check
    _
  $region7: #{temporal_net_forward.1} parent=0 // pred_check_branch
    %19 = sbr.rel (0) target = $region9
  $region8: #{temporal_net_forward.1} parent=0 // pred_region
    _
  $region9: #{temporal_net_forward.1} parent=0 // pred_fallthru
    _
  // Predicated region
  $region10: #{temporal_net_forward.1} parent=0 // pred_check
    _
  $region11: #{temporal_net_forward.1} parent=0 // pred_check_branch
    %21 = sbr.rel (0) target = $region13
  $region12: #{temporal_net_forward.1} parent=0 // pred_region
    _
  $region13: #{temporal_net_forward.1} parent=0 // pred_fallthru
    _
  // Predicated region
  $region14: #{temporal_net_forward.1} parent=0 // pred_check
    _
  $region15: #{temporal_net_forward.1} parent=0 // pred_check_branch
    %23 = sbr.rel (0) target = $region17
  $region16: #{temporal_net_forward.1} parent=0 // pred_region
    _
  $region17: #{temporal_net_forward.1} parent=0 // pred_fallthru
    _
  // Predicated region
  $region18: #{temporal_net_forward.1} parent=0 // pred_check
    _
  $region19: #{temporal_net_forward.1} parent=0 // pred_check_branch
    %25 = sbr.rel (0) target = $region21
  $region20: #{temporal_net_forward.1} parent=0 // pred_region
    _
  $region21: #{temporal_net_forward.1} parent=0 // pred_fallthru
    _
  // Predicated region
  $region22: #{temporal_net_forward.1} parent=0 // pred_check
    _
  $region23: #{temporal_net_forward.1} parent=0 // pred_check_branch
    %27 = sbr.rel (0) target = $region25
  $region24: #{temporal_net_forward.1} parent=0 // pred_region
    _
  $region25: #{temporal_net_forward.1} parent=0 // pred_fallthru
    _
  // Predicated region
  $region26: #{temporal_net_forward.1} parent=0 // pred_check
    _
  $region27: #{temporal_net_forward.1} parent=0 // pred_check_branch
    %29 = sbr.rel (0) target = $region29
  $region28: #{temporal_net_forward.1} parent=0 // pred_region
    _
  $region29: #{temporal_net_forward.1} parent=0 // pred_fallthru
    _
  // Predicated region
  $region30: #{temporal_net_forward.1} parent=0 // pred_check
    _
  $region31: #{temporal_net_forward.1} parent=0 // pred_check_branch
    %31 = sbr.rel (0) target = $region33
  $region32: #{temporal_net_forward.1} parent=0 // pred_region
    _
  $region33: #{temporal_net_forward.1} parent=0 // pred_fallthru
    _
  %v33 = vld [vmem:[%s1] sm:$0xff]
  %v34 = vld [vmem:[%s3] sm:$0xff]
  %v35 = vld [vmem:[%s3 + $0x8] sm:$0xff]
  %v36 = vld [vmem:[%s3 + $0x10] sm:$0xff]
  %v37 = vld [vmem:[%s3 + $0x18] sm:$0xff]
  %v38 = vld [vmem:[%s3 + $0x20] sm:$0xff]
  %v39 = vld [vmem:[%s3 + $0x28] sm:$0xff]
  %v40 = vld [vmem:[%s3 + $0x30] sm:$0xff]
  %v41 = vld [vmem:[%s3 + $0x38] sm:$0xff]
  %v42 = vld [vmem:[%s3 + $0x40] sm:$0xff]
  %v43 = vld [vmem:[%s3 + $0x48] sm:$0xff]
  %v44 = vld [vmem:[%s3 + $0x50] sm:$0xff]
  %v45 = vld [vmem:[%s3 + $0x58] sm:$0xff]
  %v46 = vld [vmem:[%s3 + $0x60] sm:$0xff]
  %v47 = vld [vmem:[%s3 + $0x68] sm:$0xff]
  %v48 = vld [vmem:[%s3 + $0x70] sm:$0xff]
  %v49 = vld [vmem:[%s3 + $0x78] sm:$0xff]
  %v50 = vld [vmem:[%s3 + $0x80] sm:$0xff]
  %v51 = vld [vmem:[%s3 + $0x88] sm:$0xff]
  %v52 = vld [vmem:[%s3 + $0x90] sm:$0xff]
  %v53 = vld [vmem:[%s3 + $0x98] sm:$0xff]
  %v54 = vld [vmem:[%s3 + $0xa0] sm:$0xff]
  %v55 = vld [vmem:[%s3 + $0xa8] sm:$0xff]
  %v56 = vld [vmem:[%s3 + $0xb0] sm:$0xff]
  %v57 = vld [vmem:[%s3 + $0xb8] sm:$0xff]
  %v58 = vld [vmem:[%s3 + $0xc0] sm:$0xff]
  %v59 = vld [vmem:[%s3 + $0xc8] sm:$0xff]
  %v60 = vld [vmem:[%s3 + $0xd0] sm:$0xff]
  %v61 = vld [vmem:[%s3 + $0xd8] sm:$0xff]
  %v62 = vld [vmem:[%s3 + $0xe0] sm:$0xff]
  %v63 = vld [vmem:[%s3 + $0xe8] sm:$0xff]
  %v64 = vld [vmem:[%s3 + $0xf0] sm:$0xff]
  %v65 = vld [vmem:[%s3 + $0xf8] sm:$0xff]
  %v66 = vld [vmem:[%s6] sm:$0xff]
  %v67 = vld [vmem:[%s6 + $0x8] sm:$0xff]
  %v68 = vld [vmem:[%s6 + $0x10] sm:$0xff]
  %v69 = vld [vmem:[%s6 + $0x18] sm:$0xff]
  %v70 = vld [vmem:[%s6 + $0x20] sm:$0xff]
  %v71 = vld [vmem:[%s6 + $0x28] sm:$0xff]
  %v72 = vld [vmem:[%s6 + $0x30] sm:$0xff]
  %v73 = vld [vmem:[%s6 + $0x38] sm:$0xff]
  %v74 = vld [vmem:[%s6 + $0x40] sm:$0xff]
  %v75 = vld [vmem:[%s6 + $0x48] sm:$0xff]
  %v76 = vld [vmem:[%s6 + $0x50] sm:$0xff]
  %v77 = vld [vmem:[%s6 + $0x58] sm:$0xff]
  %v78 = vld [vmem:[%s6 + $0x60] sm:$0xff]
  %v79 = vld [vmem:[%s6 + $0x68] sm:$0xff]
  %v80 = vld [vmem:[%s6 + $0x70] sm:$0xff]
  %v81 = vld [vmem:[%s6 + $0x78] sm:$0xff]
  %v82 = vld [vmem:[%s6 + $0x80] sm:$0xff]
  %v83 = vld [vmem:[%s6 + $0x88] sm:$0xff]
  %v84 = vld [vmem:[%s6 + $0x90] sm:$0xff]
  %v85 = vld [vmem:[%s6 + $0x98] sm:$0xff]
  %v86 = vld [vmem:[%s6 + $0xa0] sm:$0xff]
  %v87 = vld [vmem:[%s6 + $0xa8] sm:$0xff]
  %v88 = vld [vmem:[%s6 + $0xb0] sm:$0xff]
  %v89 = vld [vmem:[%s6 + $0xb8] sm:$0xff]
  %v90 = vld [vmem:[%s6 + $0xc0] sm:$0xff]
  %v91 = vld [vmem:[%s6 + $0xc8] sm:$0xff]
  %v92 = vld [vmem:[%s6 + $0xd0] sm:$0xff]
  %v93 = vld [vmem:[%s6 + $0xd8] sm:$0xff]
  %v94 = vld [vmem:[%s6 + $0xe0] sm:$0xff]
  %v95 = vld [vmem:[%s6 + $0xe8] sm:$0xff]
  %v96 = vld [vmem:[%s6 + $0xf0] sm:$0xff]
  %v97 = vld [vmem:[%s6 + $0xf8] sm:$0xff]
  %v98 = vld [vmem:[%s7] sm:$0xf]
  %v99 = vld [vmem:[%s0] sm:$0xf]
  %v100 = vld [vmem:[%s0 + $0x4] sm:$0xf]
  %v101 = vld [vmem:[%s0 + $0x8] sm:$0xf]
  %v102 = vld [vmem:[%s0 + $0xc] sm:$0xf]
  %v103 = vld [vmem:[%s0 + $0x10] sm:$0xf]
  %v104 = vld [vmem:[%s0 + $0x14] sm:$0xf]
  %v105 = vld [vmem:[%s0 + $0x18] sm:$0xf]
  %v106 = vld [vmem:[%s0 + $0x1c] sm:$0xf]
  %v107 = vld [vmem:[%s2] sm:$0xff]
  %v108 = vld [vmem:[%s2 + $0x8] sm:$0xff]
  %v109 = vld [vmem:[%s2 + $0x10] sm:$0xff]
  %v110 = vld [vmem:[%s2 + $0x18] sm:$0xff]
  %v111 = vld [vmem:[%s4] sm:$0xf]
  %v113 = vperm.slane %v111, 0
  %v114 = vperm.slane %v111, 1
  %v115 = vperm.slane %v111, 2
  %v116 = vperm.slane %v111, 3
  %v129 = vunpack.c.l.b16 %v99
  %v130 = vunpack.c.l.b16 %v100
  %v131 = vunpack.c.l.b16 %v101
  %v132 = vunpack.c.l.b16 %v102
  %v133 = vunpack.c.l.b16 %v103
  %v134 = vunpack.c.l.b16 %v104
  %v135 = vunpack.c.l.b16 %v105
  %v136 = vunpack.c.l.b16 %v106
  %v137 = vpack.c.b16 %v130, %v129
  %v138 = vpack.c.b16 %v132, %v131
  %v139 = vpack.c.b16 %v134, %v133
  %v140 = vpack.c.b16 %v136, %v135
  %v145 = vunpack.c.l.b16 %v107
  %v146 = vunpack.c.h.b16 %v107
  %v147 = vunpack.c.l.b16 %v108
  %v148 = vunpack.c.h.b16 %v108
  %v149 = vunpack.c.l.b16 %v109
  %v150 = vunpack.c.h.b16 %v109
  %v151 = vunpack.c.l.b16 %v110
  %v152 = vunpack.c.h.b16 %v110
  %v153 = vpack.c.b16 %v149, %v145
  %v154 = vpack.c.b16 %v150, %v146
  %v155 = vpack.c.b16 %v151, %v147
  %v156 = vpack.c.b16 %v152, %v148
  %vm161 = vcmask 130048
  %v163 = vsel %vm161, %v137, 0
  %v166 = vsel %vm161, %v138, 0
  %v169 = vsel %vm161, %v139, 0
  %v172 = vsel %vm161, %v140, 0
  %174 = vmatpush.bf16.msra.mxu0 0
  %175 = vmatpush.bf16.msra.mxu0 0
  %176 = vmatpush.bf16.msra.mxu0 0
  %177 = vmatpush.bf16.msra.mxu0 0
  %178 = vmatpush.bf16.msra.mxu0 0
  %179 = vmatpush.bf16.msra.mxu0 0
  %180 = vmatpush.bf16.msra.mxu0 0
  %181 = vmatpush.bf16.msra.mxu0 %v153
  %182 = vmatmul.bf16.gmra.mxu0 %v163
  %v183 = vpop.f32.mrf.mxu0
  %v184 = vadd.f32 %v113, %v183
  %v185 = vpop.f32.mrf.mxu0
  %v186 = vadd.f32 %v113, %v185
  %187 = vmatmul.bf16.gmra.mxu0 %v166
  %v188 = vpop.f32.mrf.mxu0
  %v189 = vadd.f32 %v113, %v188
  %v190 = vpop.f32.mrf.mxu0
  %v191 = vadd.f32 %v113, %v190
  %192 = vmatmul.bf16.gmra.mxu0 %v169
  %v193 = vpop.f32.mrf.mxu0
  %v194 = vadd.f32 %v113, %v193
  %v195 = vpop.f32.mrf.mxu0
  %v196 = vadd.f32 %v113, %v195
  %197 = vmatmul.bf16.gmra.mxu0 %v172
  %v198 = vpop.f32.mrf.mxu0
  %v199 = vadd.f32 %v113, %v198
  %v200 = vpop.f32.mrf.mxu0
  %v201 = vadd.f32 %v113, %v200
  %202 = vdwg.mxu0
  %203 = vmatpush.bf16.msra.mxu0 0
  %204 = vmatpush.bf16.msra.mxu0 0
  %205 = vmatpush.bf16.msra.mxu0 0
  %206 = vmatpush.bf16.msra.mxu0 0
  %207 = vmatpush.bf16.msra.mxu0 0
  %208 = vmatpush.bf16.msra.mxu0 0
  %209 = vmatpush.bf16.msra.mxu0 0
  %210 = vmatpush.bf16.msra.mxu0 %v154
  %211 = vmatmul.bf16.gmra.mxu0 %v163
  %v212 = vpop.f32.mrf.mxu0
  %v213 = vadd.f32 %v114, %v212
  %v214 = vpop.f32.mrf.mxu0
  %v215 = vadd.f32 %v114, %v214
  %216 = vmatmul.bf16.gmra.mxu0 %v166
  %v217 = vpop.f32.mrf.mxu0
  %v218 = vadd.f32 %v114, %v217
  %v219 = vpop.f32.mrf.mxu0
  %v220 = vadd.f32 %v114, %v219
  %221 = vmatmul.bf16.gmra.mxu0 %v169
  %v222 = vpop.f32.mrf.mxu0
  %v223 = vadd.f32 %v114, %v222
  %v224 = vpop.f32.mrf.mxu0
  %v225 = vadd.f32 %v114, %v224
  %226 = vmatmul.bf16.gmra.mxu0 %v172
  %v227 = vpop.f32.mrf.mxu0
  %v228 = vadd.f32 %v114, %v227
  %v229 = vpop.f32.mrf.mxu0
  %v230 = vadd.f32 %v114, %v229
  %231 = vdwg.mxu0
  %232 = vmatpush.bf16.msra.mxu0 0
  %233 = vmatpush.bf16.msra.mxu0 0
  %234 = vmatpush.bf16.msra.mxu0 0
  %235 = vmatpush.bf16.msra.mxu0 0
  %236 = vmatpush.bf16.msra.mxu0 0
  %237 = vmatpush.bf16.msra.mxu0 0
  %238 = vmatpush.bf16.msra.mxu0 0
  %239 = vmatpush.bf16.msra.mxu0 %v155
  %240 = vmatmul.bf16.gmra.mxu0 %v163
  %v241 = vpop.f32.mrf.mxu0
  %v242 = vadd.f32 %v115, %v241
  %v243 = vpop.f32.mrf.mxu0
  %v244 = vadd.f32 %v115, %v243
  %245 = vmatmul.bf16.gmra.mxu0 %v166
  %v246 = vpop.f32.mrf.mxu0
  %v247 = vadd.f32 %v115, %v246
  %v248 = vpop.f32.mrf.mxu0
  %v249 = vadd.f32 %v115, %v248
  %250 = vmatmul.bf16.gmra.mxu0 %v169
  %v251 = vpop.f32.mrf.mxu0
  %v252 = vadd.f32 %v115, %v251
  %v253 = vpop.f32.mrf.mxu0
  %v254 = vadd.f32 %v115, %v253
  %255 = vmatmul.bf16.gmra.mxu0 %v172
  %v256 = vpop.f32.mrf.mxu0
  %v257 = vadd.f32 %v115, %v256
  %v258 = vpop.f32.mrf.mxu0
  %v259 = vadd.f32 %v115, %v258
  %260 = vdwg.mxu0
  %261 = vmatpush.bf16.msra.mxu0 0
  %262 = vmatpush.bf16.msra.mxu0 0
  %263 = vmatpush.bf16.msra.mxu0 0
  %264 = vmatpush.bf16.msra.mxu0 0
  %265 = vmatpush.bf16.msra.mxu0 0
  %266 = vmatpush.bf16.msra.mxu0 0
  %267 = vmatpush.bf16.msra.mxu0 0
  %268 = vmatpush.bf16.msra.mxu0 %v156
  %269 = vmatmul.bf16.gmra.mxu0 %v163
  %v270 = vpop.f32.mrf.mxu0
  %v271 = vadd.f32 %v116, %v270
  %v272 = vpop.f32.mrf.mxu0
  %v273 = vadd.f32 %v116, %v272
  %274 = vmatmul.bf16.gmra.mxu0 %v166
  %v275 = vpop.f32.mrf.mxu0
  %v276 = vadd.f32 %v116, %v275
  %v277 = vpop.f32.mrf.mxu0
  %v278 = vadd.f32 %v116, %v277
  %279 = vmatmul.bf16.gmra.mxu0 %v169
  %v280 = vpop.f32.mrf.mxu0
  %v281 = vadd.f32 %v116, %v280
  %v282 = vpop.f32.mrf.mxu0
  %v283 = vadd.f32 %v116, %v282
  %284 = vmatmul.bf16.gmra.mxu0 %v172
  %v285 = vpop.f32.mrf.mxu0
  %v286 = vadd.f32 %v116, %v285
  %v287 = vpop.f32.mrf.mxu0
  %v288 = vadd.f32 %v116, %v287
  %289 = vdwg.mxu0
  %vm290 = vcmp.gt.s32.totalorder %v33, 0
  %v323 = vunpack.c.l.b16 %v34
  %v324 = vunpack.c.h.b16 %v34
  %v325 = vunpack.c.l.b16 %v35
  %v326 = vunpack.c.h.b16 %v35
  %v327 = vunpack.c.l.b16 %v36
  %v328 = vunpack.c.h.b16 %v36
  %v329 = vunpack.c.l.b16 %v37
  %v330 = vunpack.c.h.b16 %v37
  %v331 = vunpack.c.l.b16 %v38
  %v332 = vunpack.c.h.b16 %v38
  %v333 = vunpack.c.l.b16 %v39
  %v334 = vunpack.c.h.b16 %v39
  %v335 = vunpack.c.l.b16 %v40
  %v336 = vunpack.c.h.b16 %v40
  %v337 = vunpack.c.l.b16 %v41
  %v338 = vunpack.c.h.b16 %v41
  %v339 = vunpack.c.l.b16 %v42
  %v340 = vunpack.c.h.b16 %v42
  %v341 = vunpack.c.l.b16 %v43
  %v342 = vunpack.c.h.b16 %v43
  %v343 = vunpack.c.l.b16 %v44
  %v344 = vunpack.c.h.b16 %v44
  %v345 = vunpack.c.l.b16 %v45
  %v346 = vunpack.c.h.b16 %v45
  %v347 = vunpack.c.l.b16 %v46
  %v348 = vunpack.c.h.b16 %v46
  %v349 = vunpack.c.l.b16 %v47
  %v350 = vunpack.c.h.b16 %v47
  %v351 = vunpack.c.l.b16 %v48
  %v352 = vunpack.c.h.b16 %v48
  %v353 = vunpack.c.l.b16 %v49
  %v354 = vunpack.c.h.b16 %v49
  %v355 = vunpack.c.l.b16 %v50
  %v356 = vunpack.c.h.b16 %v50
  %v357 = vunpack.c.l.b16 %v51
  %v358 = vunpack.c.h.b16 %v51
  %v359 = vunpack.c.l.b16 %v52
  %v360 = vunpack.c.h.b16 %v52
  %v361 = vunpack.c.l.b16 %v53
  %v362 = vunpack.c.h.b16 %v53
  %v363 = vunpack.c.l.b16 %v54
  %v364 = vunpack.c.h.b16 %v54
  %v365 = vunpack.c.l.b16 %v55
  %v366 = vunpack.c.h.b16 %v55
  %v367 = vunpack.c.l.b16 %v56
  %v368 = vunpack.c.h.b16 %v56
  %v369 = vunpack.c.l.b16 %v57
  %v370 = vunpack.c.h.b16 %v57
  %v371 = vunpack.c.l.b16 %v58
  %v372 = vunpack.c.h.b16 %v58
  %v373 = vunpack.c.l.b16 %v59
  %v374 = vunpack.c.h.b16 %v59
  %v375 = vunpack.c.l.b16 %v60
  %v376 = vunpack.c.h.b16 %v60
  %v377 = vunpack.c.l.b16 %v61
  %v378 = vunpack.c.h.b16 %v61
  %v379 = vunpack.c.l.b16 %v62
  %v380 = vunpack.c.h.b16 %v62
  %v381 = vunpack.c.l.b16 %v63
  %v382 = vunpack.c.h.b16 %v63
  %v383 = vunpack.c.l.b16 %v64
  %v384 = vunpack.c.h.b16 %v64
  %v385 = vunpack.c.l.b16 %v65
  %v386 = vunpack.c.h.b16 %v65
  %v387 = vpack.c.b16 %v327, %v323
  %v388 = vpack.c.b16 %v328, %v324
  %v389 = vpack.c.b16 %v329, %v325
  %v390 = vpack.c.b16 %v330, %v326
  %v391 = vpack.c.b16 %v335, %v331
  %v392 = vpack.c.b16 %v336, %v332
  %v393 = vpack.c.b16 %v337, %v333
  %v394 = vpack.c.b16 %v338, %v334
  %v395 = vpack.c.b16 %v343, %v339
  %v396 = vpack.c.b16 %v344, %v340
  %v397 = vpack.c.b16 %v345, %v341
  %v398 = vpack.c.b16 %v346, %v342
  %v399 = vpack.c.b16 %v351, %v347
  %v400 = vpack.c.b16 %v352, %v348
  %v401 = vpack.c.b16 %v353, %v349
  %v402 = vpack.c.b16 %v354, %v350
  %v403 = vpack.c.b16 %v359, %v355
  %v404 = vpack.c.b16 %v360, %v356
  %v405 = vpack.c.b16 %v361, %v357
  %v406 = vpack.c.b16 %v362, %v358
  %v407 = vpack.c.b16 %v367, %v363
  %v408 = vpack.c.b16 %v368, %v364
  %v409 = vpack.c.b16 %v369, %v365
  %v410 = vpack.c.b16 %v370, %v366
  %v411 = vpack.c.b16 %v375, %v371
  %v412 = vpack.c.b16 %v376, %v372
  %v413 = vpack.c.b16 %v377, %v373
  %v414 = vpack.c.b16 %v378, %v374
  %v415 = vpack.c.b16 %v383, %v379
  %v416 = vpack.c.b16 %v384, %v380
  %v417 = vpack.c.b16 %v385, %v381
  %v418 = vpack.c.b16 %v386, %v382
  %451 = vmatpush.bf16.msra.mxu0 %v415
  %452 = vmatpush.bf16.msra.mxu0 %v411
  %453 = vmatpush.bf16.msra.mxu0 %v407
  %454 = vmatpush.bf16.msra.mxu0 %v403
  %455 = vmatpush.bf16.msra.mxu0 %v399
  %456 = vmatpush.bf16.msra.mxu0 %v395
  %457 = vmatpush.bf16.msra.mxu0 %v391
  %458 = vmatpush.bf16.msra.mxu0 %v387
  %459 = vmatmul.bf16.gmra.mxu0 0
  %v460 = vpop.f32.mrf.mxu0
  %v461 = vadd.f32 0.0, %v460
  %v462 = vpop.f32.mrf.mxu0
  %463 = vdwg.mxu0
  %464 = vmatpush.bf16.msra.mxu0 %v416
  %465 = vmatpush.bf16.msra.mxu0 %v412
  %466 = vmatpush.bf16.msra.mxu0 %v408
  %467 = vmatpush.bf16.msra.mxu0 %v404
  %468 = vmatpush.bf16.msra.mxu0 %v400
  %469 = vmatpush.bf16.msra.mxu0 %v396
  %470 = vmatpush.bf16.msra.mxu0 %v392
  %471 = vmatpush.bf16.msra.mxu0 %v388
  %472 = vmatmul.bf16.gmra.mxu0 0
  %v473 = vpop.f32.mrf.mxu0
  %v474 = vadd.f32 0.0, %v473
  %v475 = vpop.f32.mrf.mxu0
  %476 = vdwg.mxu0
  %477 = vmatpush.bf16.msra.mxu0 %v417
  %478 = vmatpush.bf16.msra.mxu0 %v413
  %479 = vmatpush.bf16.msra.mxu0 %v409
  %480 = vmatpush.bf16.msra.mxu0 %v405
  %481 = vmatpush.bf16.msra.mxu0 %v401
  %482 = vmatpush.bf16.msra.mxu0 %v397
  %483 = vmatpush.bf16.msra.mxu0 %v393
  %484 = vmatpush.bf16.msra.mxu0 %v389
  %485 = vmatmul.bf16.gmra.mxu0 0
  %v486 = vpop.f32.mrf.mxu0
  %v487 = vadd.f32 0.0, %v486
  %v488 = vpop.f32.mrf.mxu0
  %489 = vdwg.mxu0
  %490 = vmatpush.bf16.msra.mxu0 %v418
  %491 = vmatpush.bf16.msra.mxu0 %v414
  %492 = vmatpush.bf16.msra.mxu0 %v410
  %493 = vmatpush.bf16.msra.mxu0 %v406
  %494 = vmatpush.bf16.msra.mxu0 %v402
  %495 = vmatpush.bf16.msra.mxu0 %v398
  %496 = vmatpush.bf16.msra.mxu0 %v394
  %497 = vmatpush.bf16.msra.mxu0 %v390
  %498 = vmatmul.bf16.gmra.mxu0 0
  %v499 = vpop.f32.mrf.mxu0
  %v500 = vadd.f32 0.0, %v499
  %v501 = vpop.f32.mrf.mxu0
  %502 = vdwg.mxu0
  %v503 = vadd.f32 %v184, %v461
  %v504 = vadd.f32 %v213, %v474
  %v505 = vadd.f32 %v242, %v487
  %v506 = vadd.f32 %v271, %v500
  %v507 = vxor.u32 %v503, 2147483648
  %v508 = vmul.f32 %v507, 1.442695
  %v509 = vpow.pop %v508
  %v510 = vadd.f32 %v509, 1.0
  %v511 = vrcp.pop %v510
  %v512 = vmul.f32 %v510, %v511
  %v513 = vsub.f32 1.0, %v512
  %v514 = vmul.f32 %v511, %v513
  %v515 = vadd.f32 %v511, %v514
  %vm516 = vweird.f32 %v510
  %vm517 = vweird.f32 %v511
  %vm518 = vmor %vm516, %vm517
  %v519 = vsel %vm518, %v511, %v515
  %v520 = vand.u32 2147483647, %v510
  %vm521 = vcmp.eq.f32.partialorder %v520, 8.507059e+37
  %v522 = vand.u32 %v510, 2147483648
  %v523 = vor.u32 1.1754944e-38, %v522
  %v524 = vsel %vm521, %v523, %v519
  %v525 = vmul.f32 1.0, %v524
  %v526 = vxor.u32 %v504, 2147483648
  %v527 = vmul.f32 %v526, 1.442695
  %v528 = vpow.pop %v527
  %v529 = vadd.f32 %v528, 1.0
  %v530 = vrcp.pop %v529
  %v531 = vmul.f32 %v529, %v530
  %v532 = vsub.f32 1.0, %v531
  %v533 = vmul.f32 %v530, %v532
  %v534 = vadd.f32 %v530, %v533
  %vm535 = vweird.f32 %v529
  %vm536 = vweird.f32 %v530
  %vm537 = vmor %vm535, %vm536
  %v538 = vsel %vm537, %v530, %v534
  %v539 = vand.u32 2147483647, %v529
  %vm540 = vcmp.eq.f32.partialorder %v539, 8.507059e+37
  %v541 = vand.u32 %v529, 2147483648
  %v542 = vor.u32 1.1754944e-38, %v541
  %v543 = vsel %vm540, %v542, %v538
  %v544 = vmul.f32 1.0, %v543
  %v545 = vtanh.pop %v505
  %v546 = vxor.u32 %v506, 2147483648
  %v547 = vmul.f32 %v546, 1.442695
  %v548 = vpow.pop %v547
  %v549 = vadd.f32 %v548, 1.0
  %v550 = vrcp.pop %v549
  %v551 = vmul.f32 %v549, %v550
  %v552 = vsub.f32 1.0, %v551
  %v553 = vmul.f32 %v550, %v552
  %v554 = vadd.f32 %v550, %v553
  %vm555 = vweird.f32 %v549
  %vm556 = vweird.f32 %v550
  %vm557 = vmor %vm555, %vm556
  %v558 = vsel %vm557, %v550, %v554
  %v559 = vand.u32 2147483647, %v549
  %vm560 = vcmp.eq.f32.partialorder %v559, 8.507059e+37
  %v561 = vand.u32 %v549, 2147483648
  %v562 = vor.u32 1.1754944e-38, %v561
  %v563 = vsel %vm560, %v562, %v558
  %v564 = vmul.f32 1.0, %v563
  %v565 = vmul.f32 %v544, 0.0
  %v566 = vmul.f32 %v525, %v545
  %v567 = vadd.f32 %v565, %v566
  %v568 = vtanh.pop %v567
  %v569 = vmul.f32 %v564, %v568
  %v570 = vsel %vm290, 1, 0
  %571 = vset.pattern.permute.xlu0 0
  %572 = vperm.xlu0 %571, %v570
  %v573 = vpop.permute.xlu0 %572
  %vm574 = vcmp.eq.s32.totalorder %v573, 1
  %v575 = vsel %vm574, %v569, 0.0
  %v576 = vsel %vm574, %v567, 0.0
  %577 = vst [vmem:[#allocation2] sm:$0xff] %v575
  %vm578 = vcmp.gt.s32.totalorder %v33, 1
  %v579 = vpack.c.bf16 %v575, %v575
  %580 = vmatpush.bf16.msra.mxu0 %v415
  %581 = vmatpush.bf16.msra.mxu0 %v411
  %582 = vmatpush.bf16.msra.mxu0 %v407
  %583 = vmatpush.bf16.msra.mxu0 %v403
  %584 = vmatpush.bf16.msra.mxu0 %v399
  %585 = vmatpush.bf16.msra.mxu0 %v395
  %586 = vmatpush.bf16.msra.mxu0 %v391
  %587 = vmatpush.bf16.msra.mxu0 %v387
  %588 = vmatmul.bf16.gmra.mxu0 %v579
  %v589 = vpop.f32.mrf.mxu0
  %v590 = vadd.f32 0.0, %v589
  %v591 = vpop.f32.mrf.mxu0
  %592 = vdwg.mxu0
  %593 = vmatpush.bf16.msra.mxu0 %v416
  %594 = vmatpush.bf16.msra.mxu0 %v412
  %595 = vmatpush.bf16.msra.mxu0 %v408
  %596 = vmatpush.bf16.msra.mxu0 %v404
  %597 = vmatpush.bf16.msra.mxu0 %v400
  %598 = vmatpush.bf16.msra.mxu0 %v396
  %599 = vmatpush.bf16.msra.mxu0 %v392
  %600 = vmatpush.bf16.msra.mxu0 %v388
  %601 = vmatmul.bf16.gmra.mxu0 %v579
  %v602 = vpop.f32.mrf.mxu0
  %v603 = vadd.f32 0.0, %v602
  %v604 = vpop.f32.mrf.mxu0
  %605 = vdwg.mxu0
  %606 = vmatpush.bf16.msra.mxu0 %v417
  %607 = vmatpush.bf16.msra.mxu0 %v413
  %608 = vmatpush.bf16.msra.mxu0 %v409
  %609 = vmatpush.bf16.msra.mxu0 %v405
  %610 = vmatpush.bf16.msra.mxu0 %v401
  %611 = vmatpush.bf16.msra.mxu0 %v397
  %612 = vmatpush.bf16.msra.mxu0 %v393
  %613 = vmatpush.bf16.msra.mxu0 %v389
  %614 = vmatmul.bf16.gmra.mxu0 %v579
  %v615 = vpop.f32.mrf.mxu0
  %v616 = vadd.f32 0.0, %v615
  %v617 = vpop.f32.mrf.mxu0
  %618 = vdwg.mxu0
  %619 = vmatpush.bf16.msra.mxu0 %v418
  %620 = vmatpush.bf16.msra.mxu0 %v414
  %621 = vmatpush.bf16.msra.mxu0 %v410
  %622 = vmatpush.bf16.msra.mxu0 %v406
  %623 = vmatpush.bf16.msra.mxu0 %v402
  %624 = vmatpush.bf16.msra.mxu0 %v398
  %625 = vmatpush.bf16.msra.mxu0 %v394
  %626 = vmatpush.bf16.msra.mxu0 %v390
  %627 = vmatmul.bf16.gmra.mxu0 %v579
  %v628 = vpop.f32.mrf.mxu0
  %v629 = vadd.f32 0.0, %v628
  %v630 = vpop.f32.mrf.mxu0
  %631 = vdwg.mxu0
  %v632 = vadd.f32 %v186, %v590
  %v633 = vadd.f32 %v215, %v603
  %v634 = vadd.f32 %v244, %v616
  %v635 = vadd.f32 %v273, %v629
  %v636 = vxor.u32 %v632, 2147483648
  %v637 = vmul.f32 %v636, 1.442695
  %v638 = vpow.pop %v637
  %v639 = vadd.f32 %v638, 1.0
  %v640 = vrcp.pop %v639
  %v641 = vmul.f32 %v639, %v640
  %v642 = vsub.f32 1.0, %v641
  %v643 = vmul.f32 %v640, %v642
  %v644 = vadd.f32 %v640, %v643
  %vm645 = vweird.f32 %v639
  %vm646 = vweird.f32 %v640
  %vm647 = vmor %vm645, %vm646
  %v648 = vsel %vm647, %v640, %v644
  %v649 = vand.u32 2147483647, %v639
  %vm650 = vcmp.eq.f32.partialorder %v649, 8.507059e+37
  %v651 = vand.u32 %v639, 2147483648
  %v652 = vor.u32 1.1754944e-38, %v651
  %v653 = vsel %vm650, %v652, %v648
  %v654 = vmul.f32 1.0, %v653
  %v655 = vxor.u32 %v633, 2147483648
  %v656 = vmul.f32 %v655, 1.442695
  %v657 = vpow.pop %v656
  %v658 = vadd.f32 %v657, 1.0
  %v659 = vrcp.pop %v658
  %v660 = vmul.f32 %v658, %v659
  %v661 = vsub.f32 1.0, %v660
  %v662 = vmul.f32 %v659, %v661
  %v663 = vadd.f32 %v659, %v662
  %vm664 = vweird.f32 %v658
  %vm665 = vweird.f32 %v659
  %vm666 = vmor %vm664, %vm665
  %v667 = vsel %vm666, %v659, %v663
  %v668 = vand.u32 2147483647, %v658
  %vm669 = vcmp.eq.f32.partialorder %v668, 8.507059e+37
  %v670 = vand.u32 %v658, 2147483648
  %v671 = vor.u32 1.1754944e-38, %v670
  %v672 = vsel %vm669, %v671, %v667
  %v673 = vmul.f32 1.0, %v672
  %v674 = vtanh.pop %v634
  %v675 = vxor.u32 %v635, 2147483648
  %v676 = vmul.f32 %v675, 1.442695
  %v677 = vpow.pop %v676
  %v678 = vadd.f32 %v677, 1.0
  %v679 = vrcp.pop %v678
  %v680 = vmul.f32 %v678, %v679
  %v681 = vsub.f32 1.0, %v680
  %v682 = vmul.f32 %v679, %v681
  %v683 = vadd.f32 %v679, %v682
  %vm684 = vweird.f32 %v678
  %vm685 = vweird.f32 %v679
  %vm686 = vmor %vm684, %vm685
  %v687 = vsel %vm686, %v679, %v683
  %v688 = vand.u32 2147483647, %v678
  %vm689 = vcmp.eq.f32.partialorder %v688, 8.507059e+37
  %v690 = vand.u32 %v678, 2147483648
  %v691 = vor.u32 1.1754944e-38, %v690
  %v692 = vsel %vm689, %v691, %v687
  %v693 = vmul.f32 1.0, %v692
  %v694 = vmul.f32 %v673, %v576
  %v695 = vmul.f32 %v654, %v674
  %v696 = vadd.f32 %v694, %v695
  %v697 = vtanh.pop %v696
  %v698 = vmul.f32 %v693, %v697
  %v699 = vsel %vm578, 1, 0
  %700 = vset.pattern.permute.xlu0 0
  %701 = vperm.xlu0 %700, %v699
  %v702 = vpop.permute.xlu0 %701
  %vm703 = vcmp.eq.s32.totalorder %v702, 1
  %v704 = vsel %vm703, %v698, %v575
  %v705 = vsel %vm703, %v696, %v576
  %706 = vst [vmem:[#allocation2 + $0x8] sm:$0xff] %v704
  %vm707 = vcmp.gt.s32.totalorder %v33, 2
  %v708 = vpack.c.bf16 %v704, %v704
  %709 = vmatpush.bf16.msra.mxu0 %v415
  %710 = vmatpush.bf16.msra.mxu0 %v411
  %711 = vmatpush.bf16.msra.mxu0 %v407
  %712 = vmatpush.bf16.msra.mxu0 %v403
  %713 = vmatpush.bf16.msra.mxu0 %v399
  %714 = vmatpush.bf16.msra.mxu0 %v395
  %715 = vmatpush.bf16.msra.mxu0 %v391
  %716 = vmatpush.bf16.msra.mxu0 %v387
  %717 = vmatmul.bf16.gmra.mxu0 %v708
  %v718 = vpop.f32.mrf.mxu0
  %v719 = vadd.f32 0.0, %v718
  %v720 = vpop.f32.mrf.mxu0
  %721 = vdwg.mxu0
  %722 = vmatpush.bf16.msra.mxu0 %v416
  %723 = vmatpush.bf16.msra.mxu0 %v412
  %724 = vmatpush.bf16.msra.mxu0 %v408
  %725 = vmatpush.bf16.msra.mxu0 %v404
  %726 = vmatpush.bf16.msra.mxu0 %v400
  %727 = vmatpush.bf16.msra.mxu0 %v396
  %728 = vmatpush.bf16.msra.mxu0 %v392
  %729 = vmatpush.bf16.msra.mxu0 %v388
  %730 = vmatmul.bf16.gmra.mxu0 %v708
  %v731 = vpop.f32.mrf.mxu0
  %v732 = vadd.f32 0.0, %v731
  %v733 = vpop.f32.mrf.mxu0
  %734 = vdwg.mxu0
  %735 = vmatpush.bf16.msra.mxu0 %v417
  %736 = vmatpush.bf16.msra.mxu0 %v413
  %737 = vmatpush.bf16.msra.mxu0 %v409
  %738 = vmatpush.bf16.msra.mxu0 %v405
  %739 = vmatpush.bf16.msra.mxu0 %v401
  %740 = vmatpush.bf16.msra.mxu0 %v397
  %741 = vmatpush.bf16.msra.mxu0 %v393
  %742 = vmatpush.bf16.msra.mxu0 %v389
  %743 = vmatmul.bf16.gmra.mxu0 %v708
  %v744 = vpop.f32.mrf.mxu0
  %v745 = vadd.f32 0.0, %v744
  %v746 = vpop.f32.mrf.mxu0
  %747 = vdwg.mxu0
  %748 = vmatpush.bf16.msra.mxu0 %v418
  %749 = vmatpush.bf16.msra.mxu0 %v414
  %750 = vmatpush.bf16.msra.mxu0 %v410
  %751 = vmatpush.bf16.msra.mxu0 %v406
  %752 = vmatpush.bf16.msra.mxu0 %v402
  %753 = vmatpush.bf16.msra.mxu0 %v398
  %754 = vmatpush.bf16.msra.mxu0 %v394
  %755 = vmatpush.bf16.msra.mxu0 %v390
  %756 = vmatmul.bf16.gmra.mxu0 %v708
  %v757 = vpop.f32.mrf.mxu0
  %v758 = vadd.f32 0.0, %v757
  %v759 = vpop.f32.mrf.mxu0
  %760 = vdwg.mxu0
  %v761 = vadd.f32 %v189, %v719
  %v762 = vadd.f32 %v218, %v732
  %v763 = vadd.f32 %v247, %v745
  %v764 = vadd.f32 %v276, %v758
  %v765 = vxor.u32 %v761, 2147483648
  %v766 = vmul.f32 %v765, 1.442695
  %v767 = vpow.pop %v766
  %v768 = vadd.f32 %v767, 1.0
  %v769 = vrcp.pop %v768
  %v770 = vmul.f32 %v768, %v769
  %v771 = vsub.f32 1.0, %v770
  %v772 = vmul.f32 %v769, %v771
  %v773 = vadd.f32 %v769, %v772
  %vm774 = vweird.f32 %v768
  %vm775 = vweird.f32 %v769
  %vm776 = vmor %vm774, %vm775
  %v777 = vsel %vm776, %v769, %v773
  %v778 = vand.u32 2147483647, %v768
  %vm779 = vcmp.eq.f32.partialorder %v778, 8.507059e+37
  %v780 = vand.u32 %v768, 2147483648
  %v781 = vor.u32 1.1754944e-38, %v780
  %v782 = vsel %vm779, %v781, %v777
  %v783 = vmul.f32 1.0, %v782
  %v784 = vxor.u32 %v762, 2147483648
  %v785 = vmul.f32 %v784, 1.442695
  %v786 = vpow.pop %v785
  %v787 = vadd.f32 %v786, 1.0
  %v788 = vrcp.pop %v787
  %v789 = vmul.f32 %v787, %v788
  %v790 = vsub.f32 1.0, %v789
  %v791 = vmul.f32 %v788, %v790
  %v792 = vadd.f32 %v788, %v791
  %vm793 = vweird.f32 %v787
  %vm794 = vweird.f32 %v788
  %vm795 = vmor %vm793, %vm794
  %v796 = vsel %vm795, %v788, %v792
  %v797 = vand.u32 2147483647, %v787
  %vm798 = vcmp.eq.f32.partialorder %v797, 8.507059e+37
  %v799 = vand.u32 %v787, 2147483648
  %v800 = vor.u32 1.1754944e-38, %v799
  %v801 = vsel %vm798, %v800, %v796
  %v802 = vmul.f32 1.0, %v801
  %v803 = vtanh.pop %v763
  %v804 = vxor.u32 %v764, 2147483648
  %v805 = vmul.f32 %v804, 1.442695
  %v806 = vpow.pop %v805
  %v807 = vadd.f32 %v806, 1.0
  %v808 = vrcp.pop %v807
  %v809 = vmul.f32 %v807, %v808
  %v810 = vsub.f32 1.0, %v809
  %v811 = vmul.f32 %v808, %v810
  %v812 = vadd.f32 %v808, %v811
  %vm813 = vweird.f32 %v807
  %vm814 = vweird.f32 %v808
  %vm815 = vmor %vm813, %vm814
  %v816 = vsel %vm815, %v808, %v812
  %v817 = vand.u32 2147483647, %v807
  %vm818 = vcmp.eq.f32.partialorder %v817, 8.507059e+37
  %v819 = vand.u32 %v807, 2147483648
  %v820 = vor.u32 1.1754944e-38, %v819
  %v821 = vsel %vm818, %v820, %v816
  %v822 = vmul.f32 1.0, %v821
  %v823 = vmul.f32 %v802, %v705
  %v824 = vmul.f32 %v783, %v803
  %v825 = vadd.f32 %v823, %v824
  %v826 = vtanh.pop %v825
  %v827 = vmul.f32 %v822, %v826
  %v828 = vsel %vm707, 1, 0
  %829 = vset.pattern.permute.xlu0 0
  %830 = vperm.xlu0 %829, %v828
  %v831 = vpop.permute.xlu0 %830
  %vm832 = vcmp.eq.s32.totalorder %v831, 1
  %v833 = vsel %vm832, %v827, %v704
  %v834 = vsel %vm832, %v825, %v705
  %835 = vst [vmem:[#allocation2 + $0x10] sm:$0xff] %v833
  %vm836 = vcmp.gt.s32.totalorder %v33, 3
  %v837 = vpack.c.bf16 %v833, %v833
  %838 = vmatpush.bf16.msra.mxu0 %v415
  %839 = vmatpush.bf16.msra.mxu0 %v411
  %840 = vmatpush.bf16.msra.mxu0 %v407
  %841 = vmatpush.bf16.msra.mxu0 %v403
  %842 = vmatpush.bf16.msra.mxu0 %v399
  %843 = vmatpush.bf16.msra.mxu0 %v395
  %844 = vmatpush.bf16.msra.mxu0 %v391
  %845 = vmatpush.bf16.msra.mxu0 %v387
  %846 = vmatmul.bf16.gmra.mxu0 %v837
  %v847 = vpop.f32.mrf.mxu0
  %v848 = vadd.f32 0.0, %v847
  %v849 = vpop.f32.mrf.mxu0
  %850 = vdwg.mxu0
  %851 = vmatpush.bf16.msra.mxu0 %v416
  %852 = vmatpush.bf16.msra.mxu0 %v412
  %853 = vmatpush.bf16.msra.mxu0 %v408
  %854 = vmatpush.bf16.msra.mxu0 %v404
  %855 = vmatpush.bf16.msra.mxu0 %v400
  %856 = vmatpush.bf16.msra.mxu0 %v396
  %857 = vmatpush.bf16.msra.mxu0 %v392
  %858 = vmatpush.bf16.msra.mxu0 %v388
  %859 = vmatmul.bf16.gmra.mxu0 %v837
  %v860 = vpop.f32.mrf.mxu0
  %v861 = vadd.f32 0.0, %v860
  %v862 = vpop.f32.mrf.mxu0
  %863 = vdwg.mxu0
  %864 = vmatpush.bf16.msra.mxu0 %v417
  %865 = vmatpush.bf16.msra.mxu0 %v413
  %866 = vmatpush.bf16.msra.mxu0 %v409
  %867 = vmatpush.bf16.msra.mxu0 %v405
  %868 = vmatpush.bf16.msra.mxu0 %v401
  %869 = vmatpush.bf16.msra.mxu0 %v397
  %870 = vmatpush.bf16.msra.mxu0 %v393
  %871 = vmatpush.bf16.msra.mxu0 %v389
  %872 = vmatmul.bf16.gmra.mxu0 %v837
  %v873 = vpop.f32.mrf.mxu0
  %v874 = vadd.f32 0.0, %v873
  %v875 = vpop.f32.mrf.mxu0
  %876 = vdwg.mxu0
  %877 = vmatpush.bf16.msra.mxu0 %v418
  %878 = vmatpush.bf16.msra.mxu0 %v414
  %879 = vmatpush.bf16.msra.mxu0 %v410
  %880 = vmatpush.bf16.msra.mxu0 %v406
  %881 = vmatpush.bf16.msra.mxu0 %v402
  %882 = vmatpush.bf16.msra.mxu0 %v398
  %883 = vmatpush.bf16.msra.mxu0 %v394
  %884 = vmatpush.bf16.msra.mxu0 %v390
  %885 = vmatmul.bf16.gmra.mxu0 %v837
  %v886 = vpop.f32.mrf.mxu0
  %v887 = vadd.f32 0.0, %v886
  %v888 = vpop.f32.mrf.mxu0
  %889 = vdwg.mxu0
  %v890 = vadd.f32 %v191, %v848
  %v891 = vadd.f32 %v220, %v861
  %v892 = vadd.f32 %v249, %v874
  %v893 = vadd.f32 %v278, %v887
  %v894 = vxor.u32 %v890, 2147483648
  %v895 = vmul.f32 %v894, 1.442695
  %v896 = vpow.pop %v895
  %v897 = vadd.f32 %v896, 1.0
  %v898 = vrcp.pop %v897
  %v899 = vmul.f32 %v897, %v898
  %v900 = vsub.f32 1.0, %v899
  %v901 = vmul.f32 %v898, %v900
  %v902 = vadd.f32 %v898, %v901
  %vm903 = vweird.f32 %v897
  %vm904 = vweird.f32 %v898
  %vm905 = vmor %vm903, %vm904
  %v906 = vsel %vm905, %v898, %v902
  %v907 = vand.u32 2147483647, %v897
  %vm908 = vcmp.eq.f32.partialorder %v907, 8.507059e+37
  %v909 = vand.u32 %v897, 2147483648
  %v910 = vor.u32 1.1754944e-38, %v909
  %v911 = vsel %vm908, %v910, %v906
  %v912 = vmul.f32 1.0, %v911
  %v913 = vxor.u32 %v891, 2147483648
  %v914 = vmul.f32 %v913, 1.442695
  %v915 = vpow.pop %v914
  %v916 = vadd.f32 %v915, 1.0
  %v917 = vrcp.pop %v916
  %v918 = vmul.f32 %v916, %v917
  %v919 = vsub.f32 1.0, %v918
  %v920 = vmul.f32 %v917, %v919
  %v921 = vadd.f32 %v917, %v920
  %vm922 = vweird.f32 %v916
  %vm923 = vweird.f32 %v917
  %vm924 = vmor %vm922, %vm923
  %v925 = vsel %vm924, %v917, %v921
  %v926 = vand.u32 2147483647, %v916
  %vm927 = vcmp.eq.f32.partialorder %v926, 8.507059e+37
  %v928 = vand.u32 %v916, 2147483648
  %v929 = vor.u32 1.1754944e-38, %v928
  %v930 = vsel %vm927, %v929, %v925
  %v931 = vmul.f32 1.0, %v930
  %v932 = vtanh.pop %v892
  %v933 = vxor.u32 %v893, 2147483648
  %v934 = vmul.f32 %v933, 1.442695
  %v935 = vpow.pop %v934
  %v936 = vadd.f32 %v935, 1.0
  %v937 = vrcp.pop %v936
  %v938 = vmul.f32 %v936, %v937
  %v939 = vsub.f32 1.0, %v938
  %v940 = vmul.f32 %v937, %v939
  %v941 = vadd.f32 %v937, %v940
  %vm942 = vweird.f32 %v936
  %vm943 = vweird.f32 %v937
  %vm944 = vmor %vm942, %vm943
  %v945 = vsel %vm944, %v937, %v941
  %v946 = vand.u32 2147483647, %v936
  %vm947 = vcmp.eq.f32.partialorder %v946, 8.507059e+37
  %v948 = vand.u32 %v936, 2147483648
  %v949 = vor.u32 1.1754944e-38, %v948
  %v950 = vsel %vm947, %v949, %v945
  %v951 = vmul.f32 1.0, %v950
  %v952 = vmul.f32 %v931, %v834
  %v953 = vmul.f32 %v912, %v932
  %v954 = vadd.f32 %v952, %v953
  %v955 = vtanh.pop %v954
  %v956 = vmul.f32 %v951, %v955
  %v957 = vsel %vm836, 1, 0
  %958 = vset.pattern.permute.xlu0 0
  %959 = vperm.xlu0 %958, %v957
  %v960 = vpop.permute.xlu0 %959
  %vm961 = vcmp.eq.s32.totalorder %v960, 1
  %v962 = vsel %vm961, %v956, %v833
  %v963 = vsel %vm961, %v954, %v834
  %964 = vst [vmem:[#allocation2 + $0x18] sm:$0xff] %v962
  %vm965 = vcmp.gt.s32.totalorder %v33, 4
  %v966 = vpack.c.bf16 %v962, %v962
  %967 = vmatpush.bf16.msra.mxu0 %v415
  %968 = vmatpush.bf16.msra.mxu0 %v411
  %969 = vmatpush.bf16.msra.mxu0 %v407
  %970 = vmatpush.bf16.msra.mxu0 %v403
  %971 = vmatpush.bf16.msra.mxu0 %v399
  %972 = vmatpush.bf16.msra.mxu0 %v395
  %973 = vmatpush.bf16.msra.mxu0 %v391
  %974 = vmatpush.bf16.msra.mxu0 %v387
  %975 = vmatmul.bf16.gmra.mxu0 %v966
  %v976 = vpop.f32.mrf.mxu0
  %v977 = vadd.f32 0.0, %v976
  %v978 = vpop.f32.mrf.mxu0
  %979 = vdwg.mxu0
  %980 = vmatpush.bf16.msra.mxu0 %v416
  %981 = vmatpush.bf16.msra.mxu0 %v412
  %982 = vmatpush.bf16.msra.mxu0 %v408
  %983 = vmatpush.bf16.msra.mxu0 %v404
  %984 = vmatpush.bf16.msra.mxu0 %v400
  %985 = vmatpush.bf16.msra.mxu0 %v396
  %986 = vmatpush.bf16.msra.mxu0 %v392
  %987 = vmatpush.bf16.msra.mxu0 %v388
  %988 = vmatmul.bf16.gmra.mxu0 %v966
  %v989 = vpop.f32.mrf.mxu0
  %v990 = vadd.f32 0.0, %v989
  %v991 = vpop.f32.mrf.mxu0
  %992 = vdwg.mxu0
  %993 = vmatpush.bf16.msra.mxu0 %v417
  %994 = vmatpush.bf16.msra.mxu0 %v413
  %995 = vmatpush.bf16.msra.mxu0 %v409
  %996 = vmatpush.bf16.msra.mxu0 %v405
  %997 = vmatpush.bf16.msra.mxu0 %v401
  %998 = vmatpush.bf16.msra.mxu0 %v397
  %999 = vmatpush.bf16.msra.mxu0 %v393
  %1000 = vmatpush.bf16.msra.mxu0 %v389
  %1001 = vmatmul.bf16.gmra.mxu0 %v966
  %v1002 = vpop.f32.mrf.mxu0
  %v1003 = vadd.f32 0.0, %v1002
  %v1004 = vpop.f32.mrf.mxu0
  %1005 = vdwg.mxu0
  %1006 = vmatpush.bf16.msra.mxu0 %v418
  %1007 = vmatpush.bf16.msra.mxu0 %v414
  %1008 = vmatpush.bf16.msra.mxu0 %v410
  %1009 = vmatpush.bf16.msra.mxu0 %v406
  %1010 = vmatpush.bf16.msra.mxu0 %v402
  %1011 = vmatpush.bf16.msra.mxu0 %v398
  %1012 = vmatpush.bf16.msra.mxu0 %v394
  %1013 = vmatpush.bf16.msra.mxu0 %v390
  %1014 = vmatmul.bf16.gmra.mxu0 %v966
  %v1015 = vpop.f32.mrf.mxu0
  %v1016 = vadd.f32 0.0, %v1015
  %v1017 = vpop.f32.mrf.mxu0
  %1018 = vdwg.mxu0
  %v1019 = vadd.f32 %v194, %v977
  %v1020 = vadd.f32 %v223, %v990
  %v1021 = vadd.f32 %v252, %v1003
  %v1022 = vadd.f32 %v281, %v1016
  %v1023 = vxor.u32 %v1019, 2147483648
  %v1024 = vmul.f32 %v1023, 1.442695
  %v1025 = vpow.pop %v1024
  %v1026 = vadd.f32 %v1025, 1.0
  %v1027 = vrcp.pop %v1026
  %v1028 = vmul.f32 %v1026, %v1027
  %v1029 = vsub.f32 1.0, %v1028
  %v1030 = vmul.f32 %v1027, %v1029
  %v1031 = vadd.f32 %v1027, %v1030
  %vm1032 = vweird.f32 %v1026
  %vm1033 = vweird.f32 %v1027
  %vm1034 = vmor %vm1032, %vm1033
  %v1035 = vsel %vm1034, %v1027, %v1031
  %v1036 = vand.u32 2147483647, %v1026
  %vm1037 = vcmp.eq.f32.partialorder %v1036, 8.507059e+37
  %v1038 = vand.u32 %v1026, 2147483648
  %v1039 = vor.u32 1.1754944e-38, %v1038
  %v1040 = vsel %vm1037, %v1039, %v1035
  %v1041 = vmul.f32 1.0, %v1040
  %v1042 = vxor.u32 %v1020, 2147483648
  %v1043 = vmul.f32 %v1042, 1.442695
  %v1044 = vpow.pop %v1043
  %v1045 = vadd.f32 %v1044, 1.0
  %v1046 = vrcp.pop %v1045
  %v1047 = vmul.f32 %v1045, %v1046
  %v1048 = vsub.f32 1.0, %v1047
  %v1049 = vmul.f32 %v1046, %v1048
  %v1050 = vadd.f32 %v1046, %v1049
  %vm1051 = vweird.f32 %v1045
  %vm1052 = vweird.f32 %v1046
  %vm1053 = vmor %vm1051, %vm1052
  %v1054 = vsel %vm1053, %v1046, %v1050
  %v1055 = vand.u32 2147483647, %v1045
  %vm1056 = vcmp.eq.f32.partialorder %v1055, 8.507059e+37
  %v1057 = vand.u32 %v1045, 2147483648
  %v1058 = vor.u32 1.1754944e-38, %v1057
  %v1059 = vsel %vm1056, %v1058, %v1054
  %v1060 = vmul.f32 1.0, %v1059
  %v1061 = vtanh.pop %v1021
  %v1062 = vxor.u32 %v1022, 2147483648
  %v1063 = vmul.f32 %v1062, 1.442695
  %v1064 = vpow.pop %v1063
  %v1065 = vadd.f32 %v1064, 1.0
  %v1066 = vrcp.pop %v1065
  %v1067 = vmul.f32 %v1065, %v1066
  %v1068 = vsub.f32 1.0, %v1067
  %v1069 = vmul.f32 %v1066, %v1068
  %v1070 = vadd.f32 %v1066, %v1069
  %vm1071 = vweird.f32 %v1065
  %vm1072 = vweird.f32 %v1066
  %vm1073 = vmor %vm1071, %vm1072
  %v1074 = vsel %vm1073, %v1066, %v1070
  %v1075 = vand.u32 2147483647, %v1065
  %vm1076 = vcmp.eq.f32.partialorder %v1075, 8.507059e+37
  %v1077 = vand.u32 %v1065, 2147483648
  %v1078 = vor.u32 1.1754944e-38, %v1077
  %v1079 = vsel %vm1076, %v1078, %v1074
  %v1080 = vmul.f32 1.0, %v1079
  %v1081 = vmul.f32 %v1060, %v963
  %v1082 = vmul.f32 %v1041, %v1061
  %v1083 = vadd.f32 %v1081, %v1082
  %v1084 = vtanh.pop %v1083
  %v1085 = vmul.f32 %v1080, %v1084
  %v1086 = vsel %vm965, 1, 0
  %1087 = vset.pattern.permute.xlu0 0
  %1088 = vperm.xlu0 %1087, %v1086
  %v1089 = vpop.permute.xlu0 %1088
  %vm1090 = vcmp.eq.s32.totalorder %v1089, 1
  %v1091 = vsel %vm1090, %v1085, %v962
  %v1092 = vsel %vm1090, %v1083, %v963
  %1093 = vst [vmem:[#allocation2 + $0x20] sm:$0xff] %v1091
  %vm1094 = vcmp.gt.s32.totalorder %v33, 5
  %v1095 = vpack.c.bf16 %v1091, %v1091
  %1096 = vmatpush.bf16.msra.mxu0 %v415
  %1097 = vmatpush.bf16.msra.mxu0 %v411
  %1098 = vmatpush.bf16.msra.mxu0 %v407
  %1099 = vmatpush.bf16.msra.mxu0 %v403
  %1100 = vmatpush.bf16.msra.mxu0 %v399
  %1101 = vmatpush.bf16.msra.mxu0 %v395
  %1102 = vmatpush.bf16.msra.mxu0 %v391
  %1103 = vmatpush.bf16.msra.mxu0 %v387
  %1104 = vmatmul.bf16.gmra.mxu0 %v1095
  %v1105 = vpop.f32.mrf.mxu0
  %v1106 = vadd.f32 0.0, %v1105
  %v1107 = vpop.f32.mrf.mxu0
  %1108 = vdwg.mxu0
  %1109 = vmatpush.bf16.msra.mxu0 %v416
  %1110 = vmatpush.bf16.msra.mxu0 %v412
  %1111 = vmatpush.bf16.msra.mxu0 %v408
  %1112 = vmatpush.bf16.msra.mxu0 %v404
  %1113 = vmatpush.bf16.msra.mxu0 %v400
  %1114 = vmatpush.bf16.msra.mxu0 %v396
  %1115 = vmatpush.bf16.msra.mxu0 %v392
  %1116 = vmatpush.bf16.msra.mxu0 %v388
  %1117 = vmatmul.bf16.gmra.mxu0 %v1095
  %v1118 = vpop.f32.mrf.mxu0
  %v1119 = vadd.f32 0.0, %v1118
  %v1120 = vpop.f32.mrf.mxu0
  %1121 = vdwg.mxu0
  %1122 = vmatpush.bf16.msra.mxu0 %v417
  %1123 = vmatpush.bf16.msra.mxu0 %v413
  %1124 = vmatpush.bf16.msra.mxu0 %v409
  %1125 = vmatpush.bf16.msra.mxu0 %v405
  %1126 = vmatpush.bf16.msra.mxu0 %v401
  %1127 = vmatpush.bf16.msra.mxu0 %v397
  %1128 = vmatpush.bf16.msra.mxu0 %v393
  %1129 = vmatpush.bf16.msra.mxu0 %v389
  %1130 = vmatmul.bf16.gmra.mxu0 %v1095
  %v1131 = vpop.f32.mrf.mxu0
  %v1132 = vadd.f32 0.0, %v1131
  %v1133 = vpop.f32.mrf.mxu0
  %1134 = vdwg.mxu0
  %1135 = vmatpush.bf16.msra.mxu0 %v418
  %1136 = vmatpush.bf16.msra.mxu0 %v414
  %1137 = vmatpush.bf16.msra.mxu0 %v410
  %1138 = vmatpush.bf16.msra.mxu0 %v406
  %1139 = vmatpush.bf16.msra.mxu0 %v402
  %1140 = vmatpush.bf16.msra.mxu0 %v398
  %1141 = vmatpush.bf16.msra.mxu0 %v394
  %1142 = vmatpush.bf16.msra.mxu0 %v390
  %1143 = vmatmul.bf16.gmra.mxu0 %v1095
  %v1144 = vpop.f32.mrf.mxu0
  %v1145 = vadd.f32 0.0, %v1144
  %v1146 = vpop.f32.mrf.mxu0
  %1147 = vdwg.mxu0
  %v1148 = vadd.f32 %v196, %v1106
  %v1149 = vadd.f32 %v225, %v1119
  %v1150 = vadd.f32 %v254, %v1132
  %v1151 = vadd.f32 %v283, %v1145
  %v1152 = vxor.u32 %v1148, 2147483648
  %v1153 = vmul.f32 %v1152, 1.442695
  %v1154 = vpow.pop %v1153
  %v1155 = vadd.f32 %v1154, 1.0
  %v1156 = vrcp.pop %v1155
  %v1157 = vmul.f32 %v1155, %v1156
  %v1158 = vsub.f32 1.0, %v1157
  %v1159 = vmul.f32 %v1156, %v1158
  %v1160 = vadd.f32 %v1156, %v1159
  %vm1161 = vweird.f32 %v1155
  %vm1162 = vweird.f32 %v1156
  %vm1163 = vmor %vm1161, %vm1162
  %v1164 = vsel %vm1163, %v1156, %v1160
  %v1165 = vand.u32 2147483647, %v1155
  %vm1166 = vcmp.eq.f32.partialorder %v1165, 8.507059e+37
  %v1167 = vand.u32 %v1155, 2147483648
  %v1168 = vor.u32 1.1754944e-38, %v1167
  %v1169 = vsel %vm1166, %v1168, %v1164
  %v1170 = vmul.f32 1.0, %v1169
  %v1171 = vxor.u32 %v1149, 2147483648
  %v1172 = vmul.f32 %v1171, 1.442695
  %v1173 = vpow.pop %v1172
  %v1174 = vadd.f32 %v1173, 1.0
  %v1175 = vrcp.pop %v1174
  %v1176 = vmul.f32 %v1174, %v1175
  %v1177 = vsub.f32 1.0, %v1176
  %v1178 = vmul.f32 %v1175, %v1177
  %v1179 = vadd.f32 %v1175, %v1178
  %vm1180 = vweird.f32 %v1174
  %vm1181 = vweird.f32 %v1175
  %vm1182 = vmor %vm1180, %vm1181
  %v1183 = vsel %vm1182, %v1175, %v1179
  %v1184 = vand.u32 2147483647, %v1174
  %vm1185 = vcmp.eq.f32.partialorder %v1184, 8.507059e+37
  %v1186 = vand.u32 %v1174, 2147483648
  %v1187 = vor.u32 1.1754944e-38, %v1186
  %v1188 = vsel %vm1185, %v1187, %v1183
  %v1189 = vmul.f32 1.0, %v1188
  %v1190 = vtanh.pop %v1150
  %v1191 = vxor.u32 %v1151, 2147483648
  %v1192 = vmul.f32 %v1191, 1.442695
  %v1193 = vpow.pop %v1192
  %v1194 = vadd.f32 %v1193, 1.0
  %v1195 = vrcp.pop %v1194
  %v1196 = vmul.f32 %v1194, %v1195
  %v1197 = vsub.f32 1.0, %v1196
  %v1198 = vmul.f32 %v1195, %v1197
  %v1199 = vadd.f32 %v1195, %v1198
  %vm1200 = vweird.f32 %v1194
  %vm1201 = vweird.f32 %v1195
  %vm1202 = vmor %vm1200, %vm1201
  %v1203 = vsel %vm1202, %v1195, %v1199
  %v1204 = vand.u32 2147483647, %v1194
  %vm1205 = vcmp.eq.f32.partialorder %v1204, 8.507059e+37
  %v1206 = vand.u32 %v1194, 2147483648
  %v1207 = vor.u32 1.1754944e-38, %v1206
  %v1208 = vsel %vm1205, %v1207, %v1203
  %v1209 = vmul.f32 1.0, %v1208
  %v1210 = vmul.f32 %v1189, %v1092
  %v1211 = vmul.f32 %v1170, %v1190
  %v1212 = vadd.f32 %v1210, %v1211
  %v1213 = vtanh.pop %v1212
  %v1214 = vmul.f32 %v1209, %v1213
  %v1215 = vsel %vm1094, 1, 0
  %1216 = vset.pattern.permute.xlu0 0
  %1217 = vperm.xlu0 %1216, %v1215
  %v1218 = vpop.permute.xlu0 %1217
  %vm1219 = vcmp.eq.s32.totalorder %v1218, 1
  %v1220 = vsel %vm1219, %v1214, %v1091
  %v1221 = vsel %vm1219, %v1212, %v1092
  %1222 = vst [vmem:[#allocation2 + $0x28] sm:$0xff] %v1220
  %vm1223 = vcmp.gt.s32.totalorder %v33, 6
  %v1224 = vpack.c.bf16 %v1220, %v1220
  %1225 = vmatpush.bf16.msra.mxu0 %v415
  %1226 = vmatpush.bf16.msra.mxu0 %v411
  %1227 = vmatpush.bf16.msra.mxu0 %v407
  %1228 = vmatpush.bf16.msra.mxu0 %v403
  %1229 = vmatpush.bf16.msra.mxu0 %v399
  %1230 = vmatpush.bf16.msra.mxu0 %v395
  %1231 = vmatpush.bf16.msra.mxu0 %v391
  %1232 = vmatpush.bf16.msra.mxu0 %v387
  %1233 = vmatmul.bf16.gmra.mxu0 %v1224
  %v1234 = vpop.f32.mrf.mxu0
  %v1235 = vadd.f32 0.0, %v1234
  %v1236 = vpop.f32.mrf.mxu0
  %1237 = vdwg.mxu0
  %1238 = vmatpush.bf16.msra.mxu0 %v416
  %1239 = vmatpush.bf16.msra.mxu0 %v412
  %1240 = vmatpush.bf16.msra.mxu0 %v408
  %1241 = vmatpush.bf16.msra.mxu0 %v404
  %1242 = vmatpush.bf16.msra.mxu0 %v400
  %1243 = vmatpush.bf16.msra.mxu0 %v396
  %1244 = vmatpush.bf16.msra.mxu0 %v392
  %1245 = vmatpush.bf16.msra.mxu0 %v388
  %1246 = vmatmul.bf16.gmra.mxu0 %v1224
  %v1247 = vpop.f32.mrf.mxu0
  %v1248 = vadd.f32 0.0, %v1247
  %v1249 = vpop.f32.mrf.mxu0
  %1250 = vdwg.mxu0
  %1251 = vmatpush.bf16.msra.mxu0 %v417
  %1252 = vmatpush.bf16.msra.mxu0 %v413
  %1253 = vmatpush.bf16.msra.mxu0 %v409
  %1254 = vmatpush.bf16.msra.mxu0 %v405
  %1255 = vmatpush.bf16.msra.mxu0 %v401
  %1256 = vmatpush.bf16.msra.mxu0 %v397
  %1257 = vmatpush.bf16.msra.mxu0 %v393
  %1258 = vmatpush.bf16.msra.mxu0 %v389
  %1259 = vmatmul.bf16.gmra.mxu0 %v1224
  %v1260 = vpop.f32.mrf.mxu0
  %v1261 = vadd.f32 0.0, %v1260
  %v1262 = vpop.f32.mrf.mxu0
  %1263 = vdwg.mxu0
  %1264 = vmatpush.bf16.msra.mxu0 %v418
  %1265 = vmatpush.bf16.msra.mxu0 %v414
  %1266 = vmatpush.bf16.msra.mxu0 %v410
  %1267 = vmatpush.bf16.msra.mxu0 %v406
  %1268 = vmatpush.bf16.msra.mxu0 %v402
  %1269 = vmatpush.bf16.msra.mxu0 %v398
  %1270 = vmatpush.bf16.msra.mxu0 %v394
  %1271 = vmatpush.bf16.msra.mxu0 %v390
  %1272 = vmatmul.bf16.gmra.mxu0 %v1224
  %v1273 = vpop.f32.mrf.mxu0
  %v1274 = vadd.f32 0.0, %v1273
  %v1275 = vpop.f32.mrf.mxu0
  %1276 = vdwg.mxu0
  %v1277 = vadd.f32 %v199, %v1235
  %v1278 = vadd.f32 %v228, %v1248
  %v1279 = vadd.f32 %v257, %v1261
  %v1280 = vadd.f32 %v286, %v1274
  %v1281 = vxor.u32 %v1277, 2147483648
  %v1282 = vmul.f32 %v1281, 1.442695
  %v1283 = vpow.pop %v1282
  %v1284 = vadd.f32 %v1283, 1.0
  %v1285 = vrcp.pop %v1284
  %v1286 = vmul.f32 %v1284, %v1285
  %v1287 = vsub.f32 1.0, %v1286
  %v1288 = vmul.f32 %v1285, %v1287
  %v1289 = vadd.f32 %v1285, %v1288
  %vm1290 = vweird.f32 %v1284
  %vm1291 = vweird.f32 %v1285
  %vm1292 = vmor %vm1290, %vm1291
  %v1293 = vsel %vm1292, %v1285, %v1289
  %v1294 = vand.u32 2147483647, %v1284
  %vm1295 = vcmp.eq.f32.partialorder %v1294, 8.507059e+37
  %v1296 = vand.u32 %v1284, 2147483648
  %v1297 = vor.u32 1.1754944e-38, %v1296
  %v1298 = vsel %vm1295, %v1297, %v1293
  %v1299 = vmul.f32 1.0, %v1298
  %v1300 = vxor.u32 %v1278, 2147483648
  %v1301 = vmul.f32 %v1300, 1.442695
  %v1302 = vpow.pop %v1301
  %v1303 = vadd.f32 %v1302, 1.0
  %v1304 = vrcp.pop %v1303
  %v1305 = vmul.f32 %v1303, %v1304
  %v1306 = vsub.f32 1.0, %v1305
  %v1307 = vmul.f32 %v1304, %v1306
  %v1308 = vadd.f32 %v1304, %v1307
  %vm1309 = vweird.f32 %v1303
  %vm1310 = vweird.f32 %v1304
  %vm1311 = vmor %vm1309, %vm1310
  %v1312 = vsel %vm1311, %v1304, %v1308
  %v1313 = vand.u32 2147483647, %v1303
  %vm1314 = vcmp.eq.f32.partialorder %v1313, 8.507059e+37
  %v1315 = vand.u32 %v1303, 2147483648
  %v1316 = vor.u32 1.1754944e-38, %v1315
  %v1317 = vsel %vm1314, %v1316, %v1312
  %v1318 = vmul.f32 1.0, %v1317
  %v1319 = vtanh.pop %v1279
  %v1320 = vxor.u32 %v1280, 2147483648
  %v1321 = vmul.f32 %v1320, 1.442695
  %v1322 = vpow.pop %v1321
  %v1323 = vadd.f32 %v1322, 1.0
  %v1324 = vrcp.pop %v1323
  %v1325 = vmul.f32 %v1323, %v1324
  %v1326 = vsub.f32 1.0, %v1325
  %v1327 = vmul.f32 %v1324, %v1326
  %v1328 = vadd.f32 %v1324, %v1327
  %vm1329 = vweird.f32 %v1323
  %vm1330 = vweird.f32 %v1324
  %vm1331 = vmor %vm1329, %vm1330
  %v1332 = vsel %vm1331, %v1324, %v1328
  %v1333 = vand.u32 2147483647, %v1323
  %vm1334 = vcmp.eq.f32.partialorder %v1333, 8.507059e+37
  %v1335 = vand.u32 %v1323, 2147483648
  %v1336 = vor.u32 1.1754944e-38, %v1335
  %v1337 = vsel %vm1334, %v1336, %v1332
  %v1338 = vmul.f32 1.0, %v1337
  %v1339 = vmul.f32 %v1318, %v1221
  %v1340 = vmul.f32 %v1299, %v1319
  %v1341 = vadd.f32 %v1339, %v1340
  %v1342 = vtanh.pop %v1341
  %v1343 = vmul.f32 %v1338, %v1342
  %v1344 = vsel %vm1223, 1, 0
  %1345 = vset.pattern.permute.xlu0 0
  %1346 = vperm.xlu0 %1345, %v1344
  %v1347 = vpop.permute.xlu0 %1346
  %vm1348 = vcmp.eq.s32.totalorder %v1347, 1
  %v1349 = vsel %vm1348, %v1343, %v1220
  %v1350 = vsel %vm1348, %v1341, %v1221
  %1351 = vst [vmem:[#allocation2 + $0x30] sm:$0xff] %v1349
  %vm1352 = vcmp.gt.s32.totalorder %v33, 7
  %v1353 = vpack.c.bf16 %v1349, %v1349
  %1354 = vmatpush.bf16.msra.mxu0 %v415
  %1355 = vmatpush.bf16.msra.mxu0 %v411
  %1356 = vmatpush.bf16.msra.mxu0 %v407
  %1357 = vmatpush.bf16.msra.mxu0 %v403
  %1358 = vmatpush.bf16.msra.mxu0 %v399
  %1359 = vmatpush.bf16.msra.mxu0 %v395
  %1360 = vmatpush.bf16.msra.mxu0 %v391
  %1361 = vmatpush.bf16.msra.mxu0 %v387
  %1362 = vmatmul.bf16.gmra.mxu0 %v1353
  %v1363 = vpop.f32.mrf.mxu0
  %v1364 = vadd.f32 0.0, %v1363
  %v1365 = vpop.f32.mrf.mxu0
  %1366 = vdwg.mxu0
  %1367 = vmatpush.bf16.msra.mxu0 %v416
  %1368 = vmatpush.bf16.msra.mxu0 %v412
  %1369 = vmatpush.bf16.msra.mxu0 %v408
  %1370 = vmatpush.bf16.msra.mxu0 %v404
  %1371 = vmatpush.bf16.msra.mxu0 %v400
  %1372 = vmatpush.bf16.msra.mxu0 %v396
  %1373 = vmatpush.bf16.msra.mxu0 %v392
  %1374 = vmatpush.bf16.msra.mxu0 %v388
  %1375 = vmatmul.bf16.gmra.mxu0 %v1353
  %v1376 = vpop.f32.mrf.mxu0
  %v1377 = vadd.f32 0.0, %v1376
  %v1378 = vpop.f32.mrf.mxu0
  %1379 = vdwg.mxu0
  %1380 = vmatpush.bf16.msra.mxu0 %v417
  %1381 = vmatpush.bf16.msra.mxu0 %v413
  %1382 = vmatpush.bf16.msra.mxu0 %v409
  %1383 = vmatpush.bf16.msra.mxu0 %v405
  %1384 = vmatpush.bf16.msra.mxu0 %v401
  %1385 = vmatpush.bf16.msra.mxu0 %v397
  %1386 = vmatpush.bf16.msra.mxu0 %v393
  %1387 = vmatpush.bf16.msra.mxu0 %v389
  %1388 = vmatmul.bf16.gmra.mxu0 %v1353
  %v1389 = vpop.f32.mrf.mxu0
  %v1390 = vadd.f32 0.0, %v1389
  %v1391 = vpop.f32.mrf.mxu0
  %1392 = vdwg.mxu0
  %1393 = vmatpush.bf16.msra.mxu0 %v418
  %1394 = vmatpush.bf16.msra.mxu0 %v414
  %1395 = vmatpush.bf16.msra.mxu0 %v410
  %1396 = vmatpush.bf16.msra.mxu0 %v406
  %1397 = vmatpush.bf16.msra.mxu0 %v402
  %1398 = vmatpush.bf16.msra.mxu0 %v398
  %1399 = vmatpush.bf16.msra.mxu0 %v394
  %1400 = vmatpush.bf16.msra.mxu0 %v390
  %1401 = vmatmul.bf16.gmra.mxu0 %v1353
  %v1402 = vpop.f32.mrf.mxu0
  %v1403 = vadd.f32 0.0, %v1402
  %v1404 = vpop.f32.mrf.mxu0
  %1405 = vdwg.mxu0
  %v1406 = vadd.f32 %v201, %v1364
  %v1407 = vadd.f32 %v230, %v1377
  %v1408 = vadd.f32 %v259, %v1390
  %v1409 = vadd.f32 %v288, %v1403
  %v1410 = vxor.u32 %v1406, 2147483648
  %v1411 = vmul.f32 %v1410, 1.442695
  %v1412 = vpow.pop %v1411
  %v1413 = vadd.f32 %v1412, 1.0
  %v1414 = vrcp.pop %v1413
  %v1415 = vmul.f32 %v1413, %v1414
  %v1416 = vsub.f32 1.0, %v1415
  %v1417 = vmul.f32 %v1414, %v1416
  %v1418 = vadd.f32 %v1414, %v1417
  %vm1419 = vweird.f32 %v1413
  %vm1420 = vweird.f32 %v1414
  %vm1421 = vmor %vm1419, %vm1420
  %v1422 = vsel %vm1421, %v1414, %v1418
  %v1423 = vand.u32 2147483647, %v1413
  %vm1424 = vcmp.eq.f32.partialorder %v1423, 8.507059e+37
  %v1425 = vand.u32 %v1413, 2147483648
  %v1426 = vor.u32 1.1754944e-38, %v1425
  %v1427 = vsel %vm1424, %v1426, %v1422
  %v1428 = vmul.f32 1.0, %v1427
  %v1429 = vxor.u32 %v1407, 2147483648
  %v1430 = vmul.f32 %v1429, 1.442695
  %v1431 = vpow.pop %v1430
  %v1432 = vadd.f32 %v1431, 1.0
  %v1433 = vrcp.pop %v1432
  %v1434 = vmul.f32 %v1432, %v1433
  %v1435 = vsub.f32 1.0, %v1434
  %v1436 = vmul.f32 %v1433, %v1435
  %v1437 = vadd.f32 %v1433, %v1436
  %vm1438 = vweird.f32 %v1432
  %vm1439 = vweird.f32 %v1433
  %vm1440 = vmor %vm1438, %vm1439
  %v1441 = vsel %vm1440, %v1433, %v1437
  %v1442 = vand.u32 2147483647, %v1432
  %vm1443 = vcmp.eq.f32.partialorder %v1442, 8.507059e+37
  %v1444 = vand.u32 %v1432, 2147483648
  %v1445 = vor.u32 1.1754944e-38, %v1444
  %v1446 = vsel %vm1443, %v1445, %v1441
  %v1447 = vmul.f32 1.0, %v1446
  %v1448 = vtanh.pop %v1408
  %v1449 = vxor.u32 %v1409, 2147483648
  %v1450 = vmul.f32 %v1449, 1.442695
  %v1451 = vpow.pop %v1450
  %v1452 = vadd.f32 %v1451, 1.0
  %v1453 = vrcp.pop %v1452
  %v1454 = vmul.f32 %v1452, %v1453
  %v1455 = vsub.f32 1.0, %v1454
  %v1456 = vmul.f32 %v1453, %v1455
  %v1457 = vadd.f32 %v1453, %v1456
  %vm1458 = vweird.f32 %v1452
  %vm1459 = vweird.f32 %v1453
  %vm1460 = vmor %vm1458, %vm1459
  %v1461 = vsel %vm1460, %v1453, %v1457
  %v1462 = vand.u32 2147483647, %v1452
  %vm1463 = vcmp.eq.f32.partialorder %v1462, 8.507059e+37
  %v1464 = vand.u32 %v1452, 2147483648
  %v1465 = vor.u32 1.1754944e-38, %v1464
  %v1466 = vsel %vm1463, %v1465, %v1461
  %v1467 = vmul.f32 1.0, %v1466
  %v1468 = vmul.f32 %v1447, %v1350
  %v1469 = vmul.f32 %v1428, %v1448
  %v1470 = vadd.f32 %v1468, %v1469
  %v1471 = vtanh.pop %v1470
  %v1472 = vmul.f32 %v1467, %v1471
  %v1473 = vsel %vm1352, 1, 0
  %1474 = vset.pattern.permute.xlu0 0
  %1475 = vperm.xlu0 %1474, %v1473
  %v1476 = vpop.permute.xlu0 %1475
  %vm1477 = vcmp.eq.s32.totalorder %v1476, 1
  %v1478 = vsel %vm1477, %v1472, %v1349
  %v1479 = vsel %vm1477, %v1470, %v1350
  %1480 = vst [vmem:[#allocation2 + $0x38] sm:$0xff] %v1478
  %v1481 = vld [vmem:[#allocation2] sm:$0xff]
  %v1482 = vld [vmem:[#allocation2 + $0x8] sm:$0xff]
  %v1483 = vld [vmem:[#allocation2 + $0x10] sm:$0xff]
  %v1484 = vld [vmem:[#allocation2 + $0x18] sm:$0xff]
  %v1485 = vld [vmem:[#allocation2 + $0x20] sm:$0xff]
  %v1486 = vld [vmem:[#allocation2 + $0x28] sm:$0xff]
  %v1487 = vld [vmem:[#allocation2 + $0x30] sm:$0xff]
  %v1488 = vld [vmem:[#allocation2 + $0x38] sm:$0xff]
  %v1489 = vpack.c.bf16 %v1482, %v1481
  %v1490 = vpack.c.bf16 %v1484, %v1483
  %v1491 = vpack.c.bf16 %v1486, %v1485
  %v1492 = vpack.c.bf16 %v1488, %v1487
  %v1493 = vld [vmem:[%s5] sm:$0xff]
  %v1494 = vld [vmem:[%s5 + $0x8] sm:$0xff]
  %v1495 = vld [vmem:[%s5 + $0x10] sm:$0xff]
  %v1496 = vld [vmem:[%s5 + $0x18] sm:$0xff]
  %v1497 = vld [vmem:[%s5 + $0x20] sm:$0xff]
  %v1498 = vld [vmem:[%s5 + $0x28] sm:$0xff]
  %v1499 = vld [vmem:[%s5 + $0x30] sm:$0xff]
  %v1500 = vld [vmem:[%s5 + $0x38] sm:$0xff]
  %v1501 = vld [vmem:[%s5 + $0x40] sm:$0xff]
  %v1502 = vld [vmem:[%s5 + $0x48] sm:$0xff]
  %v1503 = vld [vmem:[%s5 + $0x50] sm:$0xff]
  %v1504 = vld [vmem:[%s5 + $0x58] sm:$0xff]
  %v1505 = vld [vmem:[%s5 + $0x60] sm:$0xff]
  %v1506 = vld [vmem:[%s5 + $0x68] sm:$0xff]
  %v1507 = vld [vmem:[%s5 + $0x70] sm:$0xff]
  %v1508 = vld [vmem:[%s5 + $0x78] sm:$0xff]
  %v1509 = vld [vmem:[%s5 + $0x80] sm:$0xff]
  %v1510 = vld [vmem:[%s5 + $0x88] sm:$0xff]
  %v1511 = vld [vmem:[%s5 + $0x90] sm:$0xff]
  %v1512 = vld [vmem:[%s5 + $0x98] sm:$0xff]
  %v1513 = vld [vmem:[%s5 + $0xa0] sm:$0xff]
  %v1514 = vld [vmem:[%s5 + $0xa8] sm:$0xff]
  %v1515 = vld [vmem:[%s5 + $0xb0] sm:$0xff]
  %v1516 = vld [vmem:[%s5 + $0xb8] sm:$0xff]
  %v1517 = vld [vmem:[%s5 + $0xc0] sm:$0xff]
  %v1518 = vld [vmem:[%s5 + $0xc8] sm:$0xff]
  %v1519 = vld [vmem:[%s5 + $0xd0] sm:$0xff]
  %v1520 = vld [vmem:[%s5 + $0xd8] sm:$0xff]
  %v1521 = vld [vmem:[%s5 + $0xe0] sm:$0xff]
  %v1522 = vld [vmem:[%s5 + $0xe8] sm:$0xff]
  %v1523 = vld [vmem:[%s5 + $0xf0] sm:$0xff]
  %v1524 = vld [vmem:[%s5 + $0xf8] sm:$0xff]
  %v1526 = vperm.slane %v98, 0
  %v1527 = vperm.slane %v98, 1
  %v1528 = vperm.slane %v98, 2
  %v1529 = vperm.slane %v98, 3
  %v1566 = vunpack.c.l.b16 %v1493
  %v1567 = vunpack.c.h.b16 %v1493
  %v1568 = vunpack.c.l.b16 %v1494
  %v1569 = vunpack.c.h.b16 %v1494
  %v1570 = vunpack.c.l.b16 %v1495
  %v1571 = vunpack.c.h.b16 %v1495
  %v1572 = vunpack.c.l.b16 %v1496
  %v1573 = vunpack.c.h.b16 %v1496
  %v1574 = vunpack.c.l.b16 %v1497
  %v1575 = vunpack.c.h.b16 %v1497
  %v1576 = vunpack.c.l.b16 %v1498
  %v1577 = vunpack.c.h.b16 %v1498
  %v1578 = vunpack.c.l.b16 %v1499
  %v1579 = vunpack.c.h.b16 %v1499
  %v1580 = vunpack.c.l.b16 %v1500
  %v1581 = vunpack.c.h.b16 %v1500
  %v1582 = vunpack.c.l.b16 %v1501
  %v1583 = vunpack.c.h.b16 %v1501
  %v1584 = vunpack.c.l.b16 %v1502
  %v1585 = vunpack.c.h.b16 %v1502
  %v1586 = vunpack.c.l.b16 %v1503
  %v1587 = vunpack.c.h.b16 %v1503
  %v1588 = vunpack.c.l.b16 %v1504
  %v1589 = vunpack.c.h.b16 %v1504
  %v1590 = vunpack.c.l.b16 %v1505
  %v1591 = vunpack.c.h.b16 %v1505
  %v1592 = vunpack.c.l.b16 %v1506
  %v1593 = vunpack.c.h.b16 %v1506
  %v1594 = vunpack.c.l.b16 %v1507
  %v1595 = vunpack.c.h.b16 %v1507
  %v1596 = vunpack.c.l.b16 %v1508
  %v1597 = vunpack.c.h.b16 %v1508
  %v1598 = vunpack.c.l.b16 %v1509
  %v1599 = vunpack.c.h.b16 %v1509
  %v1600 = vunpack.c.l.b16 %v1510
  %v1601 = vunpack.c.h.b16 %v1510
  %v1602 = vunpack.c.l.b16 %v1511
  %v1603 = vunpack.c.h.b16 %v1511
  %v1604 = vunpack.c.l.b16 %v1512
  %v1605 = vunpack.c.h.b16 %v1512
  %v1606 = vunpack.c.l.b16 %v1513
  %v1607 = vunpack.c.h.b16 %v1513
  %v1608 = vunpack.c.l.b16 %v1514
  %v1609 = vunpack.c.h.b16 %v1514
  %v1610 = vunpack.c.l.b16 %v1515
  %v1611 = vunpack.c.h.b16 %v1515
  %v1612 = vunpack.c.l.b16 %v1516
  %v1613 = vunpack.c.h.b16 %v1516
  %v1614 = vunpack.c.l.b16 %v1517
  %v1615 = vunpack.c.h.b16 %v1517
  %v1616 = vunpack.c.l.b16 %v1518
  %v1617 = vunpack.c.h.b16 %v1518
  %v1618 = vunpack.c.l.b16 %v1519
  %v1619 = vunpack.c.h.b16 %v1519
  %v1620 = vunpack.c.l.b16 %v1520
  %v1621 = vunpack.c.h.b16 %v1520
  %v1622 = vunpack.c.l.b16 %v1521
  %v1623 = vunpack.c.h.b16 %v1521
  %v1624 = vunpack.c.l.b16 %v1522
  %v1625 = vunpack.c.h.b16 %v1522
  %v1626 = vunpack.c.l.b16 %v1523
  %v1627 = vunpack.c.h.b16 %v1523
  %v1628 = vunpack.c.l.b16 %v1524
  %v1629 = vunpack.c.h.b16 %v1524
  %v1630 = vpack.c.b16 %v1570, %v1566
  %v1631 = vpack.c.b16 %v1571, %v1567
  %v1632 = vpack.c.b16 %v1572, %v1568
  %v1633 = vpack.c.b16 %v1573, %v1569
  %v1634 = vpack.c.b16 %v1578, %v1574
  %v1635 = vpack.c.b16 %v1579, %v1575
  %v1636 = vpack.c.b16 %v1580, %v1576
  %v1637 = vpack.c.b16 %v1581, %v1577
  %v1638 = vpack.c.b16 %v1586, %v1582
  %v1639 = vpack.c.b16 %v1587, %v1583
  %v1640 = vpack.c.b16 %v1588, %v1584
  %v1641 = vpack.c.b16 %v1589, %v1585
  %v1642 = vpack.c.b16 %v1594, %v1590
  %v1643 = vpack.c.b16 %v1595, %v1591
  %v1644 = vpack.c.b16 %v1596, %v1592
  %v1645 = vpack.c.b16 %v1597, %v1593
  %v1646 = vpack.c.b16 %v1602, %v1598
  %v1647 = vpack.c.b16 %v1603, %v1599
  %v1648 = vpack.c.b16 %v1604, %v1600
  %v1649 = vpack.c.b16 %v1605, %v1601
  %v1650 = vpack.c.b16 %v1610, %v1606
  %v1651 = vpack.c.b16 %v1611, %v1607
  %v1652 = vpack.c.b16 %v1612, %v1608
  %v1653 = vpack.c.b16 %v1613, %v1609
  %v1654 = vpack.c.b16 %v1618, %v1614
  %v1655 = vpack.c.b16 %v1619, %v1615
  %v1656 = vpack.c.b16 %v1620, %v1616
  %v1657 = vpack.c.b16 %v1621, %v1617
  %v1658 = vpack.c.b16 %v1626, %v1622
  %v1659 = vpack.c.b16 %v1627, %v1623
  %v1660 = vpack.c.b16 %v1628, %v1624
  %v1661 = vpack.c.b16 %v1629, %v1625
  %1694 = vmatpush.bf16.msra.mxu0 %v1658
  %1695 = vmatpush.bf16.msra.mxu0 %v1654
  %1696 = vmatpush.bf16.msra.mxu0 %v1650
  %1697 = vmatpush.bf16.msra.mxu0 %v1646
  %1698 = vmatpush.bf16.msra.mxu0 %v1642
  %1699 = vmatpush.bf16.msra.mxu0 %v1638
  %1700 = vmatpush.bf16.msra.mxu0 %v1634
  %1701 = vmatpush.bf16.msra.mxu0 %v1630
  %1702 = vmatmul.bf16.gmra.mxu0 %v1489
  %v1703 = vpop.f32.mrf.mxu0
  %v1704 = vadd.f32 %v1526, %v1703
  %v1705 = vpop.f32.mrf.mxu0
  %v1706 = vadd.f32 %v1526, %v1705
  %1707 = vmatmul.bf16.gmra.mxu0 %v1490
  %v1708 = vpop.f32.mrf.mxu0
  %v1709 = vadd.f32 %v1526, %v1708
  %v1710 = vpop.f32.mrf.mxu0
  %v1711 = vadd.f32 %v1526, %v1710
  %1712 = vmatmul.bf16.gmra.mxu0 %v1491
  %v1713 = vpop.f32.mrf.mxu0
  %v1714 = vadd.f32 %v1526, %v1713
  %v1715 = vpop.f32.mrf.mxu0
  %v1716 = vadd.f32 %v1526, %v1715
  %1717 = vmatmul.bf16.gmra.mxu0 %v1492
  %v1718 = vpop.f32.mrf.mxu0
  %v1719 = vadd.f32 %v1526, %v1718
  %v1720 = vpop.f32.mrf.mxu0
  %v1721 = vadd.f32 %v1526, %v1720
  %1722 = vdwg.mxu0
  %1723 = vmatpush.bf16.msra.mxu0 %v1659
  %1724 = vmatpush.bf16.msra.mxu0 %v1655
  %1725 = vmatpush.bf16.msra.mxu0 %v1651
  %1726 = vmatpush.bf16.msra.mxu0 %v1647
  %1727 = vmatpush.bf16.msra.mxu0 %v1643
  %1728 = vmatpush.bf16.msra.mxu0 %v1639
  %1729 = vmatpush.bf16.msra.mxu0 %v1635
  %1730 = vmatpush.bf16.msra.mxu0 %v1631
  %1731 = vmatmul.bf16.gmra.mxu0 %v1489
  %v1732 = vpop.f32.mrf.mxu0
  %v1733 = vadd.f32 %v1527, %v1732
  %v1734 = vpop.f32.mrf.mxu0
  %v1735 = vadd.f32 %v1527, %v1734
  %1736 = vmatmul.bf16.gmra.mxu0 %v1490
  %v1737 = vpop.f32.mrf.mxu0
  %v1738 = vadd.f32 %v1527, %v1737
  %v1739 = vpop.f32.mrf.mxu0
  %v1740 = vadd.f32 %v1527, %v1739
  %1741 = vmatmul.bf16.gmra.mxu0 %v1491
  %v1742 = vpop.f32.mrf.mxu0
  %v1743 = vadd.f32 %v1527, %v1742
  %v1744 = vpop.f32.mrf.mxu0
  %v1745 = vadd.f32 %v1527, %v1744
  %1746 = vmatmul.bf16.gmra.mxu0 %v1492
  %v1747 = vpop.f32.mrf.mxu0
  %v1748 = vadd.f32 %v1527, %v1747
  %v1749 = vpop.f32.mrf.mxu0
  %v1750 = vadd.f32 %v1527, %v1749
  %1751 = vdwg.mxu0
  %1752 = vmatpush.bf16.msra.mxu0 %v1660
  %1753 = vmatpush.bf16.msra.mxu0 %v1656
  %1754 = vmatpush.bf16.msra.mxu0 %v1652
  %1755 = vmatpush.bf16.msra.mxu0 %v1648
  %1756 = vmatpush.bf16.msra.mxu0 %v1644
  %1757 = vmatpush.bf16.msra.mxu0 %v1640
  %1758 = vmatpush.bf16.msra.mxu0 %v1636
  %1759 = vmatpush.bf16.msra.mxu0 %v1632
  %1760 = vmatmul.bf16.gmra.mxu0 %v1489
  %v1761 = vpop.f32.mrf.mxu0
  %v1762 = vadd.f32 %v1528, %v1761
  %v1763 = vpop.f32.mrf.mxu0
  %v1764 = vadd.f32 %v1528, %v1763
  %1765 = vmatmul.bf16.gmra.mxu0 %v1490
  %v1766 = vpop.f32.mrf.mxu0
  %v1767 = vadd.f32 %v1528, %v1766
  %v1768 = vpop.f32.mrf.mxu0
  %v1769 = vadd.f32 %v1528, %v1768
  %1770 = vmatmul.bf16.gmra.mxu0 %v1491
  %v1771 = vpop.f32.mrf.mxu0
  %v1772 = vadd.f32 %v1528, %v1771
  %v1773 = vpop.f32.mrf.mxu0
  %v1774 = vadd.f32 %v1528, %v1773
  %1775 = vmatmul.bf16.gmra.mxu0 %v1492
  %v1776 = vpop.f32.mrf.mxu0
  %v1777 = vadd.f32 %v1528, %v1776
  %v1778 = vpop.f32.mrf.mxu0
  %v1779 = vadd.f32 %v1528, %v1778
  %1780 = vdwg.mxu0
  %1781 = vmatpush.bf16.msra.mxu0 %v1661
  %1782 = vmatpush.bf16.msra.mxu0 %v1657
  %1783 = vmatpush.bf16.msra.mxu0 %v1653
  %1784 = vmatpush.bf16.msra.mxu0 %v1649
  %1785 = vmatpush.bf16.msra.mxu0 %v1645
  %1786 = vmatpush.bf16.msra.mxu0 %v1641
  %1787 = vmatpush.bf16.msra.mxu0 %v1637
  %1788 = vmatpush.bf16.msra.mxu0 %v1633
  %1789 = vmatmul.bf16.gmra.mxu0 %v1489
  %v1790 = vpop.f32.mrf.mxu0
  %v1791 = vadd.f32 %v1529, %v1790
  %v1792 = vpop.f32.mrf.mxu0
  %v1793 = vadd.f32 %v1529, %v1792
  %1794 = vmatmul.bf16.gmra.mxu0 %v1490
  %v1795 = vpop.f32.mrf.mxu0
  %v1796 = vadd.f32 %v1529, %v1795
  %v1797 = vpop.f32.mrf.mxu0
  %v1798 = vadd.f32 %v1529, %v1797
  %1799 = vmatmul.bf16.gmra.mxu0 %v1491
  %v1800 = vpop.f32.mrf.mxu0
  %v1801 = vadd.f32 %v1529, %v1800
  %v1802 = vpop.f32.mrf.mxu0
  %v1803 = vadd.f32 %v1529, %v1802
  %1804 = vmatmul.bf16.gmra.mxu0 %v1492
  %v1805 = vpop.f32.mrf.mxu0
  %v1806 = vadd.f32 %v1529, %v1805
  %v1807 = vpop.f32.mrf.mxu0
  %v1808 = vadd.f32 %v1529, %v1807
  %1809 = vdwg.mxu0
  %v1842 = vunpack.c.l.b16 %v66
  %v1843 = vunpack.c.h.b16 %v66
  %v1844 = vunpack.c.l.b16 %v67
  %v1845 = vunpack.c.h.b16 %v67
  %v1846 = vunpack.c.l.b16 %v68
  %v1847 = vunpack.c.h.b16 %v68
  %v1848 = vunpack.c.l.b16 %v69
  %v1849 = vunpack.c.h.b16 %v69
  %v1850 = vunpack.c.l.b16 %v70
  %v1851 = vunpack.c.h.b16 %v70
  %v1852 = vunpack.c.l.b16 %v71
  %v1853 = vunpack.c.h.b16 %v71
  %v1854 = vunpack.c.l.b16 %v72
  %v1855 = vunpack.c.h.b16 %v72
  %v1856 = vunpack.c.l.b16 %v73
  %v1857 = vunpack.c.h.b16 %v73
  %v1858 = vunpack.c.l.b16 %v74
  %v1859 = vunpack.c.h.b16 %v74
  %v1860 = vunpack.c.l.b16 %v75
  %v1861 = vunpack.c.h.b16 %v75
  %v1862 = vunpack.c.l.b16 %v76
  %v1863 = vunpack.c.h.b16 %v76
  %v1864 = vunpack.c.l.b16 %v77
  %v1865 = vunpack.c.h.b16 %v77
  %v1866 = vunpack.c.l.b16 %v78
  %v1867 = vunpack.c.h.b16 %v78
  %v1868 = vunpack.c.l.b16 %v79
  %v1869 = vunpack.c.h.b16 %v79
  %v1870 = vunpack.c.l.b16 %v80
  %v1871 = vunpack.c.h.b16 %v80
  %v1872 = vunpack.c.l.b16 %v81
  %v1873 = vunpack.c.h.b16 %v81
  %v1874 = vunpack.c.l.b16 %v82
  %v1875 = vunpack.c.h.b16 %v82
  %v1876 = vunpack.c.l.b16 %v83
  %v1877 = vunpack.c.h.b16 %v83
  %v1878 = vunpack.c.l.b16 %v84
  %v1879 = vunpack.c.h.b16 %v84
  %v1880 = vunpack.c.l.b16 %v85
  %v1881 = vunpack.c.h.b16 %v85
  %v1882 = vunpack.c.l.b16 %v86
  %v1883 = vunpack.c.h.b16 %v86
  %v1884 = vunpack.c.l.b16 %v87
  %v1885 = vunpack.c.h.b16 %v87
  %v1886 = vunpack.c.l.b16 %v88
  %v1887 = vunpack.c.h.b16 %v88
  %v1888 = vunpack.c.l.b16 %v89
  %v1889 = vunpack.c.h.b16 %v89
  %v1890 = vunpack.c.l.b16 %v90
  %v1891 = vunpack.c.h.b16 %v90
  %v1892 = vunpack.c.l.b16 %v91
  %v1893 = vunpack.c.h.b16 %v91
  %v1894 = vunpack.c.l.b16 %v92
  %v1895 = vunpack.c.h.b16 %v92
  %v1896 = vunpack.c.l.b16 %v93
  %v1897 = vunpack.c.h.b16 %v93
  %v1898 = vunpack.c.l.b16 %v94
  %v1899 = vunpack.c.h.b16 %v94
  %v1900 = vunpack.c.l.b16 %v95
  %v1901 = vunpack.c.h.b16 %v95
  %v1902 = vunpack.c.l.b16 %v96
  %v1903 = vunpack.c.h.b16 %v96
  %v1904 = vunpack.c.l.b16 %v97
  %v1905 = vunpack.c.h.b16 %v97
  %v1906 = vpack.c.b16 %v1846, %v1842
  %v1907 = vpack.c.b16 %v1847, %v1843
  %v1908 = vpack.c.b16 %v1848, %v1844
  %v1909 = vpack.c.b16 %v1849, %v1845
  %v1910 = vpack.c.b16 %v1854, %v1850
  %v1911 = vpack.c.b16 %v1855, %v1851
  %v1912 = vpack.c.b16 %v1856, %v1852
  %v1913 = vpack.c.b16 %v1857, %v1853
  %v1914 = vpack.c.b16 %v1862, %v1858
  %v1915 = vpack.c.b16 %v1863, %v1859
  %v1916 = vpack.c.b16 %v1864, %v1860
  %v1917 = vpack.c.b16 %v1865, %v1861
  %v1918 = vpack.c.b16 %v1870, %v1866
  %v1919 = vpack.c.b16 %v1871, %v1867
  %v1920 = vpack.c.b16 %v1872, %v1868
  %v1921 = vpack.c.b16 %v1873, %v1869
  %v1922 = vpack.c.b16 %v1878, %v1874
  %v1923 = vpack.c.b16 %v1879, %v1875
  %v1924 = vpack.c.b16 %v1880, %v1876
  %v1925 = vpack.c.b16 %v1881, %v1877
  %v1926 = vpack.c.b16 %v1886, %v1882
  %v1927 = vpack.c.b16 %v1887, %v1883
  %v1928 = vpack.c.b16 %v1888, %v1884
  %v1929 = vpack.c.b16 %v1889, %v1885
  %v1930 = vpack.c.b16 %v1894, %v1890
  %v1931 = vpack.c.b16 %v1895, %v1891
  %v1932 = vpack.c.b16 %v1896, %v1892
  %v1933 = vpack.c.b16 %v1897, %v1893
  %v1934 = vpack.c.b16 %v1902, %v1898
  %v1935 = vpack.c.b16 %v1903, %v1899
  %v1936 = vpack.c.b16 %v1904, %v1900
  %v1937 = vpack.c.b16 %v1905, %v1901
  %1970 = vmatpush.bf16.msra.mxu0 %v1934
  %1971 = vmatpush.bf16.msra.mxu0 %v1930
  %1972 = vmatpush.bf16.msra.mxu0 %v1926
  %1973 = vmatpush.bf16.msra.mxu0 %v1922
  %1974 = vmatpush.bf16.msra.mxu0 %v1918
  %1975 = vmatpush.bf16.msra.mxu0 %v1914
  %1976 = vmatpush.bf16.msra.mxu0 %v1910
  %1977 = vmatpush.bf16.msra.mxu0 %v1906
  %1978 = vmatmul.bf16.gmra.mxu0 0
  %v1979 = vpop.f32.mrf.mxu0
  %v1980 = vadd.f32 0.0, %v1979
  %v1981 = vpop.f32.mrf.mxu0
  %1982 = vdwg.mxu0
  %1983 = vmatpush.bf16.msra.mxu0 %v1935
  %1984 = vmatpush.bf16.msra.mxu0 %v1931
  %1985 = vmatpush.bf16.msra.mxu0 %v1927
  %1986 = vmatpush.bf16.msra.mxu0 %v1923
  %1987 = vmatpush.bf16.msra.mxu0 %v1919
  %1988 = vmatpush.bf16.msra.mxu0 %v1915
  %1989 = vmatpush.bf16.msra.mxu0 %v1911
  %1990 = vmatpush.bf16.msra.mxu0 %v1907
  %1991 = vmatmul.bf16.gmra.mxu0 0
  %v1992 = vpop.f32.mrf.mxu0
  %v1993 = vadd.f32 0.0, %v1992
  %v1994 = vpop.f32.mrf.mxu0
  %1995 = vdwg.mxu0
  %1996 = vmatpush.bf16.msra.mxu0 %v1936
  %1997 = vmatpush.bf16.msra.mxu0 %v1932
  %1998 = vmatpush.bf16.msra.mxu0 %v1928
  %1999 = vmatpush.bf16.msra.mxu0 %v1924
  %2000 = vmatpush.bf16.msra.mxu0 %v1920
  %2001 = vmatpush.bf16.msra.mxu0 %v1916
  %2002 = vmatpush.bf16.msra.mxu0 %v1912
  %2003 = vmatpush.bf16.msra.mxu0 %v1908
  %2004 = vmatmul.bf16.gmra.mxu0 0
  %v2005 = vpop.f32.mrf.mxu0
  %v2006 = vadd.f32 0.0, %v2005
  %v2007 = vpop.f32.mrf.mxu0
  %2008 = vdwg.mxu0
  %2009 = vmatpush.bf16.msra.mxu0 %v1937
  %2010 = vmatpush.bf16.msra.mxu0 %v1933
  %2011 = vmatpush.bf16.msra.mxu0 %v1929
  %2012 = vmatpush.bf16.msra.mxu0 %v1925
  %2013 = vmatpush.bf16.msra.mxu0 %v1921
  %2014 = vmatpush.bf16.msra.mxu0 %v1917
  %2015 = vmatpush.bf16.msra.mxu0 %v1913
  %2016 = vmatpush.bf16.msra.mxu0 %v1909
  %2017 = vmatmul.bf16.gmra.mxu0 0
  %v2018 = vpop.f32.mrf.mxu0
  %v2019 = vadd.f32 0.0, %v2018
  %v2020 = vpop.f32.mrf.mxu0
  %2021 = vdwg.mxu0
  %v2022 = vadd.f32 %v1704, %v1980
  %v2023 = vadd.f32 %v1733, %v1993
  %v2024 = vadd.f32 %v1762, %v2006
  %v2025 = vadd.f32 %v1791, %v2019
  %v2026 = vxor.u32 %v2022, 2147483648
  %v2027 = vmul.f32 %v2026, 1.442695
  %v2028 = vpow.pop %v2027
  %v2029 = vadd.f32 %v2028, 1.0
  %v2030 = vrcp.pop %v2029
  %v2031 = vmul.f32 %v2029, %v2030
  %v2032 = vsub.f32 1.0, %v2031
  %v2033 = vmul.f32 %v2030, %v2032
  %v2034 = vadd.f32 %v2030, %v2033
  %vm2035 = vweird.f32 %v2029
  %vm2036 = vweird.f32 %v2030
  %vm2037 = vmor %vm2035, %vm2036
  %v2038 = vsel %vm2037, %v2030, %v2034
  %v2039 = vand.u32 2147483647, %v2029
  %vm2040 = vcmp.eq.f32.partialorder %v2039, 8.507059e+37
  %v2041 = vand.u32 %v2029, 2147483648
  %v2042 = vor.u32 1.1754944e-38, %v2041
  %v2043 = vsel %vm2040, %v2042, %v2038
  %v2044 = vmul.f32 1.0, %v2043
  %v2045 = vxor.u32 %v2023, 2147483648
  %v2046 = vmul.f32 %v2045, 1.442695
  %v2047 = vpow.pop %v2046
  %v2048 = vadd.f32 %v2047, 1.0
  %v2049 = vrcp.pop %v2048
  %v2050 = vmul.f32 %v2048, %v2049
  %v2051 = vsub.f32 1.0, %v2050
  %v2052 = vmul.f32 %v2049, %v2051
  %v2053 = vadd.f32 %v2049, %v2052
  %vm2054 = vweird.f32 %v2048
  %vm2055 = vweird.f32 %v2049
  %vm2056 = vmor %vm2054, %vm2055
  %v2057 = vsel %vm2056, %v2049, %v2053
  %v2058 = vand.u32 2147483647, %v2048
  %vm2059 = vcmp.eq.f32.partialorder %v2058, 8.507059e+37
  %v2060 = vand.u32 %v2048, 2147483648
  %v2061 = vor.u32 1.1754944e-38, %v2060
  %v2062 = vsel %vm2059, %v2061, %v2057
  %v2063 = vmul.f32 1.0, %v2062
  %v2064 = vtanh.pop %v2024
  %v2065 = vxor.u32 %v2025, 2147483648
  %v2066 = vmul.f32 %v2065, 1.442695
  %v2067 = vpow.pop %v2066
  %v2068 = vadd.f32 %v2067, 1.0
  %v2069 = vrcp.pop %v2068
  %v2070 = vmul.f32 %v2068, %v2069
  %v2071 = vsub.f32 1.0, %v2070
  %v2072 = vmul.f32 %v2069, %v2071
  %v2073 = vadd.f32 %v2069, %v2072
  %vm2074 = vweird.f32 %v2068
  %vm2075 = vweird.f32 %v2069
  %vm2076 = vmor %vm2074, %vm2075
  %v2077 = vsel %vm2076, %v2069, %v2073
  %v2078 = vand.u32 2147483647, %v2068
  %vm2079 = vcmp.eq.f32.partialorder %v2078, 8.507059e+37
  %v2080 = vand.u32 %v2068, 2147483648
  %v2081 = vor.u32 1.1754944e-38, %v2080
  %v2082 = vsel %vm2079, %v2081, %v2077
  %v2083 = vmul.f32 1.0, %v2082
  %v2084 = vmul.f32 %v2063, 0.0
  %v2085 = vmul.f32 %v2044, %v2064
  %v2086 = vadd.f32 %v2084, %v2085
  %v2087 = vtanh.pop %v2086
  %v2088 = vmul.f32 %v2083, %v2087
  %v2089 = vsel %vm574, %v2088, 0.0
  %v2090 = vsel %vm574, %v2086, 0.0
  %2091 = vst [vmem:[%s8] sm:$0xff] %v2089
  %v2092 = vpack.c.bf16 %v2089, %v2089
  %2093 = vmatpush.bf16.msra.mxu0 %v1934
  %2094 = vmatpush.bf16.msra.mxu0 %v1930
  %2095 = vmatpush.bf16.msra.mxu0 %v1926
  %2096 = vmatpush.bf16.msra.mxu0 %v1922
  %2097 = vmatpush.bf16.msra.mxu0 %v1918
  %2098 = vmatpush.bf16.msra.mxu0 %v1914
  %2099 = vmatpush.bf16.msra.mxu0 %v1910
  %2100 = vmatpush.bf16.msra.mxu0 %v1906
  %2101 = vmatmul.bf16.gmra.mxu0 %v2092
  %v2102 = vpop.f32.mrf.mxu0
  %v2103 = vadd.f32 0.0, %v2102
  %v2104 = vpop.f32.mrf.mxu0
  %2105 = vdwg.mxu0
  %2106 = vmatpush.bf16.msra.mxu0 %v1935
  %2107 = vmatpush.bf16.msra.mxu0 %v1931
  %2108 = vmatpush.bf16.msra.mxu0 %v1927
  %2109 = vmatpush.bf16.msra.mxu0 %v1923
  %2110 = vmatpush.bf16.msra.mxu0 %v1919
  %2111 = vmatpush.bf16.msra.mxu0 %v1915
  %2112 = vmatpush.bf16.msra.mxu0 %v1911
  %2113 = vmatpush.bf16.msra.mxu0 %v1907
  %2114 = vmatmul.bf16.gmra.mxu0 %v2092
  %v2115 = vpop.f32.mrf.mxu0
  %v2116 = vadd.f32 0.0, %v2115
  %v2117 = vpop.f32.mrf.mxu0
  %2118 = vdwg.mxu0
  %2119 = vmatpush.bf16.msra.mxu0 %v1936
  %2120 = vmatpush.bf16.msra.mxu0 %v1932
  %2121 = vmatpush.bf16.msra.mxu0 %v1928
  %2122 = vmatpush.bf16.msra.mxu0 %v1924
  %2123 = vmatpush.bf16.msra.mxu0 %v1920
  %2124 = vmatpush.bf16.msra.mxu0 %v1916
  %2125 = vmatpush.bf16.msra.mxu0 %v1912
  %2126 = vmatpush.bf16.msra.mxu0 %v1908
  %2127 = vmatmul.bf16.gmra.mxu0 %v2092
  %v2128 = vpop.f32.mrf.mxu0
  %v2129 = vadd.f32 0.0, %v2128
  %v2130 = vpop.f32.mrf.mxu0
  %2131 = vdwg.mxu0
  %2132 = vmatpush.bf16.msra.mxu0 %v1937
  %2133 = vmatpush.bf16.msra.mxu0 %v1933
  %2134 = vmatpush.bf16.msra.mxu0 %v1929
  %2135 = vmatpush.bf16.msra.mxu0 %v1925
  %2136 = vmatpush.bf16.msra.mxu0 %v1921
  %2137 = vmatpush.bf16.msra.mxu0 %v1917
  %2138 = vmatpush.bf16.msra.mxu0 %v1913
  %2139 = vmatpush.bf16.msra.mxu0 %v1909
  %2140 = vmatmul.bf16.gmra.mxu0 %v2092
  %v2141 = vpop.f32.mrf.mxu0
  %v2142 = vadd.f32 0.0, %v2141
  %v2143 = vpop.f32.mrf.mxu0
  %2144 = vdwg.mxu0
  %v2145 = vadd.f32 %v1706, %v2103
  %v2146 = vadd.f32 %v1735, %v2116
  %v2147 = vadd.f32 %v1764, %v2129
  %v2148 = vadd.f32 %v1793, %v2142
  %v2149 = vxor.u32 %v2145, 2147483648
  %v2150 = vmul.f32 %v2149, 1.442695
  %v2151 = vpow.pop %v2150
  %v2152 = vadd.f32 %v2151, 1.0
  %v2153 = vrcp.pop %v2152
  %v2154 = vmul.f32 %v2152, %v2153
  %v2155 = vsub.f32 1.0, %v2154
  %v2156 = vmul.f32 %v2153, %v2155
  %v2157 = vadd.f32 %v2153, %v2156
  %vm2158 = vweird.f32 %v2152
  %vm2159 = vweird.f32 %v2153
  %vm2160 = vmor %vm2158, %vm2159
  %v2161 = vsel %vm2160, %v2153, %v2157
  %v2162 = vand.u32 2147483647, %v2152
  %vm2163 = vcmp.eq.f32.partialorder %v2162, 8.507059e+37
  %v2164 = vand.u32 %v2152, 2147483648
  %v2165 = vor.u32 1.1754944e-38, %v2164
  %v2166 = vsel %vm2163, %v2165, %v2161
  %v2167 = vmul.f32 1.0, %v2166
  %v2168 = vxor.u32 %v2146, 2147483648
  %v2169 = vmul.f32 %v2168, 1.442695
  %v2170 = vpow.pop %v2169
  %v2171 = vadd.f32 %v2170, 1.0
  %v2172 = vrcp.pop %v2171
  %v2173 = vmul.f32 %v2171, %v2172
  %v2174 = vsub.f32 1.0, %v2173
  %v2175 = vmul.f32 %v2172, %v2174
  %v2176 = vadd.f32 %v2172, %v2175
  %vm2177 = vweird.f32 %v2171
  %vm2178 = vweird.f32 %v2172
  %vm2179 = vmor %vm2177, %vm2178
  %v2180 = vsel %vm2179, %v2172, %v2176
  %v2181 = vand.u32 2147483647, %v2171
  %vm2182 = vcmp.eq.f32.partialorder %v2181, 8.507059e+37
  %v2183 = vand.u32 %v2171, 2147483648
  %v2184 = vor.u32 1.1754944e-38, %v2183
  %v2185 = vsel %vm2182, %v2184, %v2180
  %v2186 = vmul.f32 1.0, %v2185
  %v2187 = vtanh.pop %v2147
  %v2188 = vxor.u32 %v2148, 2147483648
  %v2189 = vmul.f32 %v2188, 1.442695
  %v2190 = vpow.pop %v2189
  %v2191 = vadd.f32 %v2190, 1.0
  %v2192 = vrcp.pop %v2191
  %v2193 = vmul.f32 %v2191, %v2192
  %v2194 = vsub.f32 1.0, %v2193
  %v2195 = vmul.f32 %v2192, %v2194
  %v2196 = vadd.f32 %v2192, %v2195
  %vm2197 = vweird.f32 %v2191
  %vm2198 = vweird.f32 %v2192
  %vm2199 = vmor %vm2197, %vm2198
  %v2200 = vsel %vm2199, %v2192, %v2196
  %v2201 = vand.u32 2147483647, %v2191
  %vm2202 = vcmp.eq.f32.partialorder %v2201, 8.507059e+37
  %v2203 = vand.u32 %v2191, 2147483648
  %v2204 = vor.u32 1.1754944e-38, %v2203
  %v2205 = vsel %vm2202, %v2204, %v2200
  %v2206 = vmul.f32 1.0, %v2205
  %v2207 = vmul.f32 %v2186, %v2090
  %v2208 = vmul.f32 %v2167, %v2187
  %v2209 = vadd.f32 %v2207, %v2208
  %v2210 = vtanh.pop %v2209
  %v2211 = vmul.f32 %v2206, %v2210
  %v2212 = vsel %vm703, %v2211, %v2089
  %v2213 = vsel %vm703, %v2209, %v2090
  %v2214 = vsel %vm703, %v2211, 0.0
  %2215 = vst [vmem:[%s8 + $0x8] sm:$0xff] %v2214
  %v2216 = vpack.c.bf16 %v2212, %v2212
  %2217 = vmatpush.bf16.msra.mxu0 %v1934
  %2218 = vmatpush.bf16.msra.mxu0 %v1930
  %2219 = vmatpush.bf16.msra.mxu0 %v1926
  %2220 = vmatpush.bf16.msra.mxu0 %v1922
  %2221 = vmatpush.bf16.msra.mxu0 %v1918
  %2222 = vmatpush.bf16.msra.mxu0 %v1914
  %2223 = vmatpush.bf16.msra.mxu0 %v1910
  %2224 = vmatpush.bf16.msra.mxu0 %v1906
  %2225 = vmatmul.bf16.gmra.mxu0 %v2216
  %v2226 = vpop.f32.mrf.mxu0
  %v2227 = vadd.f32 0.0, %v2226
  %v2228 = vpop.f32.mrf.mxu0
  %2229 = vdwg.mxu0
  %2230 = vmatpush.bf16.msra.mxu0 %v1935
  %2231 = vmatpush.bf16.msra.mxu0 %v1931
  %2232 = vmatpush.bf16.msra.mxu0 %v1927
  %2233 = vmatpush.bf16.msra.mxu0 %v1923
  %2234 = vmatpush.bf16.msra.mxu0 %v1919
  %2235 = vmatpush.bf16.msra.mxu0 %v1915
  %2236 = vmatpush.bf16.msra.mxu0 %v1911
  %2237 = vmatpush.bf16.msra.mxu0 %v1907
  %2238 = vmatmul.bf16.gmra.mxu0 %v2216
  %v2239 = vpop.f32.mrf.mxu0
  %v2240 = vadd.f32 0.0, %v2239
  %v2241 = vpop.f32.mrf.mxu0
  %2242 = vdwg.mxu0
  %2243 = vmatpush.bf16.msra.mxu0 %v1936
  %2244 = vmatpush.bf16.msra.mxu0 %v1932
  %2245 = vmatpush.bf16.msra.mxu0 %v1928
  %2246 = vmatpush.bf16.msra.mxu0 %v1924
  %2247 = vmatpush.bf16.msra.mxu0 %v1920
  %2248 = vmatpush.bf16.msra.mxu0 %v1916
  %2249 = vmatpush.bf16.msra.mxu0 %v1912
  %2250 = vmatpush.bf16.msra.mxu0 %v1908
  %2251 = vmatmul.bf16.gmra.mxu0 %v2216
  %v2252 = vpop.f32.mrf.mxu0
  %v2253 = vadd.f32 0.0, %v2252
  %v2254 = vpop.f32.mrf.mxu0
  %2255 = vdwg.mxu0
  %2256 = vmatpush.bf16.msra.mxu0 %v1937
  %2257 = vmatpush.bf16.msra.mxu0 %v1933
  %2258 = vmatpush.bf16.msra.mxu0 %v1929
  %2259 = vmatpush.bf16.msra.mxu0 %v1925
  %2260 = vmatpush.bf16.msra.mxu0 %v1921
  %2261 = vmatpush.bf16.msra.mxu0 %v1917
  %2262 = vmatpush.bf16.msra.mxu0 %v1913
  %2263 = vmatpush.bf16.msra.mxu0 %v1909
  %2264 = vmatmul.bf16.gmra.mxu0 %v2216
  %v2265 = vpop.f32.mrf.mxu0
  %v2266 = vadd.f32 0.0, %v2265
  %v2267 = vpop.f32.mrf.mxu0
  %2268 = vdwg.mxu0
  %v2269 = vadd.f32 %v1709, %v2227
  %v2270 = vadd.f32 %v1738, %v2240
  %v2271 = vadd.f32 %v1767, %v2253
  %v2272 = vadd.f32 %v1796, %v2266
  %v2273 = vxor.u32 %v2269, 2147483648
  %v2274 = vmul.f32 %v2273, 1.442695
  %v2275 = vpow.pop %v2274
  %v2276 = vadd.f32 %v2275, 1.0
  %v2277 = vrcp.pop %v2276
  %v2278 = vmul.f32 %v2276, %v2277
  %v2279 = vsub.f32 1.0, %v2278
  %v2280 = vmul.f32 %v2277, %v2279
  %v2281 = vadd.f32 %v2277, %v2280
  %vm2282 = vweird.f32 %v2276
  %vm2283 = vweird.f32 %v2277
  %vm2284 = vmor %vm2282, %vm2283
  %v2285 = vsel %vm2284, %v2277, %v2281
  %v2286 = vand.u32 2147483647, %v2276
  %vm2287 = vcmp.eq.f32.partialorder %v2286, 8.507059e+37
  %v2288 = vand.u32 %v2276, 2147483648
  %v2289 = vor.u32 1.1754944e-38, %v2288
  %v2290 = vsel %vm2287, %v2289, %v2285
  %v2291 = vmul.f32 1.0, %v2290
  %v2292 = vxor.u32 %v2270, 2147483648
  %v2293 = vmul.f32 %v2292, 1.442695
  %v2294 = vpow.pop %v2293
  %v2295 = vadd.f32 %v2294, 1.0
  %v2296 = vrcp.pop %v2295
  %v2297 = vmul.f32 %v2295, %v2296
  %v2298 = vsub.f32 1.0, %v2297
  %v2299 = vmul.f32 %v2296, %v2298
  %v2300 = vadd.f32 %v2296, %v2299
  %vm2301 = vweird.f32 %v2295
  %vm2302 = vweird.f32 %v2296
  %vm2303 = vmor %vm2301, %vm2302
  %v2304 = vsel %vm2303, %v2296, %v2300
  %v2305 = vand.u32 2147483647, %v2295
  %vm2306 = vcmp.eq.f32.partialorder %v2305, 8.507059e+37
  %v2307 = vand.u32 %v2295, 2147483648
  %v2308 = vor.u32 1.1754944e-38, %v2307
  %v2309 = vsel %vm2306, %v2308, %v2304
  %v2310 = vmul.f32 1.0, %v2309
  %v2311 = vtanh.pop %v2271
  %v2312 = vxor.u32 %v2272, 2147483648
  %v2313 = vmul.f32 %v2312, 1.442695
  %v2314 = vpow.pop %v2313
  %v2315 = vadd.f32 %v2314, 1.0
  %v2316 = vrcp.pop %v2315
  %v2317 = vmul.f32 %v2315, %v2316
  %v2318 = vsub.f32 1.0, %v2317
  %v2319 = vmul.f32 %v2316, %v2318
  %v2320 = vadd.f32 %v2316, %v2319
  %vm2321 = vweird.f32 %v2315
  %vm2322 = vweird.f32 %v2316
  %vm2323 = vmor %vm2321, %vm2322
  %v2324 = vsel %vm2323, %v2316, %v2320
  %v2325 = vand.u32 2147483647, %v2315
  %vm2326 = vcmp.eq.f32.partialorder %v2325, 8.507059e+37
  %v2327 = vand.u32 %v2315, 2147483648
  %v2328 = vor.u32 1.1754944e-38, %v2327
  %v2329 = vsel %vm2326, %v2328, %v2324
  %v2330 = vmul.f32 1.0, %v2329
  %v2331 = vmul.f32 %v2310, %v2213
  %v2332 = vmul.f32 %v2291, %v2311
  %v2333 = vadd.f32 %v2331, %v2332
  %v2334 = vtanh.pop %v2333
  %v2335 = vmul.f32 %v2330, %v2334
  %v2336 = vsel %vm832, %v2335, %v2212
  %v2337 = vsel %vm832, %v2333, %v2213
  %v2338 = vsel %vm832, %v2335, 0.0
  %2339 = vst [vmem:[%s8 + $0x10] sm:$0xff] %v2338
  %v2340 = vpack.c.bf16 %v2336, %v2336
  %2341 = vmatpush.bf16.msra.mxu0 %v1934
  %2342 = vmatpush.bf16.msra.mxu0 %v1930
  %2343 = vmatpush.bf16.msra.mxu0 %v1926
  %2344 = vmatpush.bf16.msra.mxu0 %v1922
  %2345 = vmatpush.bf16.msra.mxu0 %v1918
  %2346 = vmatpush.bf16.msra.mxu0 %v1914
  %2347 = vmatpush.bf16.msra.mxu0 %v1910
  %2348 = vmatpush.bf16.msra.mxu0 %v1906
  %2349 = vmatmul.bf16.gmra.mxu0 %v2340
  %v2350 = vpop.f32.mrf.mxu0
  %v2351 = vadd.f32 0.0, %v2350
  %v2352 = vpop.f32.mrf.mxu0
  %2353 = vdwg.mxu0
  %2354 = vmatpush.bf16.msra.mxu0 %v1935
  %2355 = vmatpush.bf16.msra.mxu0 %v1931
  %2356 = vmatpush.bf16.msra.mxu0 %v1927
  %2357 = vmatpush.bf16.msra.mxu0 %v1923
  %2358 = vmatpush.bf16.msra.mxu0 %v1919
  %2359 = vmatpush.bf16.msra.mxu0 %v1915
  %2360 = vmatpush.bf16.msra.mxu0 %v1911
  %2361 = vmatpush.bf16.msra.mxu0 %v1907
  %2362 = vmatmul.bf16.gmra.mxu0 %v2340
  %v2363 = vpop.f32.mrf.mxu0
  %v2364 = vadd.f32 0.0, %v2363
  %v2365 = vpop.f32.mrf.mxu0
  %2366 = vdwg.mxu0
  %2367 = vmatpush.bf16.msra.mxu0 %v1936
  %2368 = vmatpush.bf16.msra.mxu0 %v1932
  %2369 = vmatpush.bf16.msra.mxu0 %v1928
  %2370 = vmatpush.bf16.msra.mxu0 %v1924
  %2371 = vmatpush.bf16.msra.mxu0 %v1920
  %2372 = vmatpush.bf16.msra.mxu0 %v1916
  %2373 = vmatpush.bf16.msra.mxu0 %v1912
  %2374 = vmatpush.bf16.msra.mxu0 %v1908
  %2375 = vmatmul.bf16.gmra.mxu0 %v2340
  %v2376 = vpop.f32.mrf.mxu0
  %v2377 = vadd.f32 0.0, %v2376
  %v2378 = vpop.f32.mrf.mxu0
  %2379 = vdwg.mxu0
  %2380 = vmatpush.bf16.msra.mxu0 %v1937
  %2381 = vmatpush.bf16.msra.mxu0 %v1933
  %2382 = vmatpush.bf16.msra.mxu0 %v1929
  %2383 = vmatpush.bf16.msra.mxu0 %v1925
  %2384 = vmatpush.bf16.msra.mxu0 %v1921
  %2385 = vmatpush.bf16.msra.mxu0 %v1917
  %2386 = vmatpush.bf16.msra.mxu0 %v1913
  %2387 = vmatpush.bf16.msra.mxu0 %v1909
  %2388 = vmatmul.bf16.gmra.mxu0 %v2340
  %v2389 = vpop.f32.mrf.mxu0
  %v2390 = vadd.f32 0.0, %v2389
  %v2391 = vpop.f32.mrf.mxu0
  %2392 = vdwg.mxu0
  %v2393 = vadd.f32 %v1711, %v2351
  %v2394 = vadd.f32 %v1740, %v2364
  %v2395 = vadd.f32 %v1769, %v2377
  %v2396 = vadd.f32 %v1798, %v2390
  %v2397 = vxor.u32 %v2393, 2147483648
  %v2398 = vmul.f32 %v2397, 1.442695
  %v2399 = vpow.pop %v2398
  %v2400 = vadd.f32 %v2399, 1.0
  %v2401 = vrcp.pop %v2400
  %v2402 = vmul.f32 %v2400, %v2401
  %v2403 = vsub.f32 1.0, %v2402
  %v2404 = vmul.f32 %v2401, %v2403
  %v2405 = vadd.f32 %v2401, %v2404
  %vm2406 = vweird.f32 %v2400
  %vm2407 = vweird.f32 %v2401
  %vm2408 = vmor %vm2406, %vm2407
  %v2409 = vsel %vm2408, %v2401, %v2405
  %v2410 = vand.u32 2147483647, %v2400
  %vm2411 = vcmp.eq.f32.partialorder %v2410, 8.507059e+37
  %v2412 = vand.u32 %v2400, 2147483648
  %v2413 = vor.u32 1.1754944e-38, %v2412
  %v2414 = vsel %vm2411, %v2413, %v2409
  %v2415 = vmul.f32 1.0, %v2414
  %v2416 = vxor.u32 %v2394, 2147483648
  %v2417 = vmul.f32 %v2416, 1.442695
  %v2418 = vpow.pop %v2417
  %v2419 = vadd.f32 %v2418, 1.0
  %v2420 = vrcp.pop %v2419
  %v2421 = vmul.f32 %v2419, %v2420
  %v2422 = vsub.f32 1.0, %v2421
  %v2423 = vmul.f32 %v2420, %v2422
  %v2424 = vadd.f32 %v2420, %v2423
  %vm2425 = vweird.f32 %v2419
  %vm2426 = vweird.f32 %v2420
  %vm2427 = vmor %vm2425, %vm2426
  %v2428 = vsel %vm2427, %v2420, %v2424
  %v2429 = vand.u32 2147483647, %v2419
  %vm2430 = vcmp.eq.f32.partialorder %v2429, 8.507059e+37
  %v2431 = vand.u32 %v2419, 2147483648
  %v2432 = vor.u32 1.1754944e-38, %v2431
  %v2433 = vsel %vm2430, %v2432, %v2428
  %v2434 = vmul.f32 1.0, %v2433
  %v2435 = vtanh.pop %v2395
  %v2436 = vxor.u32 %v2396, 2147483648
  %v2437 = vmul.f32 %v2436, 1.442695
  %v2438 = vpow.pop %v2437
  %v2439 = vadd.f32 %v2438, 1.0
  %v2440 = vrcp.pop %v2439
  %v2441 = vmul.f32 %v2439, %v2440
  %v2442 = vsub.f32 1.0, %v2441
  %v2443 = vmul.f32 %v2440, %v2442
  %v2444 = vadd.f32 %v2440, %v2443
  %vm2445 = vweird.f32 %v2439
  %vm2446 = vweird.f32 %v2440
  %vm2447 = vmor %vm2445, %vm2446
  %v2448 = vsel %vm2447, %v2440, %v2444
  %v2449 = vand.u32 2147483647, %v2439
  %vm2450 = vcmp.eq.f32.partialorder %v2449, 8.507059e+37
  %v2451 = vand.u32 %v2439, 2147483648
  %v2452 = vor.u32 1.1754944e-38, %v2451
  %v2453 = vsel %vm2450, %v2452, %v2448
  %v2454 = vmul.f32 1.0, %v2453
  %v2455 = vmul.f32 %v2434, %v2337
  %v2456 = vmul.f32 %v2415, %v2435
  %v2457 = vadd.f32 %v2455, %v2456
  %v2458 = vtanh.pop %v2457
  %v2459 = vmul.f32 %v2454, %v2458
  %v2460 = vsel %vm961, %v2459, %v2336
  %v2461 = vsel %vm961, %v2457, %v2337
  %v2462 = vsel %vm961, %v2459, 0.0
  %2463 = vst [vmem:[%s8 + $0x18] sm:$0xff] %v2462
  %v2464 = vpack.c.bf16 %v2460, %v2460
  %2465 = vmatpush.bf16.msra.mxu0 %v1934
  %2466 = vmatpush.bf16.msra.mxu0 %v1930
  %2467 = vmatpush.bf16.msra.mxu0 %v1926
  %2468 = vmatpush.bf16.msra.mxu0 %v1922
  %2469 = vmatpush.bf16.msra.mxu0 %v1918
  %2470 = vmatpush.bf16.msra.mxu0 %v1914
  %2471 = vmatpush.bf16.msra.mxu0 %v1910
  %2472 = vmatpush.bf16.msra.mxu0 %v1906
  %2473 = vmatmul.bf16.gmra.mxu0 %v2464
  %v2474 = vpop.f32.mrf.mxu0
  %v2475 = vadd.f32 0.0, %v2474
  %v2476 = vpop.f32.mrf.mxu0
  %2477 = vdwg.mxu0
  %2478 = vmatpush.bf16.msra.mxu0 %v1935
  %2479 = vmatpush.bf16.msra.mxu0 %v1931
  %2480 = vmatpush.bf16.msra.mxu0 %v1927
  %2481 = vmatpush.bf16.msra.mxu0 %v1923
  %2482 = vmatpush.bf16.msra.mxu0 %v1919
  %2483 = vmatpush.bf16.msra.mxu0 %v1915
  %2484 = vmatpush.bf16.msra.mxu0 %v1911
  %2485 = vmatpush.bf16.msra.mxu0 %v1907
  %2486 = vmatmul.bf16.gmra.mxu0 %v2464
  %v2487 = vpop.f32.mrf.mxu0
  %v2488 = vadd.f32 0.0, %v2487
  %v2489 = vpop.f32.mrf.mxu0
  %2490 = vdwg.mxu0
  %2491 = vmatpush.bf16.msra.mxu0 %v1936
  %2492 = vmatpush.bf16.msra.mxu0 %v1932
  %2493 = vmatpush.bf16.msra.mxu0 %v1928
  %2494 = vmatpush.bf16.msra.mxu0 %v1924
  %2495 = vmatpush.bf16.msra.mxu0 %v1920
  %2496 = vmatpush.bf16.msra.mxu0 %v1916
  %2497 = vmatpush.bf16.msra.mxu0 %v1912
  %2498 = vmatpush.bf16.msra.mxu0 %v1908
  %2499 = vmatmul.bf16.gmra.mxu0 %v2464
  %v2500 = vpop.f32.mrf.mxu0
  %v2501 = vadd.f32 0.0, %v2500
  %v2502 = vpop.f32.mrf.mxu0
  %2503 = vdwg.mxu0
  %2504 = vmatpush.bf16.msra.mxu0 %v1937
  %2505 = vmatpush.bf16.msra.mxu0 %v1933
  %2506 = vmatpush.bf16.msra.mxu0 %v1929
  %2507 = vmatpush.bf16.msra.mxu0 %v1925
  %2508 = vmatpush.bf16.msra.mxu0 %v1921
  %2509 = vmatpush.bf16.msra.mxu0 %v1917
  %2510 = vmatpush.bf16.msra.mxu0 %v1913
  %2511 = vmatpush.bf16.msra.mxu0 %v1909
  %2512 = vmatmul.bf16.gmra.mxu0 %v2464
  %v2513 = vpop.f32.mrf.mxu0
  %v2514 = vadd.f32 0.0, %v2513
  %v2515 = vpop.f32.mrf.mxu0
  %2516 = vdwg.mxu0
  %v2517 = vadd.f32 %v1714, %v2475
  %v2518 = vadd.f32 %v1743, %v2488
  %v2519 = vadd.f32 %v1772, %v2501
  %v2520 = vadd.f32 %v1801, %v2514
  %v2521 = vxor.u32 %v2517, 2147483648
  %v2522 = vmul.f32 %v2521, 1.442695
  %v2523 = vpow.pop %v2522
  %v2524 = vadd.f32 %v2523, 1.0
  %v2525 = vrcp.pop %v2524
  %v2526 = vmul.f32 %v2524, %v2525
  %v2527 = vsub.f32 1.0, %v2526
  %v2528 = vmul.f32 %v2525, %v2527
  %v2529 = vadd.f32 %v2525, %v2528
  %vm2530 = vweird.f32 %v2524
  %vm2531 = vweird.f32 %v2525
  %vm2532 = vmor %vm2530, %vm2531
  %v2533 = vsel %vm2532, %v2525, %v2529
  %v2534 = vand.u32 2147483647, %v2524
  %vm2535 = vcmp.eq.f32.partialorder %v2534, 8.507059e+37
  %v2536 = vand.u32 %v2524, 2147483648
  %v2537 = vor.u32 1.1754944e-38, %v2536
  %v2538 = vsel %vm2535, %v2537, %v2533
  %v2539 = vmul.f32 1.0, %v2538
  %v2540 = vxor.u32 %v2518, 2147483648
  %v2541 = vmul.f32 %v2540, 1.442695
  %v2542 = vpow.pop %v2541
  %v2543 = vadd.f32 %v2542, 1.0
  %v2544 = vrcp.pop %v2543
  %v2545 = vmul.f32 %v2543, %v2544
  %v2546 = vsub.f32 1.0, %v2545
  %v2547 = vmul.f32 %v2544, %v2546
  %v2548 = vadd.f32 %v2544, %v2547
  %vm2549 = vweird.f32 %v2543
  %vm2550 = vweird.f32 %v2544
  %vm2551 = vmor %vm2549, %vm2550
  %v2552 = vsel %vm2551, %v2544, %v2548
  %v2553 = vand.u32 2147483647, %v2543
  %vm2554 = vcmp.eq.f32.partialorder %v2553, 8.507059e+37
  %v2555 = vand.u32 %v2543, 2147483648
  %v2556 = vor.u32 1.1754944e-38, %v2555
  %v2557 = vsel %vm2554, %v2556, %v2552
  %v2558 = vmul.f32 1.0, %v2557
  %v2559 = vtanh.pop %v2519
  %v2560 = vxor.u32 %v2520, 2147483648
  %v2561 = vmul.f32 %v2560, 1.442695
  %v2562 = vpow.pop %v2561
  %v2563 = vadd.f32 %v2562, 1.0
  %v2564 = vrcp.pop %v2563
  %v2565 = vmul.f32 %v2563, %v2564
  %v2566 = vsub.f32 1.0, %v2565
  %v2567 = vmul.f32 %v2564, %v2566
  %v2568 = vadd.f32 %v2564, %v2567
  %vm2569 = vweird.f32 %v2563
  %vm2570 = vweird.f32 %v2564
  %vm2571 = vmor %vm2569, %vm2570
  %v2572 = vsel %vm2571, %v2564, %v2568
  %v2573 = vand.u32 2147483647, %v2563
  %vm2574 = vcmp.eq.f32.partialorder %v2573, 8.507059e+37
  %v2575 = vand.u32 %v2563, 2147483648
  %v2576 = vor.u32 1.1754944e-38, %v2575
  %v2577 = vsel %vm2574, %v2576, %v2572
  %v2578 = vmul.f32 1.0, %v2577
  %v2579 = vmul.f32 %v2558, %v2461
  %v2580 = vmul.f32 %v2539, %v2559
  %v2581 = vadd.f32 %v2579, %v2580
  %v2582 = vtanh.pop %v2581
  %v2583 = vmul.f32 %v2578, %v2582
  %v2584 = vsel %vm1090, %v2583, %v2460
  %v2585 = vsel %vm1090, %v2581, %v2461
  %v2586 = vsel %vm1090, %v2583, 0.0
  %2587 = vst [vmem:[%s8 + $0x20] sm:$0xff] %v2586
  %v2588 = vpack.c.bf16 %v2584, %v2584
  %2589 = vmatpush.bf16.msra.mxu0 %v1934
  %2590 = vmatpush.bf16.msra.mxu0 %v1930
  %2591 = vmatpush.bf16.msra.mxu0 %v1926
  %2592 = vmatpush.bf16.msra.mxu0 %v1922
  %2593 = vmatpush.bf16.msra.mxu0 %v1918
  %2594 = vmatpush.bf16.msra.mxu0 %v1914
  %2595 = vmatpush.bf16.msra.mxu0 %v1910
  %2596 = vmatpush.bf16.msra.mxu0 %v1906
  %2597 = vmatmul.bf16.gmra.mxu0 %v2588
  %v2598 = vpop.f32.mrf.mxu0
  %v2599 = vadd.f32 0.0, %v2598
  %v2600 = vpop.f32.mrf.mxu0
  %2601 = vdwg.mxu0
  %2602 = vmatpush.bf16.msra.mxu0 %v1935
  %2603 = vmatpush.bf16.msra.mxu0 %v1931
  %2604 = vmatpush.bf16.msra.mxu0 %v1927
  %2605 = vmatpush.bf16.msra.mxu0 %v1923
  %2606 = vmatpush.bf16.msra.mxu0 %v1919
  %2607 = vmatpush.bf16.msra.mxu0 %v1915
  %2608 = vmatpush.bf16.msra.mxu0 %v1911
  %2609 = vmatpush.bf16.msra.mxu0 %v1907
  %2610 = vmatmul.bf16.gmra.mxu0 %v2588
  %v2611 = vpop.f32.mrf.mxu0
  %v2612 = vadd.f32 0.0, %v2611
  %v2613 = vpop.f32.mrf.mxu0
  %2614 = vdwg.mxu0
  %2615 = vmatpush.bf16.msra.mxu0 %v1936
  %2616 = vmatpush.bf16.msra.mxu0 %v1932
  %2617 = vmatpush.bf16.msra.mxu0 %v1928
  %2618 = vmatpush.bf16.msra.mxu0 %v1924
  %2619 = vmatpush.bf16.msra.mxu0 %v1920
  %2620 = vmatpush.bf16.msra.mxu0 %v1916
  %2621 = vmatpush.bf16.msra.mxu0 %v1912
  %2622 = vmatpush.bf16.msra.mxu0 %v1908
  %2623 = vmatmul.bf16.gmra.mxu0 %v2588
  %v2624 = vpop.f32.mrf.mxu0
  %v2625 = vadd.f32 0.0, %v2624
  %v2626 = vpop.f32.mrf.mxu0
  %2627 = vdwg.mxu0
  %2628 = vmatpush.bf16.msra.mxu0 %v1937
  %2629 = vmatpush.bf16.msra.mxu0 %v1933
  %2630 = vmatpush.bf16.msra.mxu0 %v1929
  %2631 = vmatpush.bf16.msra.mxu0 %v1925
  %2632 = vmatpush.bf16.msra.mxu0 %v1921
  %2633 = vmatpush.bf16.msra.mxu0 %v1917
  %2634 = vmatpush.bf16.msra.mxu0 %v1913
  %2635 = vmatpush.bf16.msra.mxu0 %v1909
  %2636 = vmatmul.bf16.gmra.mxu0 %v2588
  %v2637 = vpop.f32.mrf.mxu0
  %v2638 = vadd.f32 0.0, %v2637
  %v2639 = vpop.f32.mrf.mxu0
  %2640 = vdwg.mxu0
  %v2641 = vadd.f32 %v1716, %v2599
  %v2642 = vadd.f32 %v1745, %v2612
  %v2643 = vadd.f32 %v1774, %v2625
  %v2644 = vadd.f32 %v1803, %v2638
  %v2645 = vxor.u32 %v2641, 2147483648
  %v2646 = vmul.f32 %v2645, 1.442695
  %v2647 = vpow.pop %v2646
  %v2648 = vadd.f32 %v2647, 1.0
  %v2649 = vrcp.pop %v2648
  %v2650 = vmul.f32 %v2648, %v2649
  %v2651 = vsub.f32 1.0, %v2650
  %v2652 = vmul.f32 %v2649, %v2651
  %v2653 = vadd.f32 %v2649, %v2652
  %vm2654 = vweird.f32 %v2648
  %vm2655 = vweird.f32 %v2649
  %vm2656 = vmor %vm2654, %vm2655
  %v2657 = vsel %vm2656, %v2649, %v2653
  %v2658 = vand.u32 2147483647, %v2648
  %vm2659 = vcmp.eq.f32.partialorder %v2658, 8.507059e+37
  %v2660 = vand.u32 %v2648, 2147483648
  %v2661 = vor.u32 1.1754944e-38, %v2660
  %v2662 = vsel %vm2659, %v2661, %v2657
  %v2663 = vmul.f32 1.0, %v2662
  %v2664 = vxor.u32 %v2642, 2147483648
  %v2665 = vmul.f32 %v2664, 1.442695
  %v2666 = vpow.pop %v2665
  %v2667 = vadd.f32 %v2666, 1.0
  %v2668 = vrcp.pop %v2667
  %v2669 = vmul.f32 %v2667, %v2668
  %v2670 = vsub.f32 1.0, %v2669
  %v2671 = vmul.f32 %v2668, %v2670
  %v2672 = vadd.f32 %v2668, %v2671
  %vm2673 = vweird.f32 %v2667
  %vm2674 = vweird.f32 %v2668
  %vm2675 = vmor %vm2673, %vm2674
  %v2676 = vsel %vm2675, %v2668, %v2672
  %v2677 = vand.u32 2147483647, %v2667
  %vm2678 = vcmp.eq.f32.partialorder %v2677, 8.507059e+37
  %v2679 = vand.u32 %v2667, 2147483648
  %v2680 = vor.u32 1.1754944e-38, %v2679
  %v2681 = vsel %vm2678, %v2680, %v2676
  %v2682 = vmul.f32 1.0, %v2681
  %v2683 = vtanh.pop %v2643
  %v2684 = vxor.u32 %v2644, 2147483648
  %v2685 = vmul.f32 %v2684, 1.442695
  %v2686 = vpow.pop %v2685
  %v2687 = vadd.f32 %v2686, 1.0
  %v2688 = vrcp.pop %v2687
  %v2689 = vmul.f32 %v2687, %v2688
  %v2690 = vsub.f32 1.0, %v2689
  %v2691 = vmul.f32 %v2688, %v2690
  %v2692 = vadd.f32 %v2688, %v2691
  %vm2693 = vweird.f32 %v2687
  %vm2694 = vweird.f32 %v2688
  %vm2695 = vmor %vm2693, %vm2694
  %v2696 = vsel %vm2695, %v2688, %v2692
  %v2697 = vand.u32 2147483647, %v2687
  %vm2698 = vcmp.eq.f32.partialorder %v2697, 8.507059e+37
  %v2699 = vand.u32 %v2687, 2147483648
  %v2700 = vor.u32 1.1754944e-38, %v2699
  %v2701 = vsel %vm2698, %v2700, %v2696
  %v2702 = vmul.f32 1.0, %v2701
  %v2703 = vmul.f32 %v2682, %v2585
  %v2704 = vmul.f32 %v2663, %v2683
  %v2705 = vadd.f32 %v2703, %v2704
  %v2706 = vtanh.pop %v2705
  %v2707 = vmul.f32 %v2702, %v2706
  %v2708 = vsel %vm1219, %v2707, %v2584
  %v2709 = vsel %vm1219, %v2705, %v2585
  %v2710 = vsel %vm1219, %v2707, 0.0
  %2711 = vst [vmem:[%s8 + $0x28] sm:$0xff] %v2710
  %v2712 = vpack.c.bf16 %v2708, %v2708
  %2713 = vmatpush.bf16.msra.mxu0 %v1934
  %2714 = vmatpush.bf16.msra.mxu0 %v1930
  %2715 = vmatpush.bf16.msra.mxu0 %v1926
  %2716 = vmatpush.bf16.msra.mxu0 %v1922
  %2717 = vmatpush.bf16.msra.mxu0 %v1918
  %2718 = vmatpush.bf16.msra.mxu0 %v1914
  %2719 = vmatpush.bf16.msra.mxu0 %v1910
  %2720 = vmatpush.bf16.msra.mxu0 %v1906
  %2721 = vmatmul.bf16.gmra.mxu0 %v2712
  %v2722 = vpop.f32.mrf.mxu0
  %v2723 = vadd.f32 0.0, %v2722
  %v2724 = vpop.f32.mrf.mxu0
  %2725 = vdwg.mxu0
  %2726 = vmatpush.bf16.msra.mxu0 %v1935
  %2727 = vmatpush.bf16.msra.mxu0 %v1931
  %2728 = vmatpush.bf16.msra.mxu0 %v1927
  %2729 = vmatpush.bf16.msra.mxu0 %v1923
  %2730 = vmatpush.bf16.msra.mxu0 %v1919
  %2731 = vmatpush.bf16.msra.mxu0 %v1915
  %2732 = vmatpush.bf16.msra.mxu0 %v1911
  %2733 = vmatpush.bf16.msra.mxu0 %v1907
  %2734 = vmatmul.bf16.gmra.mxu0 %v2712
  %v2735 = vpop.f32.mrf.mxu0
  %v2736 = vadd.f32 0.0, %v2735
  %v2737 = vpop.f32.mrf.mxu0
  %2738 = vdwg.mxu0
  %2739 = vmatpush.bf16.msra.mxu0 %v1936
  %2740 = vmatpush.bf16.msra.mxu0 %v1932
  %2741 = vmatpush.bf16.msra.mxu0 %v1928
  %2742 = vmatpush.bf16.msra.mxu0 %v1924
  %2743 = vmatpush.bf16.msra.mxu0 %v1920
  %2744 = vmatpush.bf16.msra.mxu0 %v1916
  %2745 = vmatpush.bf16.msra.mxu0 %v1912
  %2746 = vmatpush.bf16.msra.mxu0 %v1908
  %2747 = vmatmul.bf16.gmra.mxu0 %v2712
  %v2748 = vpop.f32.mrf.mxu0
  %v2749 = vadd.f32 0.0, %v2748
  %v2750 = vpop.f32.mrf.mxu0
  %2751 = vdwg.mxu0
  %2752 = vmatpush.bf16.msra.mxu0 %v1937
  %2753 = vmatpush.bf16.msra.mxu0 %v1933
  %2754 = vmatpush.bf16.msra.mxu0 %v1929
  %2755 = vmatpush.bf16.msra.mxu0 %v1925
  %2756 = vmatpush.bf16.msra.mxu0 %v1921
  %2757 = vmatpush.bf16.msra.mxu0 %v1917
  %2758 = vmatpush.bf16.msra.mxu0 %v1913
  %2759 = vmatpush.bf16.msra.mxu0 %v1909
  %2760 = vmatmul.bf16.gmra.mxu0 %v2712
  %v2761 = vpop.f32.mrf.mxu0
  %v2762 = vadd.f32 0.0, %v2761
  %v2763 = vpop.f32.mrf.mxu0
  %2764 = vdwg.mxu0
  %v2765 = vadd.f32 %v1719, %v2723
  %v2766 = vadd.f32 %v1748, %v2736
  %v2767 = vadd.f32 %v1777, %v2749
  %v2768 = vadd.f32 %v1806, %v2762
  %v2769 = vxor.u32 %v2765, 2147483648
  %v2770 = vmul.f32 %v2769, 1.442695
  %v2771 = vpow.pop %v2770
  %v2772 = vadd.f32 %v2771, 1.0
  %v2773 = vrcp.pop %v2772
  %v2774 = vmul.f32 %v2772, %v2773
  %v2775 = vsub.f32 1.0, %v2774
  %v2776 = vmul.f32 %v2773, %v2775
  %v2777 = vadd.f32 %v2773, %v2776
  %vm2778 = vweird.f32 %v2772
  %vm2779 = vweird.f32 %v2773
  %vm2780 = vmor %vm2778, %vm2779
  %v2781 = vsel %vm2780, %v2773, %v2777
  %v2782 = vand.u32 2147483647, %v2772
  %vm2783 = vcmp.eq.f32.partialorder %v2782, 8.507059e+37
  %v2784 = vand.u32 %v2772, 2147483648
  %v2785 = vor.u32 1.1754944e-38, %v2784
  %v2786 = vsel %vm2783, %v2785, %v2781
  %v2787 = vmul.f32 1.0, %v2786
  %v2788 = vxor.u32 %v2766, 2147483648
  %v2789 = vmul.f32 %v2788, 1.442695
  %v2790 = vpow.pop %v2789
  %v2791 = vadd.f32 %v2790, 1.0
  %v2792 = vrcp.pop %v2791
  %v2793 = vmul.f32 %v2791, %v2792
  %v2794 = vsub.f32 1.0, %v2793
  %v2795 = vmul.f32 %v2792, %v2794
  %v2796 = vadd.f32 %v2792, %v2795
  %vm2797 = vweird.f32 %v2791
  %vm2798 = vweird.f32 %v2792
  %vm2799 = vmor %vm2797, %vm2798
  %v2800 = vsel %vm2799, %v2792, %v2796
  %v2801 = vand.u32 2147483647, %v2791
  %vm2802 = vcmp.eq.f32.partialorder %v2801, 8.507059e+37
  %v2803 = vand.u32 %v2791, 2147483648
  %v2804 = vor.u32 1.1754944e-38, %v2803
  %v2805 = vsel %vm2802, %v2804, %v2800
  %v2806 = vmul.f32 1.0, %v2805
  %v2807 = vtanh.pop %v2767
  %v2808 = vxor.u32 %v2768, 2147483648
  %v2809 = vmul.f32 %v2808, 1.442695
  %v2810 = vpow.pop %v2809
  %v2811 = vadd.f32 %v2810, 1.0
  %v2812 = vrcp.pop %v2811
  %v2813 = vmul.f32 %v2811, %v2812
  %v2814 = vsub.f32 1.0, %v2813
  %v2815 = vmul.f32 %v2812, %v2814
  %v2816 = vadd.f32 %v2812, %v2815
  %vm2817 = vweird.f32 %v2811
  %vm2818 = vweird.f32 %v2812
  %vm2819 = vmor %vm2817, %vm2818
  %v2820 = vsel %vm2819, %v2812, %v2816
  %v2821 = vand.u32 2147483647, %v2811
  %vm2822 = vcmp.eq.f32.partialorder %v2821, 8.507059e+37
  %v2823 = vand.u32 %v2811, 2147483648
  %v2824 = vor.u32 1.1754944e-38, %v2823
  %v2825 = vsel %vm2822, %v2824, %v2820
  %v2826 = vmul.f32 1.0, %v2825
  %v2827 = vmul.f32 %v2806, %v2709
  %v2828 = vmul.f32 %v2787, %v2807
  %v2829 = vadd.f32 %v2827, %v2828
  %v2830 = vtanh.pop %v2829
  %v2831 = vmul.f32 %v2826, %v2830
  %v2832 = vsel %vm1348, %v2831, %v2708
  %v2833 = vsel %vm1348, %v2829, %v2709
  %v2834 = vsel %vm1348, %v2831, 0.0
  %2835 = vst [vmem:[%s8 + $0x30] sm:$0xff] %v2834
  %v2836 = vpack.c.bf16 %v2832, %v2832
  %2837 = vmatpush.bf16.msra.mxu0 %v1934
  %2838 = vmatpush.bf16.msra.mxu0 %v1930
  %2839 = vmatpush.bf16.msra.mxu0 %v1926
  %2840 = vmatpush.bf16.msra.mxu0 %v1922
  %2841 = vmatpush.bf16.msra.mxu0 %v1918
  %2842 = vmatpush.bf16.msra.mxu0 %v1914
  %2843 = vmatpush.bf16.msra.mxu0 %v1910
  %2844 = vmatpush.bf16.msra.mxu0 %v1906
  %2845 = vmatmul.bf16.gmra.mxu0 %v2836
  %v2846 = vpop.f32.mrf.mxu0
  %v2847 = vadd.f32 0.0, %v2846
  %v2848 = vpop.f32.mrf.mxu0
  %2849 = vdwg.mxu0
  %2850 = vmatpush.bf16.msra.mxu0 %v1935
  %2851 = vmatpush.bf16.msra.mxu0 %v1931
  %2852 = vmatpush.bf16.msra.mxu0 %v1927
  %2853 = vmatpush.bf16.msra.mxu0 %v1923
  %2854 = vmatpush.bf16.msra.mxu0 %v1919
  %2855 = vmatpush.bf16.msra.mxu0 %v1915
  %2856 = vmatpush.bf16.msra.mxu0 %v1911
  %2857 = vmatpush.bf16.msra.mxu0 %v1907
  %2858 = vmatmul.bf16.gmra.mxu0 %v2836
  %v2859 = vpop.f32.mrf.mxu0
  %v2860 = vadd.f32 0.0, %v2859
  %v2861 = vpop.f32.mrf.mxu0
  %2862 = vdwg.mxu0
  %2863 = vmatpush.bf16.msra.mxu0 %v1936
  %2864 = vmatpush.bf16.msra.mxu0 %v1932
  %2865 = vmatpush.bf16.msra.mxu0 %v1928
  %2866 = vmatpush.bf16.msra.mxu0 %v1924
  %2867 = vmatpush.bf16.msra.mxu0 %v1920
  %2868 = vmatpush.bf16.msra.mxu0 %v1916
  %2869 = vmatpush.bf16.msra.mxu0 %v1912
  %2870 = vmatpush.bf16.msra.mxu0 %v1908
  %2871 = vmatmul.bf16.gmra.mxu0 %v2836
  %v2872 = vpop.f32.mrf.mxu0
  %v2873 = vadd.f32 0.0, %v2872
  %v2874 = vpop.f32.mrf.mxu0
  %2875 = vdwg.mxu0
  %2876 = vmatpush.bf16.msra.mxu0 %v1937
  %2877 = vmatpush.bf16.msra.mxu0 %v1933
  %2878 = vmatpush.bf16.msra.mxu0 %v1929
  %2879 = vmatpush.bf16.msra.mxu0 %v1925
  %2880 = vmatpush.bf16.msra.mxu0 %v1921
  %2881 = vmatpush.bf16.msra.mxu0 %v1917
  %2882 = vmatpush.bf16.msra.mxu0 %v1913
  %2883 = vmatpush.bf16.msra.mxu0 %v1909
  %2884 = vmatmul.bf16.gmra.mxu0 %v2836
  %v2885 = vpop.f32.mrf.mxu0
  %v2886 = vadd.f32 0.0, %v2885
  %v2887 = vpop.f32.mrf.mxu0
  %2888 = vdwg.mxu0
  %v2889 = vadd.f32 %v1721, %v2847
  %v2890 = vadd.f32 %v1750, %v2860
  %v2891 = vadd.f32 %v1779, %v2873
  %v2892 = vadd.f32 %v1808, %v2886
  %v2893 = vxor.u32 %v2889, 2147483648
  %v2894 = vmul.f32 %v2893, 1.442695
  %v2895 = vpow.pop %v2894
  %v2896 = vadd.f32 %v2895, 1.0
  %v2897 = vrcp.pop %v2896
  %v2898 = vmul.f32 %v2896, %v2897
  %v2899 = vsub.f32 1.0, %v2898
  %v2900 = vmul.f32 %v2897, %v2899
  %v2901 = vadd.f32 %v2897, %v2900
  %vm2902 = vweird.f32 %v2896
  %vm2903 = vweird.f32 %v2897
  %vm2904 = vmor %vm2902, %vm2903
  %v2905 = vsel %vm2904, %v2897, %v2901
  %v2906 = vand.u32 2147483647, %v2896
  %vm2907 = vcmp.eq.f32.partialorder %v2906, 8.507059e+37
  %v2908 = vand.u32 %v2896, 2147483648
  %v2909 = vor.u32 1.1754944e-38, %v2908
  %v2910 = vsel %vm2907, %v2909, %v2905
  %v2911 = vmul.f32 1.0, %v2910
  %v2912 = vxor.u32 %v2890, 2147483648
  %v2913 = vmul.f32 %v2912, 1.442695
  %v2914 = vpow.pop %v2913
  %v2915 = vadd.f32 %v2914, 1.0
  %v2916 = vrcp.pop %v2915
  %v2917 = vmul.f32 %v2915, %v2916
  %v2918 = vsub.f32 1.0, %v2917
  %v2919 = vmul.f32 %v2916, %v2918
  %v2920 = vadd.f32 %v2916, %v2919
  %vm2921 = vweird.f32 %v2915
  %vm2922 = vweird.f32 %v2916
  %vm2923 = vmor %vm2921, %vm2922
  %v2924 = vsel %vm2923, %v2916, %v2920
  %v2925 = vand.u32 2147483647, %v2915
  %vm2926 = vcmp.eq.f32.partialorder %v2925, 8.507059e+37
  %v2927 = vand.u32 %v2915, 2147483648
  %v2928 = vor.u32 1.1754944e-38, %v2927
  %v2929 = vsel %vm2926, %v2928, %v2924
  %v2930 = vmul.f32 1.0, %v2929
  %v2931 = vtanh.pop %v2891
  %v2932 = vxor.u32 %v2892, 2147483648
  %v2933 = vmul.f32 %v2932, 1.442695
  %v2934 = vpow.pop %v2933
  %v2935 = vadd.f32 %v2934, 1.0
  %v2936 = vrcp.pop %v2935
  %v2937 = vmul.f32 %v2935, %v2936
  %v2938 = vsub.f32 1.0, %v2937
  %v2939 = vmul.f32 %v2936, %v2938
  %v2940 = vadd.f32 %v2936, %v2939
  %vm2941 = vweird.f32 %v2935
  %vm2942 = vweird.f32 %v2936
  %vm2943 = vmor %vm2941, %vm2942
  %v2944 = vsel %vm2943, %v2936, %v2940
  %v2945 = vand.u32 2147483647, %v2935
  %vm2946 = vcmp.eq.f32.partialorder %v2945, 8.507059e+37
  %v2947 = vand.u32 %v2935, 2147483648
  %v2948 = vor.u32 1.1754944e-38, %v2947
  %v2949 = vsel %vm2946, %v2948, %v2944
  %v2950 = vmul.f32 1.0, %v2949
  %v2951 = vmul.f32 %v2930, %v2833
  %v2952 = vmul.f32 %v2911, %v2931
  %v2953 = vadd.f32 %v2951, %v2952
  %v2954 = vtanh.pop %v2953
  %v2955 = vmul.f32 %v2950, %v2954
  %v2956 = vsel %vm1477, %v2955, %v2832
  %v2957 = vsel %vm1477, %v2953, %v2833
  %v2958 = vsel %vm1477, %v2955, 0.0
  %2959 = vst [vmem:[%s8 + $0x38] sm:$0xff] %v2958
  %2960 = vst [vmem:[%s9] sm:$0xff] %v1478
  %s2961 = scalar_lea.vmem %s9, 8
  %2962 = vst [vmem:[%s2961] sm:$0xff] %v2956
  %2963 = vst [vmem:[%s10] sm:$0xff] %v1479
  %s2964 = scalar_lea.vmem %s10, 8
  %2965 = vst [vmem:[%s2964] sm:$0xff] %v2957
  // Predicated region
  $region34: #{temporal_net_forward.1} parent=0 // pred_check
    _
  $region35: #{temporal_net_forward.1} parent=0 // pred_check_branch
    %2967 = sbr.rel (0) target = $region37
  $region36: #{temporal_net_forward.1} parent=0 // pred_region
    _
  $region37: #{temporal_net_forward.1} parent=0 // pred_fallthru
    _
  // Predicated region
  $region38: #{temporal_net_forward.1} parent=0 // pred_check
    _
  $region39: #{temporal_net_forward.1} parent=0 // pred_check_branch
    %2969 = sbr.rel (0) target = $region41
  $region40: #{temporal_net_forward.1} parent=0 // pred_region
    _
  $region41: #{temporal_net_forward.1} parent=0 // pred_fallthru
    _
  // Predicated region
  $region42: #{temporal_net_forward.1} parent=0 // pred_check
    _
  $region43: #{temporal_net_forward.1} parent=0 // pred_check_branch
    %2971 = sbr.rel (0) target = $region45
  $region44: #{temporal_net_forward.1} parent=0 // pred_region
    _
  $region45: #{temporal_net_forward.1} parent=0 // pred_fallthru
    _
  // Predicated region
  $region46: #{temporal_net_forward.1} parent=0 // pred_check
    _
  $region47: #{temporal_net_forward.1} parent=0 // pred_check_branch
    %2973 = sbr.rel (0) target = $region49
  $region48: #{temporal_net_forward.1} parent=0 // pred_region
    _
  $region49: #{temporal_net_forward.1} parent=0 // pred_fallthru
    _
  // Predicated region
  $region50: #{temporal_net_forward.1} parent=0 // pred_check
    _
  $region51: #{temporal_net_forward.1} parent=0 // pred_check_branch
    %2975 = sbr.rel (0) target = $region53
  $region52: #{temporal_net_forward.1} parent=0 // pred_region
    _
  $region53: #{temporal_net_forward.1} parent=0 // pred_fallthru
    _
  // Predicated region
  $region54: #{temporal_net_forward.1} parent=0 // pred_check
    _
  $region55: #{temporal_net_forward.1} parent=0 // pred_check_branch
    %2977 = sbr.rel (0) target = $region57
  $region56: #{temporal_net_forward.1} parent=0 // pred_region
    _
  $region57: #{temporal_net_forward.1} parent=0 // pred_fallthru
    _

</llo_original>
